<compile_context>
chip_gen: v7x
topology: tpu7x:2x2x1
jax: 0.10.0
libtpu: 0.0.40
codegen_flags: <defaults>
</compile_context>

<pallas_src>
import functools

import jax
import jax.numpy as jnp
from jax.experimental import pallas as pl
from jax.experimental.pallas import tpu as pltpu


def _round_up(n: int, m: int) -> int:
    return ((n + m - 1) // m) * m


# ----------------------------- Pallas kernel --------------------------------

def _hetero_layer_kernel(sid_ref, did_ref,            # scalar-prefetch (used by index_maps)
                         a_ref, inv_ref, xs_ref, xd_ref, wl_ref, wr_ref, b_ref,
                         o_ref, acc_ref, *, apply_relu: bool):
    """Grid = (dst group g, edge-type slot e).

      a_ref  : (Np, Np) bf16  integer neighbor counts (exact in bf16 up to 256)
      inv_ref: (Np, 1)  f32   1/max(deg, 1)  -> exact scatter-mean on the VPU
      xs_ref : (Np, Hp) bf16  source-type features (block picked via sid table)
      xd_ref : (Np, Hp) bf16  dest-type features  (block picked via did table)
      wl_ref : (Hp, Hp) bf16  SAGEConv lin_l weight (on aggregated neighbors)
      wr_ref : (Hp, Hp) bf16  SAGEConv lin_r weight (on x_dst)
      b_ref  : (1, Hp)  f32   per-group sum of edge-type biases
      o_ref  : (Np, Hp)       output (bf16 between layers, f32 for the last layer)
      acc_ref: (Np, Hp) f32   VMEM accumulator across edge types (HeteroConv sum)
    """
    del sid_ref, did_ref
    e = pl.program_id(1)

    @pl.when(e == 0)
    def _init():
        # Fold the pre-summed bias into the accumulator init (once per group).
        acc_ref[...] = jnp.broadcast_to(b_ref[...], acc_ref.shape)

    # sum_j x_j on the MXU with f32 accumulation, then exact mean via f32 1/deg.
    agg = jnp.dot(a_ref[...], xs_ref[...], preferred_element_type=jnp.float32)
    agg = agg * inv_ref[...]

    # Two native K=128 contractions (no concat copy, no staging scratch).
    acc_ref[...] += jnp.dot(agg.astype(jnp.bfloat16), wl_ref[...],
                            preferred_element_type=jnp.float32)
    acc_ref[...] += jnp.dot(xd_ref[...], wr_ref[...],
                            preferred_element_type=jnp.float32)

    @pl.when(e == pl.num_programs(1) - 1)
    def _finalize():
        y = acc_ref[...]
        if apply_relu:
            y = jnp.maximum(y, 0.0)
        o_ref[...] = y.astype(o_ref.dtype)


def hetero_layer(sid, did, a_cnt, inv_deg, z_stack, wl, wr, bias, *,
                 apply_relu: bool, out_dtype):
    """One HeteroConv layer: every (dst group, edge type) pair in one pallas_call."""
    G, E, Np, _ = a_cnt.shape
    Hp = z_stack.shape[-1]
    kernel = functools.partial(_hetero_layer_kernel, apply_relu=apply_relu)
    return pl.pallas_call(
        kernel,
        out_shape=jax.ShapeDtypeStruct((G, Np, Hp), out_dtype),
        grid_spec=pltpu.PrefetchScalarGridSpec(
            num_scalar_prefetch=2,                       # sid (G*E,), did (G,)
            grid=(G, E),
            in_specs=[
                pl.BlockSpec((None, None, Np, Np), lambda g, e, sid, did: (g, e, 0, 0)),
                pl.BlockSpec((None, None, Np, 1), lambda g, e, sid, did: (g, e, 0, 0)),
                # source features: block index = src node type of this edge slot
                pl.BlockSpec((None, Np, Hp), lambda g, e, sid, did: (sid[g * E + e], 0, 0)),
                # dest features: constant over e -> DMA'd once per group
                pl.BlockSpec((None, Np, Hp), lambda g, e, sid, did: (did[g], 0, 0)),
                pl.BlockSpec((None, None, Hp, Hp), lambda g, e, sid, did: (g, e, 0, 0)),
                pl.BlockSpec((None, None, Hp, Hp), lambda g, e, sid, did: (g, e, 0, 0)),
                pl.BlockSpec((None, 1, Hp), lambda g, e, sid, did: (g, 0, 0)),
            ],
            out_specs=pl.BlockSpec((None, Np, Hp), lambda g, e, sid, did: (g, 0, 0)),
            scratch_shapes=[pltpu.VMEM((Np, Hp), jnp.float32)],
        ),
        compiler_params=pltpu.CompilerParams(
            # dst groups are independent ("parallel" -> both TCs on v7x);
            # the edge-type axis is the HeteroConv sum reduction.
            dimension_semantics=("parallel", "arbitrary"),
        ),
        # TODO(synk): for real graph sizes, add an "arbitrary" source-tile axis
        # (reduce A[:, s] @ xs[s] into a VMEM agg scratch) and set vmem_limit_bytes
        # so the working set stays within v7x's 64 MiB VMEM.
    )(sid, did, a_cnt, inv_deg, z_stack, z_stack, wl, wr, bias)


# --------------------- one-time host-side packing ----------------------------

def prepare_graph(edge_index_dict, node_types, edge_types, num_nodes_dict, Np):
    """Dense integer-count aggregation matrices + scalar index tables (runs once)."""
    type_id = {nt: i for i, nt in enumerate(node_types)}
    groups = {}
    for et in edge_types:
        if et in edge_index_dict:
            groups.setdefault(et[2], []).append(et)
    group_dst = list(groups.keys())
    E = max(len(v) for v in groups.values())

    a_rows, inv_rows, sid_flat, did = [], [], [], []
    for dst_t in group_dst:
        ets = groups[dst_t]
        a_e, inv_e = [], []
        for et in ets:
            ei = edge_index_dict[et]
            src, dst = ei[0], ei[1]
            cnt = jnp.zeros((Np, Np), jnp.float32).at[dst, src].add(1.0)
            deg = cnt.sum(axis=1, keepdims=True)
            a_e.append(cnt)
            inv_e.append(1.0 / jnp.maximum(deg, 1.0))
            sid_flat.append(type_id[et[0]])
        for _ in range(E - len(ets)):        # padded edge slots contribute zero
            a_e.append(jnp.zeros((Np, Np), jnp.float32))
            inv_e.append(jnp.ones((Np, 1), jnp.float32))
            sid_flat.append(0)
        a_rows.append(jnp.stack(a_e))
        inv_rows.append(jnp.stack(inv_e))
        did.append(type_id[dst_t])

    a_cnt = jnp.stack(a_rows).astype(jnp.bfloat16)   # (G, E, Np, Np) integer counts
    inv_deg = jnp.stack(inv_rows)                    # (G, E, Np, 1) f32
    sid = jnp.asarray(sid_flat, jnp.int32)           # (G*E,)
    did = jnp.asarray(did, jnp.int32)                # (G,)
    return group_dst, groups, sid, did, a_cnt, inv_deg


def pack_layer_params(layer_params, group_dst, groups, hidden, Hp):
    E = max(len(v) for v in groups.values())
    pad_w = ((0, Hp - hidden), (0, Hp - hidden))
    wl_rows, wr_rows, b_rows = [], [], []
    for dst_t in group_dst:
        ets = groups[dst_t]
        wl_e, wr_e = [], []
        b = jnp.zeros((1, Hp), jnp.float32)
        for et in ets:
            p = layer_params[et]
            wl_e.append(jnp.pad(p["wl"], pad_w))
            wr_e.append(jnp.pad(p["wr"], pad_w))
            b = b + jnp.pad(p["b"], ((0, 0), (0, Hp - hidden)))
        for _ in range(E - len(ets)):
            wl_e.append(jnp.zeros((Hp, Hp), jnp.float32))
            wr_e.append(jnp.zeros((Hp, Hp), jnp.float32))
        wl_rows.append(jnp.stack(wl_e))
        wr_rows.append(jnp.stack(wr_e))
        b_rows.append(b)
    return (jnp.stack(wl_rows).astype(jnp.bfloat16),   # (G, E, Hp, Hp)
            jnp.stack(wr_rows).astype(jnp.bfloat16),   # (G, E, Hp, Hp)
            jnp.stack(b_rows))                         # (G, 1, Hp) f32


def pack_embeddings(emb_params, node_types, num_nodes_dict, hidden, Np, Hp):
    rows = []
    for nt in node_types:
        x = emb_params[nt]
        rows.append(jnp.pad(x, ((0, Np - x.shape[0]), (0, Hp - hidden))))
    return jnp.stack(rows).astype(jnp.bfloat16)        # (T, Np, Hp)


# ------------------------------ model glue -----------------------------------

def init_params(key, node_types, edge_types, num_nodes_dict, hidden):
    params = {"emb": {}, "conv1": {}, "conv2": {}}
    for nt in node_types:
        key, k = jax.random.split(key)
        params["emb"][nt] = jax.random.normal(k, (num_nodes_dict[nt], hidden), jnp.float32)
    scale = float(1.0 / (hidden ** 0.5))
    for layer in ("conv1", "conv2"):
        for et in edge_types:
            key, k1, k2, k3 = jax.random.split(key, 4)
            params[layer][et] = {
                # stored as [in, out] so the kernel computes x @ W
                "wl": jax.random.uniform(k1, (hidden, hidden), jnp.float32, -scale, scale),
                "wr": jax.random.uniform(k2, (hidden, hidden), jnp.float32, -scale, scale),
                "b": jax.random.uniform(k3, (1, hidden), jnp.float32, -scale, scale),
            }
    return params


def make_hetero_gnn_forward(params, edge_index_dict, node_types, edge_types,
                            num_nodes_dict, hidden):
    # Lane-dense feature width; common node-count pad is a multiple of 128 (lane
    # dim of A), which also satisfies the bf16 sublane multiple-of-16 rule.
    # NOTE: with hidden=32 padded to 128, MXU efficiency is capped (~25%); at these
    # sizes the kernel is launch/DMA-bound, which the per-layer fusion addresses.
    Hp = _round_up(hidden, 128)
    Np = _round_up(max(num_nodes_dict.values()), 128)

    # ---- all packing runs exactly once, outside the jitted forward graph ----
    group_dst, groups, sid, did, a_cnt, inv_deg = prepare_graph(
        edge_index_dict, node_types, edge_types, num_nodes_dict, Np)
    wl1, wr1, b1 = pack_layer_params(params["conv1"], group_dst, groups, hidden, Hp)
    wl2, wr2, b2 = pack_layer_params(params["conv2"], group_dst, groups, hidden, Hp)
    z0 = pack_embeddings(params["emb"], node_types, num_nodes_dict, hidden, Np, Hp)

    group_of = {nt: g for g, nt in enumerate(group_dst)}

    @jax.jit
    def forward(z0, sid, did, a_cnt, inv_deg, wl1, wr1, b1, wl2, wr2, b2):
        # conv1 + fused relu, bf16 output feeds conv2 directly (no XLA cast).
        h1 = hetero_layer(sid, did, a_cnt, inv_deg, z0, wl1, wr1, b1,
                          apply_relu=True, out_dtype=jnp.bfloat16)
        z1 = z0.at[did].set(h1)
        # conv2, f32 output (final user-facing features).
        h2 = hetero_layer(sid, did, a_cnt, inv_deg, z1, wl2, wr2, b2,
                          apply_relu=False, out_dtype=jnp.float32)
        out = {}
        for nt in node_types:
            n = num_nodes_dict[nt]
            if nt in group_of:
                out[nt] = h2[group_of[nt], :n, :hidden]
            else:
                # node type never a destination: keeps its embedding (as the module does)
                out[nt] = params["emb"][nt]
        return out

    args = (z0, sid, did, a_cnt, inv_deg, wl1, wr1, b1, wl2, wr2, b2)
    return forward, args


def decode(z_dict, edge_index, src_type, dst_type):
    src_idx, dst_idx = edge_index[0], edge_index[1]
    return (z_dict[src_type][src_idx] * z_dict[dst_type][dst_idx]).sum(axis=1)


# -------------------------- plain-JAX reference ------------------------------

def reference_forward(params, edge_index_dict, node_types, edge_types, num_nodes_dict):
    z = {nt: params["emb"][nt] for nt in node_types}

    def conv(layer):
        h = {}
        for et in edge_types:
            if et not in edge_index_dict:
                continue
            src_t, _, dst_t = et
            ei = edge_index_dict[et]
            src, dst = ei[0], ei[1]
            A = jnp.zeros((num_nodes_dict[dst_t], num_nodes_dict[src_t]),
                          jnp.float32).at[dst, src].add(1.0)
            deg = jnp.maximum(A.sum(axis=1, keepdims=True), 1.0)
            agg = (A @ z[src_t]) / deg
            p = params[layer][et]
            out = agg @ p["wl"] + z[dst_t] @ p["wr"] + p["b"]
            h[dst_t] = h.get(dst_t, 0.0) + out
        return h

    for nt, v in conv("conv1").items():
        z[nt] = jax.nn.relu(v)
    for nt, v in conv("conv2").items():
        z[nt] = v
    return z


# -------------------------------- main ---------------------------------------

if __name__ == "__main__":
    node_types = ["user", "item"]
    edge_types = [("user", "rates", "item"), ("item", "rev_rates", "user")]
    num_nodes_dict = {"user": 64, "item": 80}
    hidden = 32
    num_edges = 256

    key = jax.random.PRNGKey(0)
    key, ks, kd, kp = jax.random.split(key, 4)
    src = jax.random.randint(ks, (num_edges,), 0, num_nodes_dict["user"])
    dst = jax.random.randint(kd, (num_edges,), 0, num_nodes_dict["item"])
    edge_index_dict = {
        ("user", "rates", "item"): jnp.stack([src, dst]),
        ("item", "rev_rates", "user"): jnp.stack([dst, src]),
    }

    params = init_params(kp, node_types, edge_types, num_nodes_dict, hidden)

    forward, args = make_hetero_gnn_forward(params, edge_index_dict, node_types,
                                            edge_types, num_nodes_dict, hidden)
    z_out = forward(*args)
    jax.block_until_ready(z_out)
    for nt in node_types:
        assert z_out[nt].shape == (num_nodes_dict[nt], hidden)

    # sanity check vs f32 reference (kernel uses bf16 features/weights -> loose tol)
    z_ref = reference_forward(params, edge_index_dict, node_types, edge_types,
                              num_nodes_dict)
    for nt in node_types:
        assert jnp.allclose(z_out[nt], z_ref[nt], atol=1e-1, rtol=1e-1), nt

    # exercise the decode path once as well
    scores = decode(z_out, edge_index_dict[("user", "rates", "item")], "user", "item")
    jax.block_until_ready(scores)
    assert scores.shape == (num_edges,)

    print("KERNEL_OK")
</pallas_src>

<mosaic_0001>
module attributes {stable_mosaic.version = 11 : i64} {
  func.func @_hetero_layer_kernel(%arg0: i32, %arg1: i32, %arg2: memref<2xi32, #tpu.memory_space<smem>>, %arg3: memref<2xi32, #tpu.memory_space<smem>>, %arg4: memref<1x1x128x128xbf16, #tpu.memory_space<vmem>>, %arg5: memref<1x1x128x1xf32, #tpu.memory_space<vmem>>, %arg6: memref<1x128x128xbf16, #tpu.memory_space<vmem>>, %arg7: memref<1x128x128xbf16, #tpu.memory_space<vmem>>, %arg8: memref<1x1x128x128xbf16, #tpu.memory_space<vmem>>, %arg9: memref<1x1x128x128xbf16, #tpu.memory_space<vmem>>, %arg10: memref<1x1x128xf32, #tpu.memory_space<vmem>>, %arg11: memref<1x128x128xbf16, #tpu.memory_space<vmem>>, %arg12: memref<128x128xf32, #tpu.memory_space<vmem>>) attributes {dimension_semantics = [#tpu.dimension_semantics<parallel>, #tpu.dimension_semantics<arbitrary>], iteration_bounds = array<i64: 2, 1>, scalar_prefetch = 2 : i64, scratch_operands = 1 : i64, tpu.core_type = #tpu.core_type<tc>, window_params = [{transform_indices = @transform_0, window_bounds = array<i64: 1, 1, 128, 128>}, {transform_indices = @transform_1, window_bounds = array<i64: 1, 1, 128, 1>}, {transform_indices = @transform_2, window_bounds = array<i64: 1, 128, 128>}, {transform_indices = @transform_3, window_bounds = array<i64: 1, 128, 128>}, {transform_indices = @transform_4, window_bounds = array<i64: 1, 1, 128, 128>}, {transform_indices = @transform_5, window_bounds = array<i64: 1, 1, 128, 128>}, {transform_indices = @transform_6, window_bounds = array<i64: 1, 1, 128>}, {transform_indices = @transform_7, window_bounds = array<i64: 1, 128, 128>}]} {
    %c0_i32 = arith.constant 0 : i32
    %0 = arith.cmpi eq, %arg1, %c0_i32 : i32
    %1 = arith.extui %0 : i1 to i32
    %c0_i32_0 = arith.constant 0 : i32
    %2 = arith.cmpi ne, %1, %c0_i32_0 : i32
    scf.if %2 {
      %c0_34 = arith.constant 0 : index
      %c0_35 = arith.constant 0 : index
      %c0_36 = arith.constant 0 : index
      %30 = vector.load %arg10[%c0_34, %c0_35, %c0_36] : memref<1x1x128xf32, #tpu.memory_space<vmem>>, vector<1x1x128xf32>
      %31 = vector.shape_cast %30 : vector<1x1x128xf32> to vector<1x128xf32>
      %32 = vector.shape_cast %31 : vector<1x128xf32> to vector<1x128xf32>
      %33 = vector.broadcast %32 : vector<1x128xf32> to vector<128x128xf32>
      %c0_37 = arith.constant 0 : index
      %c0_38 = arith.constant 0 : index
      %34 = vector.load %arg12[%c0_37, %c0_38] : memref<128x128xf32, #tpu.memory_space<vmem>>, vector<128x128xf32>
      tpu.vector_store %arg12[%c0_37, %c0_38], %33 {strides = array<i32>} : memref<128x128xf32, #tpu.memory_space<vmem>>, vector<128x128xf32>,
    } else {
    }
    %c0 = arith.constant 0 : index
    %c0_1 = arith.constant 0 : index
    %c0_2 = arith.constant 0 : index
    %c0_3 = arith.constant 0 : index
    %3 = vector.load %arg4[%c0, %c0_1, %c0_2, %c0_3] : memref<1x1x128x128xbf16, #tpu.memory_space<vmem>>, vector<1x1x128x128xbf16>
    %4 = vector.shape_cast %3 : vector<1x1x128x128xbf16> to vector<128x128xbf16>
    %c0_4 = arith.constant 0 : index
    %c0_5 = arith.constant 0 : index
    %c0_6 = arith.constant 0 : index
    %5 = vector.load %arg6[%c0_4, %c0_5, %c0_6] : memref<1x128x128xbf16, #tpu.memory_space<vmem>>, vector<1x128x128xbf16>
    %6 = vector.shape_cast %5 : vector<1x128x128xbf16> to vector<128x128xbf16>
    %cst = arith.constant dense<0.000000e+00> : vector<128x128xf32>
    %7 = tpu.matmul %4, %6, %cst {dimension_numbers = #tpu.dot_dimension_numbers<[1], [0], [0], [1], [0, 0, 1, 1], [], []>} : vector<128x128xbf16>, vector<128x128xbf16>, vector<128x128xf32> -> vector<128x128xf32>
    %c0_7 = arith.constant 0 : index
    %c0_8 = arith.constant 0 : index
    %c0_9 = arith.constant 0 : index
    %c0_10 = arith.constant 0 : index
    %8 = vector.load %arg5[%c0_7, %c0_8, %c0_9, %c0_10] : memref<1x1x128x1xf32, #tpu.memory_space<vmem>>, vector<1x1x128x1xf32>
    %9 = vector.shape_cast %8 : vector<1x1x128x1xf32> to vector<128x1xf32>
    %10 = vector.broadcast %9 : vector<128x1xf32> to vector<128x128xf32>
    %11 = arith.mulf %7, %10 : vector<128x128xf32>
    %c0_11 = arith.constant 0 : index
    %c0_12 = arith.constant 0 : index
    %12 = vector.load %arg12[%c0_11, %c0_12] : memref<128x128xf32, #tpu.memory_space<vmem>>, vector<128x128xf32>
    %13 = arith.truncf %11 : vector<128x128xf32> to vector<128x128xbf16>
    %c0_13 = arith.constant 0 : index
    %c0_14 = arith.constant 0 : index
    %c0_15 = arith.constant 0 : index
    %c0_16 = arith.constant 0 : index
    %14 = vector.load %arg8[%c0_13, %c0_14, %c0_15, %c0_16] : memref<1x1x128x128xbf16, #tpu.memory_space<vmem>>, vector<1x1x128x128xbf16>
    %15 = vector.shape_cast %14 : vector<1x1x128x128xbf16> to vector<128x128xbf16>
    %cst_17 = arith.constant dense<0.000000e+00> : vector<128x128xf32>
    %16 = tpu.matmul %13, %15, %cst_17 {dimension_numbers = #tpu.dot_dimension_numbers<[1], [0], [0], [1], [0, 0, 1, 1], [], []>} : vector<128x128xbf16>, vector<128x128xbf16>, vector<128x128xf32> -> vector<128x128xf32>
    %17 = arith.addf %12, %16 : vector<128x128xf32>
    %c0_18 = arith.constant 0 : index
    %c0_19 = arith.constant 0 : index
    %18 = vector.load %arg12[%c0_18, %c0_19] : memref<128x128xf32, #tpu.memory_space<vmem>>, vector<128x128xf32>
    tpu.vector_store %arg12[%c0_18, %c0_19], %17 {strides = array<i32>} : memref<128x128xf32, #tpu.memory_space<vmem>>, vector<128x128xf32>,
    %c0_20 = arith.constant 0 : index
    %c0_21 = arith.constant 0 : index
    %19 = vector.load %arg12[%c0_20, %c0_21] : memref<128x128xf32, #tpu.memory_space<vmem>>, vector<128x128xf32>
    %c0_22 = arith.constant 0 : index
    %c0_23 = arith.constant 0 : index
    %c0_24 = arith.constant 0 : index
    %20 = vector.load %arg7[%c0_22, %c0_23, %c0_24] : memref<1x128x128xbf16, #tpu.memory_space<vmem>>, vector<1x128x128xbf16>
    %21 = vector.shape_cast %20 : vector<1x128x128xbf16> to vector<128x128xbf16>
    %c0_25 = arith.constant 0 : index
    %c0_26 = arith.constant 0 : index
    %c0_27 = arith.constant 0 : index
    %c0_28 = arith.constant 0 : index
    %22 = vector.load %arg9[%c0_25, %c0_26, %c0_27, %c0_28] : memref<1x1x128x128xbf16, #tpu.memory_space<vmem>>, vector<1x1x128x128xbf16>
    %23 = vector.shape_cast %22 : vector<1x1x128x128xbf16> to vector<128x128xbf16>
    %cst_29 = arith.constant dense<0.000000e+00> : vector<128x128xf32>
    %24 = tpu.matmul %21, %23, %cst_29 {dimension_numbers = #tpu.dot_dimension_numbers<[1], [0], [0], [1], [0, 0, 1, 1], [], []>} : vector<128x128xbf16>, vector<128x128xbf16>, vector<128x128xf32> -> vector<128x128xf32>
    %25 = arith.addf %19, %24 : vector<128x128xf32>
    %c0_30 = arith.constant 0 : index
    %c0_31 = arith.constant 0 : index
    %26 = vector.load %arg12[%c0_30, %c0_31] : memref<128x128xf32, #tpu.memory_space<vmem>>, vector<128x128xf32>
    tpu.vector_store %arg12[%c0_30, %c0_31], %25 {strides = array<i32>} : memref<128x128xf32, #tpu.memory_space<vmem>>, vector<128x128xf32>,
    %c0_i32_32 = arith.constant 0 : i32
    %27 = arith.cmpi eq, %arg1, %c0_i32_32 : i32
    %28 = arith.extui %27 : i1 to i32
    %c0_i32_33 = arith.constant 0 : i32
    %29 = arith.cmpi ne, %28, %c0_i32_33 : i32
    scf.if %29 {
      %c0_34 = arith.constant 0 : index
      %c0_35 = arith.constant 0 : index
      %30 = vector.load %arg12[%c0_34, %c0_35] : memref<128x128xf32, #tpu.memory_space<vmem>>, vector<128x128xf32>
      %cst_36 = arith.constant 0.000000e+00 : f32
      %31 = vector.broadcast %cst_36 : f32 to vector<128x128xf32>
      %32 = arith.maximumf %30, %31 : vector<128x128xf32>
      %33 = arith.truncf %32 : vector<128x128xf32> to vector<128x128xbf16>
      %c0_37 = arith.constant 0 : index
      %c0_38 = arith.constant 0 : index
      %c0_39 = arith.constant 0 : index
      %34 = vector.load %arg11[%c0_37, %c0_38, %c0_39] : memref<1x128x128xbf16, #tpu.memory_space<vmem>>, vector<1x128x128xbf16>
      %35 = vector.shape_cast %34 : vector<1x128x128xbf16> to vector<128x128xbf16>
      %36 = vector.shape_cast %33 : vector<128x128xbf16> to vector<1x128x128xbf16>
      tpu.vector_store %arg11[%c0_37, %c0_38, %c0_39], %36 {strides = array<i32>} : memref<1x128x128xbf16, #tpu.memory_space<vmem>>, vector<1x128x128xbf16>,
    } else {
    }
    return
  }
  func.func @transform_0(%arg0: i32, %arg1: i32, %arg2: memref<2xi32, #tpu.memory_space<smem>>, %arg3: memref<2xi32, #tpu.memory_space<smem>>) -> (i32, i32, i32, i32) {
    %c0_i32 = arith.constant 0 : i32
    %c0_i32_0 = arith.constant 0 : i32
    %c0_i32_1 = arith.constant 0 : i32
    return %arg0, %arg1, %c0_i32, %c0_i32_0 : i32, i32, i32, i32
  }
  func.func @transform_1(%arg0: i32, %arg1: i32, %arg2: memref<2xi32, #tpu.memory_space<smem>>, %arg3: memref<2xi32, #tpu.memory_space<smem>>) -> (i32, i32, i32, i32) {
    %c0_i32 = arith.constant 0 : i32
    %c0_i32_0 = arith.constant 0 : i32
    %c0_i32_1 = arith.constant 0 : i32
    return %arg0, %arg1, %c0_i32, %c0_i32_0 : i32, i32, i32, i32
  }
  func.func @transform_2(%arg0: i32, %arg1: i32, %arg2: memref<2xi32, #tpu.memory_space<smem>>, %arg3: memref<2xi32, #tpu.memory_space<smem>>) -> (i32, i32, i32) {
    %c1_i32 = arith.constant 1 : i32
    %0 = arith.muli %arg0, %c1_i32 : i32
    %1 = arith.addi %0, %arg1 : i32
    %2 = arith.index_cast %1 : i32 to index
    %3 = memref.load %arg2[%2] : memref<2xi32, #tpu.memory_space<smem>>
    %c0_i32 = arith.constant 0 : i32
    %c0_i32_0 = arith.constant 0 : i32
    %c0_i32_1 = arith.constant 0 : i32
    return %3, %c0_i32, %c0_i32_0 : i32, i32, i32
  }
  func.func @transform_3(%arg0: i32, %arg1: i32, %arg2: memref<2xi32, #tpu.memory_space<smem>>, %arg3: memref<2xi32, #tpu.memory_space<smem>>) -> (i32, i32, i32) {
    %0 = arith.index_cast %arg0 : i32 to index
    %1 = memref.load %arg3[%0] : memref<2xi32, #tpu.memory_space<smem>>
    %c0_i32 = arith.constant 0 : i32
    %c0_i32_0 = arith.constant 0 : i32
    %c0_i32_1 = arith.constant 0 : i32
    return %1, %c0_i32, %c0_i32_0 : i32, i32, i32
  }
  func.func @transform_4(%arg0: i32, %arg1: i32, %arg2: memref<2xi32, #tpu.memory_space<smem>>, %arg3: memref<2xi32, #tpu.memory_space<smem>>) -> (i32, i32, i32, i32) {
    %c0_i32 = arith.constant 0 : i32
    %c0_i32_0 = arith.constant 0 : i32
    %c0_i32_1 = arith.constant 0 : i32
    return %arg0, %arg1, %c0_i32, %c0_i32_0 : i32, i32, i32, i32
  }
  func.func @transform_5(%arg0: i32, %arg1: i32, %arg2: memref<2xi32, #tpu.memory_space<smem>>, %arg3: memref<2xi32, #tpu.memory_space<smem>>) -> (i32, i32, i32, i32) {
    %c0_i32 = arith.constant 0 : i32
    %c0_i32_0 = arith.constant 0 : i32
    %c0_i32_1 = arith.constant 0 : i32
    return %arg0, %arg1, %c0_i32, %c0_i32_0 : i32, i32, i32, i32
  }
  func.func @transform_6(%arg0: i32, %arg1: i32, %arg2: memref<2xi32, #tpu.memory_space<smem>>, %arg3: memref<2xi32, #tpu.memory_space<smem>>) -> (i32, i32, i32) {
    %c0_i32 = arith.constant 0 : i32
    %c0_i32_0 = arith.constant 0 : i32
    %c0_i32_1 = arith.constant 0 : i32
    return %arg0, %c0_i32, %c0_i32_0 : i32, i32, i32
  }
  func.func @transform_7(%arg0: i32, %arg1: i32, %arg2: memref<2xi32, #tpu.memory_space<smem>>, %arg3: memref<2xi32, #tpu.memory_space<smem>>) -> (i32, i32, i32) {
    %c0_i32 = arith.constant 0 : i32
    %c0_i32_0 = arith.constant 0 : i32
    %c0_i32_1 = arith.constant 0 : i32
    return %arg0, %c0_i32, %c0_i32_0 : i32, i32, i32
  }
}

module attributes {stable_mosaic.version = 11 : i64} {
  func.func @_hetero_layer_kernel(%arg0: i32, %arg1: i32, %arg2: memref<2xi32, #tpu.memory_space<smem>>, %arg3: memref<2xi32, #tpu.memory_space<smem>>, %arg4: memref<1x1x128x128xbf16, #tpu.memory_space<vmem>>, %arg5: memref<1x1x128x1xf32, #tpu.memory_space<vmem>>, %arg6: memref<1x128x128xbf16, #tpu.memory_space<vmem>>, %arg7: memref<1x128x128xbf16, #tpu.memory_space<vmem>>, %arg8: memref<1x1x128x128xbf16, #tpu.memory_space<vmem>>, %arg9: memref<1x1x128x128xbf16, #tpu.memory_space<vmem>>, %arg10: memref<1x1x128xf32, #tpu.memory_space<vmem>>, %arg11: memref<1x128x128xf32, #tpu.memory_space<vmem>>, %arg12: memref<128x128xf32, #tpu.memory_space<vmem>>) attributes {dimension_semantics = [#tpu.dimension_semantics<parallel>, #tpu.dimension_semantics<arbitrary>], iteration_bounds = array<i64: 2, 1>, scalar_prefetch = 2 : i64, scratch_operands = 1 : i64, tpu.core_type = #tpu.core_type<tc>, window_params = [{transform_indices = @transform_0, window_bounds = array<i64: 1, 1, 128, 128>}, {transform_indices = @transform_1, window_bounds = array<i64: 1, 1, 128, 1>}, {transform_indices = @transform_2, window_bounds = array<i64: 1, 128, 128>}, {transform_indices = @transform_3, window_bounds = array<i64: 1, 128, 128>}, {transform_indices = @transform_4, window_bounds = array<i64: 1, 1, 128, 128>}, {transform_indices = @transform_5, window_bounds = array<i64: 1, 1, 128, 128>}, {transform_indices = @transform_6, window_bounds = array<i64: 1, 1, 128>}, {transform_indices = @transform_7, window_bounds = array<i64: 1, 128, 128>}]} {
    %c0_i32 = arith.constant 0 : i32
    %0 = arith.cmpi eq, %arg1, %c0_i32 : i32
    %1 = arith.extui %0 : i1 to i32
    %c0_i32_0 = arith.constant 0 : i32
    %2 = arith.cmpi ne, %1, %c0_i32_0 : i32
    scf.if %2 {
      %c0_34 = arith.constant 0 : index
      %c0_35 = arith.constant 0 : index
      %c0_36 = arith.constant 0 : index
      %30 = vector.load %arg10[%c0_34, %c0_35, %c0_36] : memref<1x1x128xf32, #tpu.memory_space<vmem>>, vector<1x1x128xf32>
      %31 = vector.shape_cast %30 : vector<1x1x128xf32> to vector<1x128xf32>
      %32 = vector.shape_cast %31 : vector<1x128xf32> to vector<1x128xf32>
      %33 = vector.broadcast %32 : vector<1x128xf32> to vector<128x128xf32>
      %c0_37 = arith.constant 0 : index
      %c0_38 = arith.constant 0 : index
      %34 = vector.load %arg12[%c0_37, %c0_38] : memref<128x128xf32, #tpu.memory_space<vmem>>, vector<128x128xf32>
      tpu.vector_store %arg12[%c0_37, %c0_38], %33 {strides = array<i32>} : memref<128x128xf32, #tpu.memory_space<vmem>>, vector<128x128xf32>,
    } else {
    }
    %c0 = arith.constant 0 : index
    %c0_1 = arith.constant 0 : index
    %c0_2 = arith.constant 0 : index
    %c0_3 = arith.constant 0 : index
    %3 = vector.load %arg4[%c0, %c0_1, %c0_2, %c0_3] : memref<1x1x128x128xbf16, #tpu.memory_space<vmem>>, vector<1x1x128x128xbf16>
    %4 = vector.shape_cast %3 : vector<1x1x128x128xbf16> to vector<128x128xbf16>
    %c0_4 = arith.constant 0 : index
    %c0_5 = arith.constant 0 : index
    %c0_6 = arith.constant 0 : index
    %5 = vector.load %arg6[%c0_4, %c0_5, %c0_6] : memref<1x128x128xbf16, #tpu.memory_space<vmem>>, vector<1x128x128xbf16>
    %6 = vector.shape_cast %5 : vector<1x128x128xbf16> to vector<128x128xbf16>
    %cst = arith.constant dense<0.000000e+00> : vector<128x128xf32>
    %7 = tpu.matmul %4, %6, %cst {dimension_numbers = #tpu.dot_dimension_numbers<[1], [0], [0], [1], [0, 0, 1, 1], [], []>} : vector<128x128xbf16>, vector<128x128xbf16>, vector<128x128xf32> -> vector<128x128xf32>
    %c0_7 = arith.constant 0 : index
    %c0_8 = arith.constant 0 : index
    %c0_9 = arith.constant 0 : index
    %c0_10 = arith.constant 0 : index
    %8 = vector.load %arg5[%c0_7, %c0_8, %c0_9, %c0_10] : memref<1x1x128x1xf32, #tpu.memory_space<vmem>>, vector<1x1x128x1xf32>
    %9 = vector.shape_cast %8 : vector<1x1x128x1xf32> to vector<128x1xf32>
    %10 = vector.broadcast %9 : vector<128x1xf32> to vector<128x128xf32>
    %11 = arith.mulf %7, %10 : vector<128x128xf32>
    %c0_11 = arith.constant 0 : index
    %c0_12 = arith.constant 0 : index
    %12 = vector.load %arg12[%c0_11, %c0_12] : memref<128x128xf32, #tpu.memory_space<vmem>>, vector<128x128xf32>
    %13 = arith.truncf %11 : vector<128x128xf32> to vector<128x128xbf16>
    %c0_13 = arith.constant 0 : index
    %c0_14 = arith.constant 0 : index
    %c0_15 = arith.constant 0 : index
    %c0_16 = arith.constant 0 : index
    %14 = vector.load %arg8[%c0_13, %c0_14, %c0_15, %c0_16] : memref<1x1x128x128xbf16, #tpu.memory_space<vmem>>, vector<1x1x128x128xbf16>
    %15 = vector.shape_cast %14 : vector<1x1x128x128xbf16> to vector<128x128xbf16>
    %cst_17 = arith.constant dense<0.000000e+00> : vector<128x128xf32>
    %16 = tpu.matmul %13, %15, %cst_17 {dimension_numbers = #tpu.dot_dimension_numbers<[1], [0], [0], [1], [0, 0, 1, 1], [], []>} : vector<128x128xbf16>, vector<128x128xbf16>, vector<128x128xf32> -> vector<128x128xf32>
    %17 = arith.addf %12, %16 : vector<128x128xf32>
    %c0_18 = arith.constant 0 : index
    %c0_19 = arith.constant 0 : index
    %18 = vector.load %arg12[%c0_18, %c0_19] : memref<128x128xf32, #tpu.memory_space<vmem>>, vector<128x128xf32>
    tpu.vector_store %arg12[%c0_18, %c0_19], %17 {strides = array<i32>} : memref<128x128xf32, #tpu.memory_space<vmem>>, vector<128x128xf32>,
    %c0_20 = arith.constant 0 : index
    %c0_21 = arith.constant 0 : index
    %19 = vector.load %arg12[%c0_20, %c0_21] : memref<128x128xf32, #tpu.memory_space<vmem>>, vector<128x128xf32>
    %c0_22 = arith.constant 0 : index
    %c0_23 = arith.constant 0 : index
    %c0_24 = arith.constant 0 : index
    %20 = vector.load %arg7[%c0_22, %c0_23, %c0_24] : memref<1x128x128xbf16, #tpu.memory_space<vmem>>, vector<1x128x128xbf16>
    %21 = vector.shape_cast %20 : vector<1x128x128xbf16> to vector<128x128xbf16>
    %c0_25 = arith.constant 0 : index
    %c0_26 = arith.constant 0 : index
    %c0_27 = arith.constant 0 : index
    %c0_28 = arith.constant 0 : index
    %22 = vector.load %arg9[%c0_25, %c0_26, %c0_27, %c0_28] : memref<1x1x128x128xbf16, #tpu.memory_space<vmem>>, vector<1x1x128x128xbf16>
    %23 = vector.shape_cast %22 : vector<1x1x128x128xbf16> to vector<128x128xbf16>
    %cst_29 = arith.constant dense<0.000000e+00> : vector<128x128xf32>
    %24 = tpu.matmul %21, %23, %cst_29 {dimension_numbers = #tpu.dot_dimension_numbers<[1], [0], [0], [1], [0, 0, 1, 1], [], []>} : vector<128x128xbf16>, vector<128x128xbf16>, vector<128x128xf32> -> vector<128x128xf32>
    %25 = arith.addf %19, %24 : vector<128x128xf32>
    %c0_30 = arith.constant 0 : index
    %c0_31 = arith.constant 0 : index
    %26 = vector.load %arg12[%c0_30, %c0_31] : memref<128x128xf32, #tpu.memory_space<vmem>>, vector<128x128xf32>
    tpu.vector_store %arg12[%c0_30, %c0_31], %25 {strides = array<i32>} : memref<128x128xf32, #tpu.memory_space<vmem>>, vector<128x128xf32>,
    %c0_i32_32 = arith.constant 0 : i32
    %27 = arith.cmpi eq, %arg1, %c0_i32_32 : i32
    %28 = arith.extui %27 : i1 to i32
    %c0_i32_33 = arith.constant 0 : i32
    %29 = arith.cmpi ne, %28, %c0_i32_33 : i32
    scf.if %29 {
      %c0_34 = arith.constant 0 : index
      %c0_35 = arith.constant 0 : index
      %30 = vector.load %arg12[%c0_34, %c0_35] : memref<128x128xf32, #tpu.memory_space<vmem>>, vector<128x128xf32>
      %c0_36 = arith.constant 0 : index
      %c0_37 = arith.constant 0 : index
      %c0_38 = arith.constant 0 : index
      %31 = vector.load %arg11[%c0_36, %c0_37, %c0_38] : memref<1x128x128xf32, #tpu.memory_space<vmem>>, vector<1x128x128xf32>
      %32 = vector.shape_cast %31 : vector<1x128x128xf32> to vector<128x128xf32>
      %33 = vector.shape_cast %30 : vector<128x128xf32> to vector<1x128x128xf32>
      tpu.vector_store %arg11[%c0_36, %c0_37, %c0_38], %33 {strides = array<i32>} : memref<1x128x128xf32, #tpu.memory_space<vmem>>, vector<1x128x128xf32>,
    } else {
    }
    return
  }
  func.func @transform_0(%arg0: i32, %arg1: i32, %arg2: memref<2xi32, #tpu.memory_space<smem>>, %arg3: memref<2xi32, #tpu.memory_space<smem>>) -> (i32, i32, i32, i32) {
    %c0_i32 = arith.constant 0 : i32
    %c0_i32_0 = arith.constant 0 : i32
    %c0_i32_1 = arith.constant 0 : i32
    return %arg0, %arg1, %c0_i32, %c0_i32_0 : i32, i32, i32, i32
  }
  func.func @transform_1(%arg0: i32, %arg1: i32, %arg2: memref<2xi32, #tpu.memory_space<smem>>, %arg3: memref<2xi32, #tpu.memory_space<smem>>) -> (i32, i32, i32, i32) {
    %c0_i32 = arith.constant 0 : i32
    %c0_i32_0 = arith.constant 0 : i32
    %c0_i32_1 = arith.constant 0 : i32
    return %arg0, %arg1, %c0_i32, %c0_i32_0 : i32, i32, i32, i32
  }
  func.func @transform_2(%arg0: i32, %arg1: i32, %arg2: memref<2xi32, #tpu.memory_space<smem>>, %arg3: memref<2xi32, #tpu.memory_space<smem>>) -> (i32, i32, i32) {
    %c1_i32 = arith.constant 1 : i32
    %0 = arith.muli %arg0, %c1_i32 : i32
    %1 = arith.addi %0, %arg1 : i32
    %2 = arith.index_cast %1 : i32 to index
    %3 = memref.load %arg2[%2] : memref<2xi32, #tpu.memory_space<smem>>
    %c0_i32 = arith.constant 0 : i32
    %c0_i32_0 = arith.constant 0 : i32
    %c0_i32_1 = arith.constant 0 : i32
    return %3, %c0_i32, %c0_i32_0 : i32, i32, i32
  }
  func.func @transform_3(%arg0: i32, %arg1: i32, %arg2: memref<2xi32, #tpu.memory_space<smem>>, %arg3: memref<2xi32, #tpu.memory_space<smem>>) -> (i32, i32, i32) {
    %0 = arith.index_cast %arg0 : i32 to index
    %1 = memref.load %arg3[%0] : memref<2xi32, #tpu.memory_space<smem>>
    %c0_i32 = arith.constant 0 : i32
    %c0_i32_0 = arith.constant 0 : i32
    %c0_i32_1 = arith.constant 0 : i32
    return %1, %c0_i32, %c0_i32_0 : i32, i32, i32
  }
  func.func @transform_4(%arg0: i32, %arg1: i32, %arg2: memref<2xi32, #tpu.memory_space<smem>>, %arg3: memref<2xi32, #tpu.memory_space<smem>>) -> (i32, i32, i32, i32) {
    %c0_i32 = arith.constant 0 : i32
    %c0_i32_0 = arith.constant 0 : i32
    %c0_i32_1 = arith.constant 0 : i32
    return %arg0, %arg1, %c0_i32, %c0_i32_0 : i32, i32, i32, i32
  }
  func.func @transform_5(%arg0: i32, %arg1: i32, %arg2: memref<2xi32, #tpu.memory_space<smem>>, %arg3: memref<2xi32, #tpu.memory_space<smem>>) -> (i32, i32, i32, i32) {
    %c0_i32 = arith.constant 0 : i32
    %c0_i32_0 = arith.constant 0 : i32
    %c0_i32_1 = arith.constant 0 : i32
    return %arg0, %arg1, %c0_i32, %c0_i32_0 : i32, i32, i32, i32
  }
  func.func @transform_6(%arg0: i32, %arg1: i32, %arg2: memref<2xi32, #tpu.memory_space<smem>>, %arg3: memref<2xi32, #tpu.memory_space<smem>>) -> (i32, i32, i32) {
    %c0_i32 = arith.constant 0 : i32
    %c0_i32_0 = arith.constant 0 : i32
    %c0_i32_1 = arith.constant 0 : i32
    return %arg0, %c0_i32, %c0_i32_0 : i32, i32, i32
  }
  func.func @transform_7(%arg0: i32, %arg1: i32, %arg2: memref<2xi32, #tpu.memory_space<smem>>, %arg3: memref<2xi32, #tpu.memory_space<smem>>) -> (i32, i32, i32) {
    %c0_i32 = arith.constant 0 : i32
    %c0_i32_0 = arith.constant 0 : i32
    %c0_i32_1 = arith.constant 0 : i32
    return %arg0, %c0_i32, %c0_i32_0 : i32, i32, i32
  }
}

</mosaic_0001>

<llo_original>
// kernel: forward.3
$region0: #{forward.3}
  #allocation0 [shape = 'u32[]', space=smem, size = 0x4, offset = 0x4, fixed_abs, tag = 'smem constant byte address 0x4 - core index']
  #allocation1 [shape = 'u32[144,128]{1,0:T(1,128)}', space=vmem, size = 0x12000, scoped, tag = 'internal scratch']
  #allocation2 [shape = 'f32[128,128]{1,0:T(8,128)}', space=vmem, size = 0x10000, scoped, tag = 'scratch operand']
  #allocation3 [shape = 's32[1]{0}', space=sflag, size = 0x4, scoped, tag = 'scoped memory for forward.3']
  #allocation4 [shape = 'u8[512]{0}', space=smem, size = 0x200, scoped, tag = 'prefetched SMEM operand 0']
  #allocation5 [shape = 'u8[512]{0}', space=smem, size = 0x200, scoped, tag = 'prefetched SMEM operand 1']
  %s0 = inlined_call_operand.vmem [shape: s32[2], index: 0, kind: input, shape index: {}]
  %s1 = inlined_call_operand.vmem [shape: s32[2], index: 1, kind: input, shape index: {}]
  %s2 = inlined_call_operand.vmem [shape: bf16[2,1,128,128], index: 2, kind: input, shape index: {}]
  %s3 = inlined_call_operand.vmem [shape: f32[2,1,128,1], index: 3, kind: input, shape index: {}]
  %s4 = inlined_call_operand.vmem [shape: bf16[2,128,128], index: 4, kind: input, shape index: {}, may-alias: {4,5}]
  %s5 = inlined_call_operand.vmem [shape: bf16[2,128,128], index: 5, kind: input, shape index: {}, may-alias: {4,5}]
  %s6 = inlined_call_operand.vmem [shape: bf16[2,1,128,128], index: 6, kind: input, shape index: {}]
  %s7 = inlined_call_operand.vmem [shape: bf16[2,1,128,128], index: 7, kind: input, shape index: {}]
  %s8 = inlined_call_operand.vmem [shape: f32[2,1,128], index: 8, kind: input, shape index: {}]
  %s9 = inlined_call_operand.vmem [shape: f32[2,128,128], index: 9, kind: output, shape index: {}]
  %s10 = sld [smem:[#allocation0]]
  $region69: #{forward.3} parent=0
    _
  %s12 = ssub.s32 1, %s10
  %s13 = scalar_select 0, %s12, %s10
  %s14 = sshll.u32 %s0, 4
  %s15 = int_to_ptr.vmem [resolvable:$true] %s14
  %17 = dma.vmem_to_smem %s15, 16, [#allocation4], [#allocation3]
  %s18 = sshll.u32 %s1, 4
  %s19 = int_to_ptr.vmem [resolvable:$true] %s18
  %21 = dma.vmem_to_smem %s19, 16, [#allocation5], [#allocation3]
  %22 = dma.done [#allocation3], 32
  %23 = sfence
  loop: start=0, step=1, limit=4
  $region2: #{forward.3} parent=0 // loop_pre_header
    _
  $region3: #{forward.3} parent=0 // loop_header
    %s25 = sphi 0, %s29
    %p26 = scmp.ge.s32.totalorder %s25, 4
    %s32 = sphi 0, %s44
    %s33 = sphi 0, %s40
    %s34 = sphi 0, %s32
    %s35 = sphi 0, %s33
    %s36 = sphi 0, %s34
    %s37 = sphi 0, %s35
    %s49 = sphi 0, %s51
    %s52 = sphi 0, %s49
    %s53 = sphi 0, %s52
    %s69 = sphi 0, %s53
    %s77 = sphi 0, %s79
    %s80 = sphi 0, %s77
    %s81 = sphi 0, %s80
    %s97 = sphi 0, %s81
    %s107 = sphi 0, %s109
    %s110 = sphi 0, %s107
    %s111 = sphi 0, %s110
    %s127 = sphi 0, %s111
    %s135 = sphi 0, %s137
    %s138 = sphi 0, %s135
    %s139 = sphi 0, %s138
    %s155 = sphi 0, %s139
    %s163 = sphi 0, %s165
    %s166 = sphi 0, %s163
    %s167 = sphi 0, %s166
    %s183 = sphi 0, %s167
    %s191 = sphi 0, %s193
    %s194 = sphi 0, %s191
    %s195 = sphi 0, %s194
    %s211 = sphi 0, %s195
    %s217 = sphi 0, %s219
    %s220 = sphi 0, %s217
    %s221 = sphi 0, %s220
    %s237 = sphi 0, %s221
    %s243 = sphi 0, %s245
    %s246 = sphi 0, %s243
    %s247 = sphi 0, %s246
    %s263 = sphi 0, %s247
  $region4: #{forward.3} parent=0 // loop_header_branch
    %28 = sbr.rel (%p26) target = $region8
  $region5: #{forward.3} parent=0 // loop_body
    %s30 = ssub.s32 %s25, 1
    %s31 = ssub.s32 %s25, 2
    %s38 = sadd.s32 1, %s33
    %p39 = scmp.ge.s32.totalorder %s38, 1
    %s40 = scalar_select %p39, 0, %s38
    %s41 = sadd.s32 1, %s32
    %s42 = scalar_select %p39, %s41, %s32
    %p43 = scmp.ge.s32.totalorder %s42, 2
    %s44 = scalar_select %p43, 0, %s42
    %s45 = ssub.s32 %s32, %s44
    %s46 = ssub.s32 %s33, %s40
    %s47 = sor.u32 %s45, %s46
    %p48 = scmp.eq.s32.totalorder %s47, 0
    %s50 = sadd.s32 %s49, 1
    %s51 = scalar_select %p48, %s49, %s50
    %p54 = pneg %p48
    %p55 = scmp.eq.s32.totalorder %s25, 1
    %p56 = por %p54, %p55
    %p57 = scmp.ne.s32.totalorder %s49, %s52
    %p58 = scmp.eq.s32.totalorder %s25, 0
    %p59 = por %p57, %p58
    %p60 = scmp.ne.s32.totalorder %s49, %s52
    %p61 = scmp.eq.s32.totalorder %s30, 1
    %p62 = por %p60, %p61
    %p63 = scmp.ne.s32.totalorder %s52, %s53
    %p64 = scmp.eq.s32.totalorder %s30, 0
    %p65 = por %p63, %p64
    %p66 = scmp.ne.s32.totalorder %s52, %s53
    %p67 = scmp.eq.s32.totalorder %s31, 1
    %p68 = por %p66, %p67
    %p70 = scmp.ne.s32.totalorder %s53, %s69
    %p71 = scmp.eq.s32.totalorder %s31, 0
    %p72 = por %p70, %p71
    %s73 = ssub.s32 %s32, %s44
    %s74 = ssub.s32 %s33, %s40
    %s75 = sor.u32 %s73, %s74
    %p76 = scmp.eq.s32.totalorder %s75, 0
    %s78 = sadd.s32 %s77, 1
    %s79 = scalar_select %p76, %s77, %s78
    %p82 = pneg %p76
    %p83 = scmp.eq.s32.totalorder %s25, 1
    %p84 = por %p82, %p83
    %p85 = scmp.ne.s32.totalorder %s77, %s80
    %p86 = scmp.eq.s32.totalorder %s25, 0
    %p87 = por %p85, %p86
    %p88 = scmp.ne.s32.totalorder %s77, %s80
    %p89 = scmp.eq.s32.totalorder %s30, 1
    %p90 = por %p88, %p89
    %p91 = scmp.ne.s32.totalorder %s80, %s81
    %p92 = scmp.eq.s32.totalorder %s30, 0
    %p93 = por %p91, %p92
    %p94 = scmp.ne.s32.totalorder %s80, %s81
    %p95 = scmp.eq.s32.totalorder %s31, 1
    %p96 = por %p94, %p95
    %p98 = scmp.ne.s32.totalorder %s81, %s97
    %p99 = scmp.eq.s32.totalorder %s31, 0
    %p100 = por %p98, %p99
    %s101 = sadd.s32 %s32, %s33
    %s102 = sld [smem:[#allocation4 + %s101]]
    %s103 = sadd.s32 %s44, %s40
    %s104 = sld [smem:[#allocation4 + %s103]]
    %s105 = ssub.s32 %s102, %s104
    %p106 = scmp.eq.s32.totalorder %s105, 0
    %s108 = sadd.s32 %s107, 1
    %s109 = scalar_select %p106, %s107, %s108
    %p112 = pneg %p106
    %p113 = scmp.eq.s32.totalorder %s25, 1
    %p114 = por %p112, %p113
    %p115 = scmp.ne.s32.totalorder %s107, %s110
    %p116 = scmp.eq.s32.totalorder %s25, 0
    %p117 = por %p115, %p116
    %p118 = scmp.ne.s32.totalorder %s107, %s110
    %p119 = scmp.eq.s32.totalorder %s30, 1
    %p120 = por %p118, %p119
    %p121 = scmp.ne.s32.totalorder %s110, %s111
    %p122 = scmp.eq.s32.totalorder %s30, 0
    %p123 = por %p121, %p122
    %p124 = scmp.ne.s32.totalorder %s110, %s111
    %p125 = scmp.eq.s32.totalorder %s31, 1
    %p126 = por %p124, %p125
    %p128 = scmp.ne.s32.totalorder %s111, %s127
    %p129 = scmp.eq.s32.totalorder %s31, 0
    %p130 = por %p128, %p129
    %s131 = sld [smem:[#allocation5 + %s32]]
    %s132 = sld [smem:[#allocation5 + %s44]]
    %s133 = ssub.s32 %s131, %s132
    %p134 = scmp.eq.s32.totalorder %s133, 0
    %s136 = sadd.s32 %s135, 1
    %s137 = scalar_select %p134, %s135, %s136
    %p140 = pneg %p134
    %p141 = scmp.eq.s32.totalorder %s25, 1
    %p142 = por %p140, %p141
    %p143 = scmp.ne.s32.totalorder %s135, %s138
    %p144 = scmp.eq.s32.totalorder %s25, 0
    %p145 = por %p143, %p144
    %p146 = scmp.ne.s32.totalorder %s135, %s138
    %p147 = scmp.eq.s32.totalorder %s30, 1
    %p148 = por %p146, %p147
    %p149 = scmp.ne.s32.totalorder %s138, %s139
    %p150 = scmp.eq.s32.totalorder %s30, 0
    %p151 = por %p149, %p150
    %p152 = scmp.ne.s32.totalorder %s138, %s139
    %p153 = scmp.eq.s32.totalorder %s31, 1
    %p154 = por %p152, %p153
    %p156 = scmp.ne.s32.totalorder %s139, %s155
    %p157 = scmp.eq.s32.totalorder %s31, 0
    %p158 = por %p156, %p157
    %s159 = ssub.s32 %s32, %s44
    %s160 = ssub.s32 %s33, %s40
    %s161 = sor.u32 %s159, %s160
    %p162 = scmp.eq.s32.totalorder %s161, 0
    %s164 = sadd.s32 %s163, 1
    %s165 = scalar_select %p162, %s163, %s164
    %p168 = pneg %p162
    %p169 = scmp.eq.s32.totalorder %s25, 1
    %p170 = por %p168, %p169
    %p171 = scmp.ne.s32.totalorder %s163, %s166
    %p172 = scmp.eq.s32.totalorder %s25, 0
    %p173 = por %p171, %p172
    %p174 = scmp.ne.s32.totalorder %s163, %s166
    %p175 = scmp.eq.s32.totalorder %s30, 1
    %p176 = por %p174, %p175
    %p177 = scmp.ne.s32.totalorder %s166, %s167
    %p178 = scmp.eq.s32.totalorder %s30, 0
    %p179 = por %p177, %p178
    %p180 = scmp.ne.s32.totalorder %s166, %s167
    %p181 = scmp.eq.s32.totalorder %s31, 1
    %p182 = por %p180, %p181
    %p184 = scmp.ne.s32.totalorder %s167, %s183
    %p185 = scmp.eq.s32.totalorder %s31, 0
    %p186 = por %p184, %p185
    %s187 = ssub.s32 %s32, %s44
    %s188 = ssub.s32 %s33, %s40
    %s189 = sor.u32 %s187, %s188
    %p190 = scmp.eq.s32.totalorder %s189, 0
    %s192 = sadd.s32 %s191, 1
    %s193 = scalar_select %p190, %s191, %s192
    %p196 = pneg %p190
    %p197 = scmp.eq.s32.totalorder %s25, 1
    %p198 = por %p196, %p197
    %p199 = scmp.ne.s32.totalorder %s191, %s194
    %p200 = scmp.eq.s32.totalorder %s25, 0
    %p201 = por %p199, %p200
    %p202 = scmp.ne.s32.totalorder %s191, %s194
    %p203 = scmp.eq.s32.totalorder %s30, 1
    %p204 = por %p202, %p203
    %p205 = scmp.ne.s32.totalorder %s194, %s195
    %p206 = scmp.eq.s32.totalorder %s30, 0
    %p207 = por %p205, %p206
    %p208 = scmp.ne.s32.totalorder %s194, %s195
    %p209 = scmp.eq.s32.totalorder %s31, 1
    %p210 = por %p208, %p209
    %p212 = scmp.ne.s32.totalorder %s195, %s211
    %p213 = scmp.eq.s32.totalorder %s31, 0
    %p214 = por %p212, %p213
    %s215 = ssub.s32 %s32, %s44
    %p216 = scmp.eq.s32.totalorder %s215, 0
    %s218 = sadd.s32 %s217, 1
    %s219 = scalar_select %p216, %s217, %s218
    %p222 = pneg %p216
    %p223 = scmp.eq.s32.totalorder %s25, 1
    %p224 = por %p222, %p223
    %p225 = scmp.ne.s32.totalorder %s217, %s220
    %p226 = scmp.eq.s32.totalorder %s25, 0
    %p227 = por %p225, %p226
    %p228 = scmp.ne.s32.totalorder %s217, %s220
    %p229 = scmp.eq.s32.totalorder %s30, 1
    %p230 = por %p228, %p229
    %p231 = scmp.ne.s32.totalorder %s220, %s221
    %p232 = scmp.eq.s32.totalorder %s30, 0
    %p233 = por %p231, %p232
    %p234 = scmp.ne.s32.totalorder %s220, %s221
    %p235 = scmp.eq.s32.totalorder %s31, 1
    %p236 = por %p234, %p235
    %p238 = scmp.ne.s32.totalorder %s221, %s237
    %p239 = scmp.eq.s32.totalorder %s31, 0
    %p240 = por %p238, %p239
    %s241 = ssub.s32 %s32, %s44
    %p242 = scmp.eq.s32.totalorder %s241, 0
    %s244 = sadd.s32 %s243, 1
    %s245 = scalar_select %p242, %s243, %s244
    %p248 = pneg %p242
    %p249 = scmp.eq.s32.totalorder %s25, 1
    %p250 = por %p248, %p249
    %p251 = scmp.ne.s32.totalorder %s243, %s246
    %p252 = scmp.eq.s32.totalorder %s25, 0
    %p253 = por %p251, %p252
    %p254 = scmp.ne.s32.totalorder %s243, %s246
    %p255 = scmp.eq.s32.totalorder %s30, 1
    %p256 = por %p254, %p255
    %p257 = scmp.ne.s32.totalorder %s246, %s247
    %p258 = scmp.eq.s32.totalorder %s30, 0
    %p259 = por %p257, %p258
    %p260 = scmp.ne.s32.totalorder %s246, %s247
    %p261 = scmp.eq.s32.totalorder %s31, 1
    %p262 = por %p260, %p261
    %p264 = scmp.ne.s32.totalorder %s247, %s263
    %p265 = scmp.eq.s32.totalorder %s31, 0
    %p266 = por %p264, %p265
    %p267 = scmp.le.s32.totalorder 1, %s25
    %p268 = scmp.lt.s32.totalorder %s25, 3
    %p269 = pnand %p267, %p268
    %p270 = pneg %p269
    // Predicated region
    $region9: #{forward.3} parent=5 // pred_check
      _
    $region10: #{forward.3} parent=5 // pred_check_branch
      %272 = sbr.rel (%p269) target = $region12
    $region11: #{forward.3} parent=5 // pred_region
      %s273 = ssub.s32 %s25, 1
    $region12: #{forward.3} parent=5 // pred_fallthru
      _
    %p274 = scmp.lt.s32.totalorder %s25, 2
    // Predicated region
    $region13: #{forward.3} parent=5 // pred_check
      %p275 = pneg %p274
    $region14: #{forward.3} parent=5 // pred_check_branch
      %277 = sbr.rel (%p275) target = $region16
    $region15: #{forward.3} parent=5 // pred_region
      // Predicated region
      $region17: #{forward.3} parent=15 // pred_check
        %p278 = pneg %p59
      $region18: #{forward.3} parent=15 // pred_check_branch
        %280 = sbr.rel (%p278) target = $region20
      $region19: #{forward.3} parent=15 // pred_region
        %p281 = scmp.lt.s32.totalorder %s32, 1
        %s282 = scalar_select %p281, %s32, 1
        %p283 = scmp.lt.s32.totalorder %s33, 0
        %s284 = scalar_select %p283, %s33, 0
        %s285 = smul.addr %s284, 16
        %s286 = smul.addr %s282, 16
        %s287 = sadd.s32 %s285, %s286
        %s288 = smul.addr %s287, 4
        %s289 = scalar_lea.vmem %s2, %s288
      $region20: #{forward.3} parent=15 // pred_fallthru
        _
      // Predicated region
      $region21: #{forward.3} parent=15 // pred_check
        %p290 = pneg %p87
      $region22: #{forward.3} parent=15 // pred_check_branch
        %292 = sbr.rel (%p290) target = $region24
      $region23: #{forward.3} parent=15 // pred_region
        %p293 = scmp.lt.s32.totalorder %s32, 1
        %s294 = scalar_select %p293, %s32, 1
        %p295 = scmp.lt.s32.totalorder %s33, 0
        %s296 = scalar_select %p295, %s33, 0
        %s297 = smul.addr %s296, 16
        %s298 = smul.addr %s294, 16
        %s299 = sadd.s32 %s297, %s298
        %s300 = smul.addr %s299, 8
        %s301 = scalar_lea.vmem %s3, %s300
      $region24: #{forward.3} parent=15 // pred_fallthru
        _
      // Predicated region
      $region25: #{forward.3} parent=15 // pred_check
        %p302 = pneg %p117
      $region26: #{forward.3} parent=15 // pred_check_branch
        %304 = sbr.rel (%p302) target = $region28
      $region27: #{forward.3} parent=15 // pred_region
        %s305 = sadd.s32 %s32, %s33
        %s306 = sld [smem:[#allocation4 + %s305]]
        %p307 = scmp.lt.s32.totalorder %s306, 1
        %s308 = scalar_select %p307, %s306, 1
        %s309 = smul.addr %s308, 16
        %s310 = smul.addr %s309, 4
        %s311 = scalar_lea.vmem %s4, %s310
        %s312 = sadd.s32 %s32, %s33
        %s313 = sld [smem:[#allocation4 + %s312]]
      $region28: #{forward.3} parent=15 // pred_fallthru
        _
      // Predicated region
      $region29: #{forward.3} parent=15 // pred_check
        %p314 = pneg %p145
      $region30: #{forward.3} parent=15 // pred_check_branch
        %316 = sbr.rel (%p314) target = $region32
      $region31: #{forward.3} parent=15 // pred_region
        %s317 = sld [smem:[#allocation5 + %s32]]
        %p318 = scmp.lt.s32.totalorder %s317, 1
        %s319 = scalar_select %p318, %s317, 1
        %s320 = smul.addr %s319, 16
        %s321 = smul.addr %s320, 4
        %s322 = scalar_lea.vmem %s5, %s321
        %s323 = sld [smem:[#allocation5 + %s32]]
      $region32: #{forward.3} parent=15 // pred_fallthru
        _
      // Predicated region
      $region33: #{forward.3} parent=15 // pred_check
        %p324 = pneg %p173
      $region34: #{forward.3} parent=15 // pred_check_branch
        %326 = sbr.rel (%p324) target = $region36
      $region35: #{forward.3} parent=15 // pred_region
        %p327 = scmp.lt.s32.totalorder %s32, 1
        %s328 = scalar_select %p327, %s32, 1
        %p329 = scmp.lt.s32.totalorder %s33, 0
        %s330 = scalar_select %p329, %s33, 0
        %s331 = smul.addr %s330, 16
        %s332 = smul.addr %s328, 16
        %s333 = sadd.s32 %s331, %s332
        %s334 = smul.addr %s333, 4
        %s335 = scalar_lea.vmem %s6, %s334
      $region36: #{forward.3} parent=15 // pred_fallthru
        _
      // Predicated region
      $region37: #{forward.3} parent=15 // pred_check
        %p336 = pneg %p201
      $region38: #{forward.3} parent=15 // pred_check_branch
        %338 = sbr.rel (%p336) target = $region40
      $region39: #{forward.3} parent=15 // pred_region
        %p339 = scmp.lt.s32.totalorder %s32, 1
        %s340 = scalar_select %p339, %s32, 1
        %p341 = scmp.lt.s32.totalorder %s33, 0
        %s342 = scalar_select %p341, %s33, 0
        %s343 = smul.addr %s342, 16
        %s344 = smul.addr %s340, 16
        %s345 = sadd.s32 %s343, %s344
        %s346 = smul.addr %s345, 4
        %s347 = scalar_lea.vmem %s7, %s346
      $region40: #{forward.3} parent=15 // pred_fallthru
        _
      // Predicated region
      $region41: #{forward.3} parent=15 // pred_check
        %p348 = pneg %p227
      $region42: #{forward.3} parent=15 // pred_check_branch
        %350 = sbr.rel (%p348) target = $region44
      $region43: #{forward.3} parent=15 // pred_region
        %p351 = scmp.lt.s32.totalorder %s32, 1
        %s352 = scalar_select %p351, %s32, 1
        %s353 = scalar_lea.vmem %s8, %s352
      $region44: #{forward.3} parent=15 // pred_fallthru
        _
    $region16: #{forward.3} parent=5 // pred_fallthru
      _
    %p354 = scmp.le.s32.totalorder 1, %s25
    %p355 = scmp.lt.s32.totalorder %s25, 3
    %p356 = pnand %p354, %p355
    %p357 = pneg %p356
    // Predicated region
    $region45: #{forward.3} parent=5 // pred_check
      _
    $region46: #{forward.3} parent=5 // pred_check_branch
      %359 = sbr.rel (%p356) target = $region48
    $region47: #{forward.3} parent=5 // pred_region
      %s360 = ssub.s32 %s25, 1
      %p361 = scmp.lt.s32.totalorder %s34, 1
      %s362 = scalar_select %p361, %s34, 1
      %p363 = scmp.lt.s32.totalorder %s35, 0
      %s364 = scalar_select %p363, %s35, 0
      %s365 = smul.addr %s364, 16
      %s366 = smul.addr %s362, 16
      %s367 = sadd.s32 %s365, %s366
      %s368 = smul.addr %s367, 4
      %s369 = scalar_lea.vmem %s2, %s368
      %p370 = pneg %p65
      %p371 = pneg %p62
      %p372 = scmp.lt.s32.totalorder %s34, 1
      %s373 = scalar_select %p372, %s34, 1
      %p374 = scmp.lt.s32.totalorder %s35, 0
      %s375 = scalar_select %p374, %s35, 0
      %s376 = smul.addr %s375, 16
      %s377 = smul.addr %s373, 16
      %s378 = sadd.s32 %s376, %s377
      %s379 = smul.addr %s378, 8
      %s380 = scalar_lea.vmem %s3, %s379
      %p381 = pneg %p93
      %p382 = pneg %p90
      %s383 = sadd.s32 %s34, %s35
      %s384 = sld [smem:[#allocation4 + %s383]]
      %p385 = scmp.lt.s32.totalorder %s384, 1
      %s386 = scalar_select %p385, %s384, 1
      %s387 = smul.addr %s386, 16
      %s388 = smul.addr %s387, 4
      %s389 = scalar_lea.vmem %s4, %s388
      %p390 = pneg %p123
      %p391 = pneg %p120
      %s392 = sld [smem:[#allocation5 + %s34]]
      %p393 = scmp.lt.s32.totalorder %s392, 1
      %s394 = scalar_select %p393, %s392, 1
      %s395 = smul.addr %s394, 16
      %s396 = smul.addr %s395, 4
      %s397 = scalar_lea.vmem %s5, %s396
      %p398 = pneg %p151
      %p399 = pneg %p148
      %p400 = scmp.lt.s32.totalorder %s34, 1
      %s401 = scalar_select %p400, %s34, 1
      %p402 = scmp.lt.s32.totalorder %s35, 0
      %s403 = scalar_select %p402, %s35, 0
      %s404 = smul.addr %s403, 16
      %s405 = smul.addr %s401, 16
      %s406 = sadd.s32 %s404, %s405
      %s407 = smul.addr %s406, 4
      %s408 = scalar_lea.vmem %s6, %s407
      %p409 = pneg %p179
      %p410 = pneg %p176
      %p411 = scmp.lt.s32.totalorder %s34, 1
      %s412 = scalar_select %p411, %s34, 1
      %p413 = scmp.lt.s32.totalorder %s35, 0
      %s414 = scalar_select %p413, %s35, 0
      %s415 = smul.addr %s414, 16
      %s416 = smul.addr %s412, 16
      %s417 = sadd.s32 %s415, %s416
      %s418 = smul.addr %s417, 4
      %s419 = scalar_lea.vmem %s7, %s418
      %p420 = pneg %p207
      %p421 = pneg %p204
      %p422 = scmp.lt.s32.totalorder %s34, 1
      %s423 = scalar_select %p422, %s34, 1
      %s424 = scalar_lea.vmem %s8, %s423
      %p425 = pneg %p233
      %p426 = pneg %p230
      %p427 = pneg %p259
      %p428 = pneg %p256
      %p429 = scmp.lt.s32.totalorder %s34, 1
      %s430 = scalar_select %p429, %s34, 1
      %s431 = smul.addr %s430, 16
      %s432 = smul.addr %s431, 8
      %s433 = scalar_lea.vmem %s9, %s432
      %p434 = scmp.lt.s32.totalorder %s34, 1
      %s435 = scalar_select %p434, %s34, 1
      %p436 = scmp.lt.s32.totalorder %s35, 0
      %s437 = scalar_select %p436, %s35, 0
      %s438 = smul.addr %s437, 16
      %s439 = smul.addr %s435, 16
      %s440 = sadd.s32 %s438, %s439
      %s441 = smul.addr %s440, 4
      %s442 = scalar_lea.vmem %s2, %s441
      %p443 = scmp.lt.s32.totalorder %s34, 1
      %s444 = scalar_select %p443, %s34, 1
      %p445 = scmp.lt.s32.totalorder %s35, 0
      %s446 = scalar_select %p445, %s35, 0
      %s447 = smul.addr %s446, 16
      %s448 = smul.addr %s444, 16
      %s449 = sadd.s32 %s447, %s448
      %s450 = smul.addr %s449, 8
      %s451 = scalar_lea.vmem %s3, %s450
      %s452 = sadd.s32 %s34, %s35
      %s453 = sld [smem:[#allocation4 + %s452]]
      %p454 = scmp.lt.s32.totalorder %s453, 1
      %s455 = scalar_select %p454, %s453, 1
      %s456 = smul.addr %s455, 16
      %s457 = smul.addr %s456, 4
      %s458 = scalar_lea.vmem %s4, %s457
      %s459 = sadd.s32 %s34, %s35
      %s460 = sld [smem:[#allocation4 + %s459]]
      %s461 = sld [smem:[#allocation5 + %s34]]
      %p462 = scmp.lt.s32.totalorder %s461, 1
      %s463 = scalar_select %p462, %s461, 1
      %s464 = smul.addr %s463, 16
      %s465 = smul.addr %s464, 4
      %s466 = scalar_lea.vmem %s5, %s465
      %s467 = sld [smem:[#allocation5 + %s34]]
      %p468 = scmp.lt.s32.totalorder %s34, 1
      %s469 = scalar_select %p468, %s34, 1
      %p470 = scmp.lt.s32.totalorder %s35, 0
      %s471 = scalar_select %p470, %s35, 0
      %s472 = smul.addr %s471, 16
      %s473 = smul.addr %s469, 16
      %s474 = sadd.s32 %s472, %s473
      %s475 = smul.addr %s474, 4
      %s476 = scalar_lea.vmem %s6, %s475
      %p477 = scmp.lt.s32.totalorder %s34, 1
      %s478 = scalar_select %p477, %s34, 1
      %p479 = scmp.lt.s32.totalorder %s35, 0
      %s480 = scalar_select %p479, %s35, 0
      %s481 = smul.addr %s480, 16
      %s482 = smul.addr %s478, 16
      %s483 = sadd.s32 %s481, %s482
      %s484 = smul.addr %s483, 4
      %s485 = scalar_lea.vmem %s7, %s484
      %p486 = scmp.lt.s32.totalorder %s34, 1
      %s487 = scalar_select %p486, %s34, 1
      %s488 = scalar_lea.vmem %s8, %s487
      %p489 = scmp.lt.s32.totalorder %s34, 1
      %s490 = scalar_select %p489, %s34, 1
      %s491 = smul.addr %s490, 16
      %s492 = smul.addr %s491, 8
      %s493 = scalar_lea.vmem %s9, %s492
      %p495 = scmp.eq.s32.totalorder %s35, 0
      // Predicated region
      $region49: #{forward.3} parent=47 // pred_check
        %p496 = pneg %p495
      $region50: #{forward.3} parent=47 // pred_check_branch
        %498 = sbr.rel (%p496) target = $region52
      $region51: #{forward.3} parent=47 // pred_region
        %v499 = vld [vmem:[%s488] sm:$0x1]
        %v501 = vlaneseq
        %v502 = vshrl.u32 %v501, 7
        %v503 = vsub.s32 0, %v502
        %v504 = vrot.slane %v499, %v503
        %506 = vst [vmem:[#allocation2] sm:$0xff] %v504
        %507 = vst [vmem:[#allocation2 + $0x8] sm:$0xff] %v504
        %508 = vst [vmem:[#allocation2 + $0x10] sm:$0xff] %v504
        %509 = vst [vmem:[#allocation2 + $0x18] sm:$0xff] %v504
        %510 = vst [vmem:[#allocation2 + $0x20] sm:$0xff] %v504
        %511 = vst [vmem:[#allocation2 + $0x28] sm:$0xff] %v504
        %512 = vst [vmem:[#allocation2 + $0x30] sm:$0xff] %v504
        %513 = vst [vmem:[#allocation2 + $0x38] sm:$0xff] %v504
        %514 = vst [vmem:[#allocation2 + $0x40] sm:$0xff] %v504
        %515 = vst [vmem:[#allocation2 + $0x48] sm:$0xff] %v504
        %516 = vst [vmem:[#allocation2 + $0x50] sm:$0xff] %v504
        %517 = vst [vmem:[#allocation2 + $0x58] sm:$0xff] %v504
        %518 = vst [vmem:[#allocation2 + $0x60] sm:$0xff] %v504
        %519 = vst [vmem:[#allocation2 + $0x68] sm:$0xff] %v504
        %520 = vst [vmem:[#allocation2 + $0x70] sm:$0xff] %v504
        %521 = vst [vmem:[#allocation2 + $0x78] sm:$0xff] %v504
      $region52: #{forward.3} parent=47 // pred_fallthru
        _
      %v522 = vld [vmem:[%s442] sm:$0xf]
      %v523 = vld [vmem:[%s442 + $0x4] sm:$0xf]
      %v524 = vld [vmem:[%s442 + $0x8] sm:$0xf]
      %v525 = vld [vmem:[%s442 + $0xc] sm:$0xf]
      %v526 = vld [vmem:[%s442 + $0x10] sm:$0xf]
      %v527 = vld [vmem:[%s442 + $0x14] sm:$0xf]
      %v528 = vld [vmem:[%s442 + $0x18] sm:$0xf]
      %v529 = vld [vmem:[%s442 + $0x1c] sm:$0xf]
      %v530 = vld [vmem:[%s442 + $0x20] sm:$0xf]
      %v531 = vld [vmem:[%s442 + $0x24] sm:$0xf]
      %v532 = vld [vmem:[%s442 + $0x28] sm:$0xf]
      %v533 = vld [vmem:[%s442 + $0x2c] sm:$0xf]
      %v534 = vld [vmem:[%s442 + $0x30] sm:$0xf]
      %v535 = vld [vmem:[%s442 + $0x34] sm:$0xf]
      %v536 = vld [vmem:[%s442 + $0x38] sm:$0xf]
      %v537 = vld [vmem:[%s442 + $0x3c] sm:$0xf]
      %v538 = vld [vmem:[%s458] sm:$0xf]
      %v539 = vld [vmem:[%s458 + $0x4] sm:$0xf]
      %v540 = vld [vmem:[%s458 + $0x8] sm:$0xf]
      %v541 = vld [vmem:[%s458 + $0xc] sm:$0xf]
      %v542 = vld [vmem:[%s458 + $0x10] sm:$0xf]
      %v543 = vld [vmem:[%s458 + $0x14] sm:$0xf]
      %v544 = vld [vmem:[%s458 + $0x18] sm:$0xf]
      %v545 = vld [vmem:[%s458 + $0x1c] sm:$0xf]
      %v546 = vld [vmem:[%s458 + $0x20] sm:$0xf]
      %v547 = vld [vmem:[%s458 + $0x24] sm:$0xf]
      %v548 = vld [vmem:[%s458 + $0x28] sm:$0xf]
      %v549 = vld [vmem:[%s458 + $0x2c] sm:$0xf]
      %v550 = vld [vmem:[%s458 + $0x30] sm:$0xf]
      %v551 = vld [vmem:[%s458 + $0x34] sm:$0xf]
      %v552 = vld [vmem:[%s458 + $0x38] sm:$0xf]
      %v553 = vld [vmem:[%s458 + $0x3c] sm:$0xf]
      %v570 = vunpack.c.l.b16 %v522
      %v571 = vunpack.c.l.b16 %v523
      %v572 = vunpack.c.l.b16 %v524
      %v573 = vunpack.c.l.b16 %v525
      %v574 = vunpack.c.l.b16 %v526
      %v575 = vunpack.c.l.b16 %v527
      %v576 = vunpack.c.l.b16 %v528
      %v577 = vunpack.c.l.b16 %v529
      %v578 = vunpack.c.l.b16 %v530
      %v579 = vunpack.c.l.b16 %v531
      %v580 = vunpack.c.l.b16 %v532
      %v581 = vunpack.c.l.b16 %v533
      %v582 = vunpack.c.l.b16 %v534
      %v583 = vunpack.c.l.b16 %v535
      %v584 = vunpack.c.l.b16 %v536
      %v585 = vunpack.c.l.b16 %v537
      %v586 = vpack.c.b16 %v571, %v570
      %v587 = vpack.c.b16 %v573, %v572
      %v588 = vpack.c.b16 %v575, %v574
      %v589 = vpack.c.b16 %v577, %v576
      %v590 = vpack.c.b16 %v579, %v578
      %v591 = vpack.c.b16 %v581, %v580
      %v592 = vpack.c.b16 %v583, %v582
      %v593 = vpack.c.b16 %v585, %v584
      %v618 = vunpack.c.l.b16 %v538
      %v619 = vunpack.c.l.b16 %v539
      %v620 = vunpack.c.l.b16 %v540
      %v621 = vunpack.c.l.b16 %v541
      %v622 = vunpack.c.l.b16 %v542
      %v623 = vunpack.c.l.b16 %v543
      %v624 = vunpack.c.l.b16 %v544
      %v625 = vunpack.c.l.b16 %v545
      %v626 = vunpack.c.l.b16 %v546
      %v627 = vunpack.c.l.b16 %v547
      %v628 = vunpack.c.l.b16 %v548
      %v629 = vunpack.c.l.b16 %v549
      %v630 = vunpack.c.l.b16 %v550
      %v631 = vunpack.c.l.b16 %v551
      %v632 = vunpack.c.l.b16 %v552
      %v633 = vunpack.c.l.b16 %v553
      %v634 = vpack.c.b16 %v619, %v618
      %v635 = vpack.c.b16 %v621, %v620
      %v636 = vpack.c.b16 %v623, %v622
      %v637 = vpack.c.b16 %v625, %v624
      %v638 = vpack.c.b16 %v627, %v626
      %v639 = vpack.c.b16 %v629, %v628
      %v640 = vpack.c.b16 %v631, %v630
      %v641 = vpack.c.b16 %v633, %v632
      %650 = vmatprep.subr.bf16.mxu0 0
      %651 = vmatpush1.bf16.msra.mxu0 %v634
      %652 = vmatprep.subr.bf16.mxu0 0
      %653 = vmatpush1.bf16.msra.mxu0 %v635
      %654 = vmatprep.subr.bf16.mxu0 0
      %655 = vmatpush1.bf16.msra.mxu0 %v636
      %656 = vmatprep.subr.bf16.mxu0 0
      %657 = vmatpush1.bf16.msra.mxu0 %v637
      %658 = vmatprep.subr.bf16.mxu0 0
      %659 = vmatpush1.bf16.msra.mxu0 %v638
      %660 = vmatprep.subr.bf16.mxu0 0
      %661 = vmatpush1.bf16.msra.mxu0 %v639
      %662 = vmatprep.subr.bf16.mxu0 0
      %663 = vmatpush1.bf16.msra.mxu0 %v640
      %664 = vmatprep.subr.bf16.mxu0 0
      %665 = vmatpush1.bf16.msra.mxu0 %v641
      %666 = vmatprep.subr.bf16.mxu0 0
      %667 = vmatpush1.bf16.msra.mxu0 0
      %668 = vmatprep.subr.bf16.mxu0 0
      %669 = vmatpush1.bf16.msra.mxu0 0
      %670 = vmatprep.subr.bf16.mxu0 0
      %671 = vmatpush1.bf16.msra.mxu0 0
      %672 = vmatprep.subr.bf16.mxu0 0
      %673 = vmatpush1.bf16.msra.mxu0 0
      %674 = vmatprep.subr.bf16.mxu0 0
      %675 = vmatpush1.bf16.msra.mxu0 0
      %676 = vmatprep.subr.bf16.mxu0 0
      %677 = vmatpush1.bf16.msra.mxu0 0
      %678 = vmatprep.subr.bf16.mxu0 0
      %679 = vmatpush1.bf16.msra.mxu0 0
      %680 = vmatprep.subr.bf16.mxu0 0
      %681 = vmatpush1.bf16.msra.mxu0 0
      %682 = vmatprep.mubr.bf16.mxu0 0
      %683 = vmatmul.mubr.bf16.gmra.mrb[0].mxu0 %v586
      %v684 = vpop.f32.mrb[0].mxu0
      %v685 = vadd.f32 0.0, %v684
      %v686 = vpop.f32.mrb[0].mxu0
      %v687 = vpop.f32.mrb[0].mxu0
      %v688 = vadd.f32 0.0, %v687
      %v689 = vpop.f32.mrb[0].mxu0
      %690 = vmatprep.mubr.bf16.mxu0 0
      %691 = vmatmul.mubr.bf16.gmra.mrb[0].mxu0 %v587
      %v692 = vpop.f32.mrb[0].mxu0
      %v693 = vadd.f32 0.0, %v692
      %v694 = vpop.f32.mrb[0].mxu0
      %v695 = vpop.f32.mrb[0].mxu0
      %v696 = vadd.f32 0.0, %v695
      %v697 = vpop.f32.mrb[0].mxu0
      %698 = vmatprep.mubr.bf16.mxu0 0
      %699 = vmatmul.mubr.bf16.gmra.mrb[0].mxu0 %v588
      %v700 = vpop.f32.mrb[0].mxu0
      %v701 = vadd.f32 0.0, %v700
      %v702 = vpop.f32.mrb[0].mxu0
      %v703 = vpop.f32.mrb[0].mxu0
      %v704 = vadd.f32 0.0, %v703
      %v705 = vpop.f32.mrb[0].mxu0
      %706 = vmatprep.mubr.bf16.mxu0 0
      %707 = vmatmul.mubr.bf16.gmra.mrb[0].mxu0 %v589
      %v708 = vpop.f32.mrb[0].mxu0
      %v709 = vadd.f32 0.0, %v708
      %v710 = vpop.f32.mrb[0].mxu0
      %v711 = vpop.f32.mrb[0].mxu0
      %v712 = vadd.f32 0.0, %v711
      %v713 = vpop.f32.mrb[0].mxu0
      %714 = vmatprep.mubr.bf16.mxu0 0
      %715 = vmatmul.mubr.bf16.gmra.mrb[0].mxu0 %v590
      %v716 = vpop.f32.mrb[0].mxu0
      %v717 = vadd.f32 0.0, %v716
      %v718 = vpop.f32.mrb[0].mxu0
      %v719 = vpop.f32.mrb[0].mxu0
      %v720 = vadd.f32 0.0, %v719
      %v721 = vpop.f32.mrb[0].mxu0
      %722 = vmatprep.mubr.bf16.mxu0 0
      %723 = vmatmul.mubr.bf16.gmra.mrb[0].mxu0 %v591
      %v724 = vpop.f32.mrb[0].mxu0
      %v725 = vadd.f32 0.0, %v724
      %v726 = vpop.f32.mrb[0].mxu0
      %v727 = vpop.f32.mrb[0].mxu0
      %v728 = vadd.f32 0.0, %v727
      %v729 = vpop.f32.mrb[0].mxu0
      %730 = vmatprep.mubr.bf16.mxu0 0
      %731 = vmatmul.mubr.bf16.gmra.mrb[0].mxu0 %v592
      %v732 = vpop.f32.mrb[0].mxu0
      %v733 = vadd.f32 0.0, %v732
      %v734 = vpop.f32.mrb[0].mxu0
      %v735 = vpop.f32.mrb[0].mxu0
      %v736 = vadd.f32 0.0, %v735
      %v737 = vpop.f32.mrb[0].mxu0
      %738 = vmatprep.mubr.bf16.mxu0 0
      %739 = vmatmul.mubr.bf16.gmra.mrb[0].mxu0 %v593
      %v740 = vpop.f32.mrb[0].mxu0
      %v741 = vadd.f32 0.0, %v740
      %v742 = vpop.f32.mrb[0].mxu0
      %v743 = vpop.f32.mrb[0].mxu0
      %v744 = vadd.f32 0.0, %v743
      %v745 = vpop.f32.mrb[0].mxu0
      %746 = vdwg.mxu0
      %v747 = vld [vmem:[%s451] sm:$0xff]
      %v748 = vld [vmem:[%s451 + $0x8] sm:$0xff]
      %v749 = vld [vmem:[%s451 + $0x10] sm:$0xff]
      %v750 = vld [vmem:[%s451 + $0x18] sm:$0xff]
      %v751 = vld [vmem:[%s451 + $0x20] sm:$0xff]
      %v752 = vld [vmem:[%s451 + $0x28] sm:$0xff]
      %v753 = vld [vmem:[%s451 + $0x30] sm:$0xff]
      %v754 = vld [vmem:[%s451 + $0x38] sm:$0xff]
      %v755 = vld [vmem:[%s451 + $0x40] sm:$0xff]
      %v756 = vld [vmem:[%s451 + $0x48] sm:$0xff]
      %v757 = vld [vmem:[%s451 + $0x50] sm:$0xff]
      %v758 = vld [vmem:[%s451 + $0x58] sm:$0xff]
      %v759 = vld [vmem:[%s451 + $0x60] sm:$0xff]
      %v760 = vld [vmem:[%s451 + $0x68] sm:$0xff]
      %v761 = vld [vmem:[%s451 + $0x70] sm:$0xff]
      %v762 = vld [vmem:[%s451 + $0x78] sm:$0xff]
      %764 = vset.pattern.permute.xlu0 0
      %765 = vperm.xlu0 %764, %v747
      %v766 = vpop.permute.xlu0 %765
      %769 = vset.pattern.permute.xlu0 0
      %770 = vperm.xlu0 %769, %v748
      %v771 = vpop.permute.xlu0 %770
      %774 = vset.pattern.permute.xlu0 0
      %775 = vperm.xlu0 %774, %v749
      %v776 = vpop.permute.xlu0 %775
      %779 = vset.pattern.permute.xlu0 0
      %780 = vperm.xlu0 %779, %v750
      %v781 = vpop.permute.xlu0 %780
      %784 = vset.pattern.permute.xlu0 0
      %785 = vperm.xlu0 %784, %v751
      %v786 = vpop.permute.xlu0 %785
      %789 = vset.pattern.permute.xlu0 0
      %790 = vperm.xlu0 %789, %v752
      %v791 = vpop.permute.xlu0 %790
      %794 = vset.pattern.permute.xlu0 0
      %795 = vperm.xlu0 %794, %v753
      %v796 = vpop.permute.xlu0 %795
      %799 = vset.pattern.permute.xlu0 0
      %800 = vperm.xlu0 %799, %v754
      %v801 = vpop.permute.xlu0 %800
      %804 = vset.pattern.permute.xlu0 0
      %805 = vperm.xlu0 %804, %v755
      %v806 = vpop.permute.xlu0 %805
      %809 = vset.pattern.permute.xlu0 0
      %810 = vperm.xlu0 %809, %v756
      %v811 = vpop.permute.xlu0 %810
      %814 = vset.pattern.permute.xlu0 0
      %815 = vperm.xlu0 %814, %v757
      %v816 = vpop.permute.xlu0 %815
      %819 = vset.pattern.permute.xlu0 0
      %820 = vperm.xlu0 %819, %v758
      %v821 = vpop.permute.xlu0 %820
      %824 = vset.pattern.permute.xlu0 0
      %825 = vperm.xlu0 %824, %v759
      %v826 = vpop.permute.xlu0 %825
      %829 = vset.pattern.permute.xlu0 0
      %830 = vperm.xlu0 %829, %v760
      %v831 = vpop.permute.xlu0 %830
      %834 = vset.pattern.permute.xlu0 0
      %835 = vperm.xlu0 %834, %v761
      %v836 = vpop.permute.xlu0 %835
      %839 = vset.pattern.permute.xlu0 0
      %840 = vperm.xlu0 %839, %v762
      %v841 = vpop.permute.xlu0 %840
      %v843 = vmul.f32 %v685, %v766
      %v844 = vmul.f32 %v688, %v771
      %v845 = vmul.f32 %v693, %v776
      %v846 = vmul.f32 %v696, %v781
      %v847 = vmul.f32 %v701, %v786
      %v848 = vmul.f32 %v704, %v791
      %v849 = vmul.f32 %v709, %v796
      %v850 = vmul.f32 %v712, %v801
      %v851 = vmul.f32 %v717, %v806
      %v852 = vmul.f32 %v720, %v811
      %v853 = vmul.f32 %v725, %v816
      %v854 = vmul.f32 %v728, %v821
      %v855 = vmul.f32 %v733, %v826
      %v856 = vmul.f32 %v736, %v831
      %v857 = vmul.f32 %v741, %v836
      %v858 = vmul.f32 %v744, %v841
      %v859 = vld [vmem:[#allocation2] sm:$0xff]
      %v860 = vld [vmem:[#allocation2 + $0x8] sm:$0xff]
      %v861 = vld [vmem:[#allocation2 + $0x10] sm:$0xff]
      %v862 = vld [vmem:[#allocation2 + $0x18] sm:$0xff]
      %v863 = vld [vmem:[#allocation2 + $0x20] sm:$0xff]
      %v864 = vld [vmem:[#allocation2 + $0x28] sm:$0xff]
      %v865 = vld [vmem:[#allocation2 + $0x30] sm:$0xff]
      %v866 = vld [vmem:[#allocation2 + $0x38] sm:$0xff]
      %v867 = vld [vmem:[#allocation2 + $0x40] sm:$0xff]
      %v868 = vld [vmem:[#allocation2 + $0x48] sm:$0xff]
      %v869 = vld [vmem:[#allocation2 + $0x50] sm:$0xff]
      %v870 = vld [vmem:[#allocation2 + $0x58] sm:$0xff]
      %v871 = vld [vmem:[#allocation2 + $0x60] sm:$0xff]
      %v872 = vld [vmem:[#allocation2 + $0x68] sm:$0xff]
      %v873 = vld [vmem:[#allocation2 + $0x70] sm:$0xff]
      %v874 = vld [vmem:[#allocation2 + $0x78] sm:$0xff]
      %v875 = vpack.c.bf16 %v844, %v843
      %v876 = vpack.c.bf16 %v846, %v845
      %v877 = vpack.c.bf16 %v848, %v847
      %v878 = vpack.c.bf16 %v850, %v849
      %v879 = vpack.c.bf16 %v852, %v851
      %v880 = vpack.c.bf16 %v854, %v853
      %v881 = vpack.c.bf16 %v856, %v855
      %v882 = vpack.c.bf16 %v858, %v857
      %v883 = vld [vmem:[%s476] sm:$0xf]
      %v884 = vld [vmem:[%s476 + $0x4] sm:$0xf]
      %v885 = vld [vmem:[%s476 + $0x8] sm:$0xf]
      %v886 = vld [vmem:[%s476 + $0xc] sm:$0xf]
      %v887 = vld [vmem:[%s476 + $0x10] sm:$0xf]
      %v888 = vld [vmem:[%s476 + $0x14] sm:$0xf]
      %v889 = vld [vmem:[%s476 + $0x18] sm:$0xf]
      %v890 = vld [vmem:[%s476 + $0x1c] sm:$0xf]
      %v891 = vld [vmem:[%s476 + $0x20] sm:$0xf]
      %v892 = vld [vmem:[%s476 + $0x24] sm:$0xf]
      %v893 = vld [vmem:[%s476 + $0x28] sm:$0xf]
      %v894 = vld [vmem:[%s476 + $0x2c] sm:$0xf]
      %v895 = vld [vmem:[%s476 + $0x30] sm:$0xf]
      %v896 = vld [vmem:[%s476 + $0x34] sm:$0xf]
      %v897 = vld [vmem:[%s476 + $0x38] sm:$0xf]
      %v898 = vld [vmem:[%s476 + $0x3c] sm:$0xf]
      %v915 = vunpack.c.l.b16 %v883
      %v916 = vunpack.c.l.b16 %v884
      %v917 = vunpack.c.l.b16 %v885
      %v918 = vunpack.c.l.b16 %v886
      %v919 = vunpack.c.l.b16 %v887
      %v920 = vunpack.c.l.b16 %v888
      %v921 = vunpack.c.l.b16 %v889
      %v922 = vunpack.c.l.b16 %v890
      %v923 = vunpack.c.l.b16 %v891
      %v924 = vunpack.c.l.b16 %v892
      %v925 = vunpack.c.l.b16 %v893
      %v926 = vunpack.c.l.b16 %v894
      %v927 = vunpack.c.l.b16 %v895
      %v928 = vunpack.c.l.b16 %v896
      %v929 = vunpack.c.l.b16 %v897
      %v930 = vunpack.c.l.b16 %v898
      %v931 = vpack.c.b16 %v916, %v915
      %v932 = vpack.c.b16 %v918, %v917
      %v933 = vpack.c.b16 %v920, %v919
      %v934 = vpack.c.b16 %v922, %v921
      %v935 = vpack.c.b16 %v924, %v923
      %v936 = vpack.c.b16 %v926, %v925
      %v937 = vpack.c.b16 %v928, %v927
      %v938 = vpack.c.b16 %v930, %v929
      %947 = vmatprep.subr.bf16.mxu0 0
      %948 = vmatpush1.bf16.msra.mxu0 %v931
      %949 = vmatprep.subr.bf16.mxu0 0
      %950 = vmatpush1.bf16.msra.mxu0 %v932
      %951 = vmatprep.subr.bf16.mxu0 0
      %952 = vmatpush1.bf16.msra.mxu0 %v933
      %953 = vmatprep.subr.bf16.mxu0 0
      %954 = vmatpush1.bf16.msra.mxu0 %v934
      %955 = vmatprep.subr.bf16.mxu0 0
      %956 = vmatpush1.bf16.msra.mxu0 %v935
      %957 = vmatprep.subr.bf16.mxu0 0
      %958 = vmatpush1.bf16.msra.mxu0 %v936
      %959 = vmatprep.subr.bf16.mxu0 0
      %960 = vmatpush1.bf16.msra.mxu0 %v937
      %961 = vmatprep.subr.bf16.mxu0 0
      %962 = vmatpush1.bf16.msra.mxu0 %v938
      %963 = vmatprep.subr.bf16.mxu0 0
      %964 = vmatpush1.bf16.msra.mxu0 0
      %965 = vmatprep.subr.bf16.mxu0 0
      %966 = vmatpush1.bf16.msra.mxu0 0
      %967 = vmatprep.subr.bf16.mxu0 0
      %968 = vmatpush1.bf16.msra.mxu0 0
      %969 = vmatprep.subr.bf16.mxu0 0
      %970 = vmatpush1.bf16.msra.mxu0 0
      %971 = vmatprep.subr.bf16.mxu0 0
      %972 = vmatpush1.bf16.msra.mxu0 0
      %973 = vmatprep.subr.bf16.mxu0 0
      %974 = vmatpush1.bf16.msra.mxu0 0
      %975 = vmatprep.subr.bf16.mxu0 0
      %976 = vmatpush1.bf16.msra.mxu0 0
      %977 = vmatprep.subr.bf16.mxu0 0
      %978 = vmatpush1.bf16.msra.mxu0 0
      %979 = vmatprep.mubr.bf16.mxu0 0
      %980 = vmatmul.mubr.bf16.gmra.mrb[0].mxu0 %v875
      %v981 = vpop.f32.mrb[0].mxu0
      %v982 = vadd.f32 0.0, %v981
      %v983 = vpop.f32.mrb[0].mxu0
      %v984 = vpop.f32.mrb[0].mxu0
      %v985 = vadd.f32 0.0, %v984
      %v986 = vpop.f32.mrb[0].mxu0
      %987 = vmatprep.mubr.bf16.mxu0 0
      %988 = vmatmul.mubr.bf16.gmra.mrb[0].mxu0 %v876
      %v989 = vpop.f32.mrb[0].mxu0
      %v990 = vadd.f32 0.0, %v989
      %v991 = vpop.f32.mrb[0].mxu0
      %v992 = vpop.f32.mrb[0].mxu0
      %v993 = vadd.f32 0.0, %v992
      %v994 = vpop.f32.mrb[0].mxu0
      %995 = vmatprep.mubr.bf16.mxu0 0
      %996 = vmatmul.mubr.bf16.gmra.mrb[0].mxu0 %v877
      %v997 = vpop.f32.mrb[0].mxu0
      %v998 = vadd.f32 0.0, %v997
      %v999 = vpop.f32.mrb[0].mxu0
      %v1000 = vpop.f32.mrb[0].mxu0
      %v1001 = vadd.f32 0.0, %v1000
      %v1002 = vpop.f32.mrb[0].mxu0
      %1003 = vmatprep.mubr.bf16.mxu0 0
      %1004 = vmatmul.mubr.bf16.gmra.mrb[0].mxu0 %v878
      %v1005 = vpop.f32.mrb[0].mxu0
      %v1006 = vadd.f32 0.0, %v1005
      %v1007 = vpop.f32.mrb[0].mxu0
      %v1008 = vpop.f32.mrb[0].mxu0
      %v1009 = vadd.f32 0.0, %v1008
      %v1010 = vpop.f32.mrb[0].mxu0
      %1011 = vmatprep.mubr.bf16.mxu0 0
      %1012 = vmatmul.mubr.bf16.gmra.mrb[0].mxu0 %v879
      %v1013 = vpop.f32.mrb[0].mxu0
      %v1014 = vadd.f32 0.0, %v1013
      %v1015 = vpop.f32.mrb[0].mxu0
      %v1016 = vpop.f32.mrb[0].mxu0
      %v1017 = vadd.f32 0.0, %v1016
      %v1018 = vpop.f32.mrb[0].mxu0
      %1019 = vmatprep.mubr.bf16.mxu0 0
      %1020 = vmatmul.mubr.bf16.gmra.mrb[0].mxu0 %v880
      %v1021 = vpop.f32.mrb[0].mxu0
      %v1022 = vadd.f32 0.0, %v1021
      %v1023 = vpop.f32.mrb[0].mxu0
      %v1024 = vpop.f32.mrb[0].mxu0
      %v1025 = vadd.f32 0.0, %v1024
      %v1026 = vpop.f32.mrb[0].mxu0
      %1027 = vmatprep.mubr.bf16.mxu0 0
      %1028 = vmatmul.mubr.bf16.gmra.mrb[0].mxu0 %v881
      %v1029 = vpop.f32.mrb[0].mxu0
      %v1030 = vadd.f32 0.0, %v1029
      %v1031 = vpop.f32.mrb[0].mxu0
      %v1032 = vpop.f32.mrb[0].mxu0
      %v1033 = vadd.f32 0.0, %v1032
      %v1034 = vpop.f32.mrb[0].mxu0
      %1035 = vmatprep.mubr.bf16.mxu0 0
      %1036 = vmatmul.mubr.bf16.gmra.mrb[0].mxu0 %v882
      %v1037 = vpop.f32.mrb[0].mxu0
      %v1038 = vadd.f32 0.0, %v1037
      %v1039 = vpop.f32.mrb[0].mxu0
      %v1040 = vpop.f32.mrb[0].mxu0
      %v1041 = vadd.f32 0.0, %v1040
      %v1042 = vpop.f32.mrb[0].mxu0
      %1043 = vdwg.mxu0
      %v1044 = vadd.f32 %v859, %v982
      %v1045 = vadd.f32 %v860, %v985
      %v1046 = vadd.f32 %v861, %v990
      %v1047 = vadd.f32 %v862, %v993
      %v1048 = vadd.f32 %v863, %v998
      %v1049 = vadd.f32 %v864, %v1001
      %v1050 = vadd.f32 %v865, %v1006
      %v1051 = vadd.f32 %v866, %v1009
      %v1052 = vadd.f32 %v867, %v1014
      %v1053 = vadd.f32 %v868, %v1017
      %v1054 = vadd.f32 %v869, %v1022
      %v1055 = vadd.f32 %v870, %v1025
      %v1056 = vadd.f32 %v871, %v1030
      %v1057 = vadd.f32 %v872, %v1033
      %v1058 = vadd.f32 %v873, %v1038
      %v1059 = vadd.f32 %v874, %v1041
      %1060 = vst [vmem:[#allocation2] sm:$0xff] %v1044
      %1061 = vst [vmem:[#allocation2 + $0x8] sm:$0xff] %v1045
      %1062 = vst [vmem:[#allocation2 + $0x10] sm:$0xff] %v1046
      %1063 = vst [vmem:[#allocation2 + $0x18] sm:$0xff] %v1047
      %1064 = vst [vmem:[#allocation2 + $0x20] sm:$0xff] %v1048
      %1065 = vst [vmem:[#allocation2 + $0x28] sm:$0xff] %v1049
      %1066 = vst [vmem:[#allocation2 + $0x30] sm:$0xff] %v1050
      %1067 = vst [vmem:[#allocation2 + $0x38] sm:$0xff] %v1051
      %1068 = vst [vmem:[#allocation2 + $0x40] sm:$0xff] %v1052
      %1069 = vst [vmem:[#allocation2 + $0x48] sm:$0xff] %v1053
      %1070 = vst [vmem:[#allocation2 + $0x50] sm:$0xff] %v1054
      %1071 = vst [vmem:[#allocation2 + $0x58] sm:$0xff] %v1055
      %1072 = vst [vmem:[#allocation2 + $0x60] sm:$0xff] %v1056
      %1073 = vst [vmem:[#allocation2 + $0x68] sm:$0xff] %v1057
      %1074 = vst [vmem:[#allocation2 + $0x70] sm:$0xff] %v1058
      %1075 = vst [vmem:[#allocation2 + $0x78] sm:$0xff] %v1059
      %v1076 = vld [vmem:[#allocation2] sm:$0xff]
      %v1077 = vld [vmem:[#allocation2 + $0x8] sm:$0xff]
      %v1078 = vld [vmem:[#allocation2 + $0x10] sm:$0xff]
      %v1079 = vld [vmem:[#allocation2 + $0x18] sm:$0xff]
      %v1080 = vld [vmem:[#allocation2 + $0x20] sm:$0xff]
      %v1081 = vld [vmem:[#allocation2 + $0x28] sm:$0xff]
      %v1082 = vld [vmem:[#allocation2 + $0x30] sm:$0xff]
      %v1083 = vld [vmem:[#allocation2 + $0x38] sm:$0xff]
      %v1084 = vld [vmem:[#allocation2 + $0x40] sm:$0xff]
      %v1085 = vld [vmem:[#allocation2 + $0x48] sm:$0xff]
      %v1086 = vld [vmem:[#allocation2 + $0x50] sm:$0xff]
      %v1087 = vld [vmem:[#allocation2 + $0x58] sm:$0xff]
      %v1088 = vld [vmem:[#allocation2 + $0x60] sm:$0xff]
      %v1089 = vld [vmem:[#allocation2 + $0x68] sm:$0xff]
      %v1090 = vld [vmem:[#allocation2 + $0x70] sm:$0xff]
      %v1091 = vld [vmem:[#allocation2 + $0x78] sm:$0xff]
      %v1092 = vld [vmem:[%s466] sm:$0xf]
      %v1093 = vld [vmem:[%s466 + $0x4] sm:$0xf]
      %v1094 = vld [vmem:[%s466 + $0x8] sm:$0xf]
      %v1095 = vld [vmem:[%s466 + $0xc] sm:$0xf]
      %v1096 = vld [vmem:[%s466 + $0x10] sm:$0xf]
      %v1097 = vld [vmem:[%s466 + $0x14] sm:$0xf]
      %v1098 = vld [vmem:[%s466 + $0x18] sm:$0xf]
      %v1099 = vld [vmem:[%s466 + $0x1c] sm:$0xf]
      %v1100 = vld [vmem:[%s466 + $0x20] sm:$0xf]
      %v1101 = vld [vmem:[%s466 + $0x24] sm:$0xf]
      %v1102 = vld [vmem:[%s466 + $0x28] sm:$0xf]
      %v1103 = vld [vmem:[%s466 + $0x2c] sm:$0xf]
      %v1104 = vld [vmem:[%s466 + $0x30] sm:$0xf]
      %v1105 = vld [vmem:[%s466 + $0x34] sm:$0xf]
      %v1106 = vld [vmem:[%s466 + $0x38] sm:$0xf]
      %v1107 = vld [vmem:[%s466 + $0x3c] sm:$0xf]
      %v1108 = vld [vmem:[%s485] sm:$0xf]
      %v1109 = vld [vmem:[%s485 + $0x4] sm:$0xf]
      %v1110 = vld [vmem:[%s485 + $0x8] sm:$0xf]
      %v1111 = vld [vmem:[%s485 + $0xc] sm:$0xf]
      %v1112 = vld [vmem:[%s485 + $0x10] sm:$0xf]
      %v1113 = vld [vmem:[%s485 + $0x14] sm:$0xf]
      %v1114 = vld [vmem:[%s485 + $0x18] sm:$0xf]
      %v1115 = vld [vmem:[%s485 + $0x1c] sm:$0xf]
      %v1116 = vld [vmem:[%s485 + $0x20] sm:$0xf]
      %v1117 = vld [vmem:[%s485 + $0x24] sm:$0xf]
      %v1118 = vld [vmem:[%s485 + $0x28] sm:$0xf]
      %v1119 = vld [vmem:[%s485 + $0x2c] sm:$0xf]
      %v1120 = vld [vmem:[%s485 + $0x30] sm:$0xf]
      %v1121 = vld [vmem:[%s485 + $0x34] sm:$0xf]
      %v1122 = vld [vmem:[%s485 + $0x38] sm:$0xf]
      %v1123 = vld [vmem:[%s485 + $0x3c] sm:$0xf]
      %v1140 = vunpack.c.l.b16 %v1092
      %v1141 = vunpack.c.l.b16 %v1093
      %v1142 = vunpack.c.l.b16 %v1094
      %v1143 = vunpack.c.l.b16 %v1095
      %v1144 = vunpack.c.l.b16 %v1096
      %v1145 = vunpack.c.l.b16 %v1097
      %v1146 = vunpack.c.l.b16 %v1098
      %v1147 = vunpack.c.l.b16 %v1099
      %v1148 = vunpack.c.l.b16 %v1100
      %v1149 = vunpack.c.l.b16 %v1101
      %v1150 = vunpack.c.l.b16 %v1102
      %v1151 = vunpack.c.l.b16 %v1103
      %v1152 = vunpack.c.l.b16 %v1104
      %v1153 = vunpack.c.l.b16 %v1105
      %v1154 = vunpack.c.l.b16 %v1106
      %v1155 = vunpack.c.l.b16 %v1107
      %v1156 = vpack.c.b16 %v1141, %v1140
      %v1157 = vpack.c.b16 %v1143, %v1142
      %v1158 = vpack.c.b16 %v1145, %v1144
      %v1159 = vpack.c.b16 %v1147, %v1146
      %v1160 = vpack.c.b16 %v1149, %v1148
      %v1161 = vpack.c.b16 %v1151, %v1150
      %v1162 = vpack.c.b16 %v1153, %v1152
      %v1163 = vpack.c.b16 %v1155, %v1154
      %v1188 = vunpack.c.l.b16 %v1108
      %v1189 = vunpack.c.l.b16 %v1109
      %v1190 = vunpack.c.l.b16 %v1110
      %v1191 = vunpack.c.l.b16 %v1111
      %v1192 = vunpack.c.l.b16 %v1112
      %v1193 = vunpack.c.l.b16 %v1113
      %v1194 = vunpack.c.l.b16 %v1114
      %v1195 = vunpack.c.l.b16 %v1115
      %v1196 = vunpack.c.l.b16 %v1116
      %v1197 = vunpack.c.l.b16 %v1117
      %v1198 = vunpack.c.l.b16 %v1118
      %v1199 = vunpack.c.l.b16 %v1119
      %v1200 = vunpack.c.l.b16 %v1120
      %v1201 = vunpack.c.l.b16 %v1121
      %v1202 = vunpack.c.l.b16 %v1122
      %v1203 = vunpack.c.l.b16 %v1123
      %v1204 = vpack.c.b16 %v1189, %v1188
      %v1205 = vpack.c.b16 %v1191, %v1190
      %v1206 = vpack.c.b16 %v1193, %v1192
      %v1207 = vpack.c.b16 %v1195, %v1194
      %v1208 = vpack.c.b16 %v1197, %v1196
      %v1209 = vpack.c.b16 %v1199, %v1198
      %v1210 = vpack.c.b16 %v1201, %v1200
      %v1211 = vpack.c.b16 %v1203, %v1202
      %1220 = vmatprep.subr.bf16.mxu0 0
      %1221 = vmatpush1.bf16.msra.mxu0 %v1204
      %1222 = vmatprep.subr.bf16.mxu0 0
      %1223 = vmatpush1.bf16.msra.mxu0 %v1205
      %1224 = vmatprep.subr.bf16.mxu0 0
      %1225 = vmatpush1.bf16.msra.mxu0 %v1206
      %1226 = vmatprep.subr.bf16.mxu0 0
      %1227 = vmatpush1.bf16.msra.mxu0 %v1207
      %1228 = vmatprep.subr.bf16.mxu0 0
      %1229 = vmatpush1.bf16.msra.mxu0 %v1208
      %1230 = vmatprep.subr.bf16.mxu0 0
      %1231 = vmatpush1.bf16.msra.mxu0 %v1209
      %1232 = vmatprep.subr.bf16.mxu0 0
      %1233 = vmatpush1.bf16.msra.mxu0 %v1210
      %1234 = vmatprep.subr.bf16.mxu0 0
      %1235 = vmatpush1.bf16.msra.mxu0 %v1211
      %1236 = vmatprep.subr.bf16.mxu0 0
      %1237 = vmatpush1.bf16.msra.mxu0 0
      %1238 = vmatprep.subr.bf16.mxu0 0
      %1239 = vmatpush1.bf16.msra.mxu0 0
      %1240 = vmatprep.subr.bf16.mxu0 0
      %1241 = vmatpush1.bf16.msra.mxu0 0
      %1242 = vmatprep.subr.bf16.mxu0 0
      %1243 = vmatpush1.bf16.msra.mxu0 0
      %1244 = vmatprep.subr.bf16.mxu0 0
      %1245 = vmatpush1.bf16.msra.mxu0 0
      %1246 = vmatprep.subr.bf16.mxu0 0
      %1247 = vmatpush1.bf16.msra.mxu0 0
      %1248 = vmatprep.subr.bf16.mxu0 0
      %1249 = vmatpush1.bf16.msra.mxu0 0
      %1250 = vmatprep.subr.bf16.mxu0 0
      %1251 = vmatpush1.bf16.msra.mxu0 0
      %1252 = vmatprep.mubr.bf16.mxu0 0
      %1253 = vmatmul.mubr.bf16.gmra.mrb[0].mxu0 %v1156
      %v1254 = vpop.f32.mrb[0].mxu0
      %v1255 = vadd.f32 0.0, %v1254
      %v1256 = vpop.f32.mrb[0].mxu0
      %v1257 = vpop.f32.mrb[0].mxu0
      %v1258 = vadd.f32 0.0, %v1257
      %v1259 = vpop.f32.mrb[0].mxu0
      %1260 = vmatprep.mubr.bf16.mxu0 0
      %1261 = vmatmul.mubr.bf16.gmra.mrb[0].mxu0 %v1157
      %v1262 = vpop.f32.mrb[0].mxu0
      %v1263 = vadd.f32 0.0, %v1262
      %v1264 = vpop.f32.mrb[0].mxu0
      %v1265 = vpop.f32.mrb[0].mxu0
      %v1266 = vadd.f32 0.0, %v1265
      %v1267 = vpop.f32.mrb[0].mxu0
      %1268 = vmatprep.mubr.bf16.mxu0 0
      %1269 = vmatmul.mubr.bf16.gmra.mrb[0].mxu0 %v1158
      %v1270 = vpop.f32.mrb[0].mxu0
      %v1271 = vadd.f32 0.0, %v1270
      %v1272 = vpop.f32.mrb[0].mxu0
      %v1273 = vpop.f32.mrb[0].mxu0
      %v1274 = vadd.f32 0.0, %v1273
      %v1275 = vpop.f32.mrb[0].mxu0
      %1276 = vmatprep.mubr.bf16.mxu0 0
      %1277 = vmatmul.mubr.bf16.gmra.mrb[0].mxu0 %v1159
      %v1278 = vpop.f32.mrb[0].mxu0
      %v1279 = vadd.f32 0.0, %v1278
      %v1280 = vpop.f32.mrb[0].mxu0
      %v1281 = vpop.f32.mrb[0].mxu0
      %v1282 = vadd.f32 0.0, %v1281
      %v1283 = vpop.f32.mrb[0].mxu0
      %1284 = vmatprep.mubr.bf16.mxu0 0
      %1285 = vmatmul.mubr.bf16.gmra.mrb[0].mxu0 %v1160
      %v1286 = vpop.f32.mrb[0].mxu0
      %v1287 = vadd.f32 0.0, %v1286
      %v1288 = vpop.f32.mrb[0].mxu0
      %v1289 = vpop.f32.mrb[0].mxu0
      %v1290 = vadd.f32 0.0, %v1289
      %v1291 = vpop.f32.mrb[0].mxu0
      %1292 = vmatprep.mubr.bf16.mxu0 0
      %1293 = vmatmul.mubr.bf16.gmra.mrb[0].mxu0 %v1161
      %v1294 = vpop.f32.mrb[0].mxu0
      %v1295 = vadd.f32 0.0, %v1294
      %v1296 = vpop.f32.mrb[0].mxu0
      %v1297 = vpop.f32.mrb[0].mxu0
      %v1298 = vadd.f32 0.0, %v1297
      %v1299 = vpop.f32.mrb[0].mxu0
      %1300 = vmatprep.mubr.bf16.mxu0 0
      %1301 = vmatmul.mubr.bf16.gmra.mrb[0].mxu0 %v1162
      %v1302 = vpop.f32.mrb[0].mxu0
      %v1303 = vadd.f32 0.0, %v1302
      %v1304 = vpop.f32.mrb[0].mxu0
      %v1305 = vpop.f32.mrb[0].mxu0
      %v1306 = vadd.f32 0.0, %v1305
      %v1307 = vpop.f32.mrb[0].mxu0
      %1308 = vmatprep.mubr.bf16.mxu0 0
      %1309 = vmatmul.mubr.bf16.gmra.mrb[0].mxu0 %v1163
      %v1310 = vpop.f32.mrb[0].mxu0
      %v1311 = vadd.f32 0.0, %v1310
      %v1312 = vpop.f32.mrb[0].mxu0
      %v1313 = vpop.f32.mrb[0].mxu0
      %v1314 = vadd.f32 0.0, %v1313
      %v1315 = vpop.f32.mrb[0].mxu0
      %1316 = vdwg.mxu0
      %v1317 = vadd.f32 %v1076, %v1255
      %v1318 = vadd.f32 %v1077, %v1258
      %v1319 = vadd.f32 %v1078, %v1263
      %v1320 = vadd.f32 %v1079, %v1266
      %v1321 = vadd.f32 %v1080, %v1271
      %v1322 = vadd.f32 %v1081, %v1274
      %v1323 = vadd.f32 %v1082, %v1279
      %v1324 = vadd.f32 %v1083, %v1282
      %v1325 = vadd.f32 %v1084, %v1287
      %v1326 = vadd.f32 %v1085, %v1290
      %v1327 = vadd.f32 %v1086, %v1295
      %v1328 = vadd.f32 %v1087, %v1298
      %v1329 = vadd.f32 %v1088, %v1303
      %v1330 = vadd.f32 %v1089, %v1306
      %v1331 = vadd.f32 %v1090, %v1311
      %v1332 = vadd.f32 %v1091, %v1314
      %1333 = vst [vmem:[#allocation2] sm:$0xff] %v1317
      %1334 = vst [vmem:[#allocation2 + $0x8] sm:$0xff] %v1318
      %1335 = vst [vmem:[#allocation2 + $0x10] sm:$0xff] %v1319
      %1336 = vst [vmem:[#allocation2 + $0x18] sm:$0xff] %v1320
      %1337 = vst [vmem:[#allocation2 + $0x20] sm:$0xff] %v1321
      %1338 = vst [vmem:[#allocation2 + $0x28] sm:$0xff] %v1322
      %1339 = vst [vmem:[#allocation2 + $0x30] sm:$0xff] %v1323
      %1340 = vst [vmem:[#allocation2 + $0x38] sm:$0xff] %v1324
      %1341 = vst [vmem:[#allocation2 + $0x40] sm:$0xff] %v1325
      %1342 = vst [vmem:[#allocation2 + $0x48] sm:$0xff] %v1326
      %1343 = vst [vmem:[#allocation2 + $0x50] sm:$0xff] %v1327
      %1344 = vst [vmem:[#allocation2 + $0x58] sm:$0xff] %v1328
      %1345 = vst [vmem:[#allocation2 + $0x60] sm:$0xff] %v1329
      %1346 = vst [vmem:[#allocation2 + $0x68] sm:$0xff] %v1330
      %1347 = vst [vmem:[#allocation2 + $0x70] sm:$0xff] %v1331
      %1348 = vst [vmem:[#allocation2 + $0x78] sm:$0xff] %v1332
      // Predicated region
      $region53: #{forward.3} parent=47 // pred_check
        %p1349 = pneg %p495
      $region54: #{forward.3} parent=47 // pred_check_branch
        %1351 = sbr.rel (%p1349) target = $region56
      $region55: #{forward.3} parent=47 // pred_region
        %v1352 = vld [vmem:[#allocation2] sm:$0xff]
        %v1353 = vld [vmem:[#allocation2 + $0x8] sm:$0xff]
        %v1354 = vld [vmem:[#allocation2 + $0x10] sm:$0xff]
        %v1355 = vld [vmem:[#allocation2 + $0x18] sm:$0xff]
        %v1356 = vld [vmem:[#allocation2 + $0x20] sm:$0xff]
        %v1357 = vld [vmem:[#allocation2 + $0x28] sm:$0xff]
        %v1358 = vld [vmem:[#allocation2 + $0x30] sm:$0xff]
        %v1359 = vld [vmem:[#allocation2 + $0x38] sm:$0xff]
        %v1360 = vld [vmem:[#allocation2 + $0x40] sm:$0xff]
        %v1361 = vld [vmem:[#allocation2 + $0x48] sm:$0xff]
        %v1362 = vld [vmem:[#allocation2 + $0x50] sm:$0xff]
        %v1363 = vld [vmem:[#allocation2 + $0x58] sm:$0xff]
        %v1364 = vld [vmem:[#allocation2 + $0x60] sm:$0xff]
        %v1365 = vld [vmem:[#allocation2 + $0x68] sm:$0xff]
        %v1366 = vld [vmem:[#allocation2 + $0x70] sm:$0xff]
        %v1367 = vld [vmem:[#allocation2 + $0x78] sm:$0xff]
        %1368 = vst [vmem:[%s493] sm:$0xff] %v1352
        %1369 = vst [vmem:[%s493 + $0x8] sm:$0xff] %v1353
        %1370 = vst [vmem:[%s493 + $0x10] sm:$0xff] %v1354
        %1371 = vst [vmem:[%s493 + $0x18] sm:$0xff] %v1355
        %1372 = vst [vmem:[%s493 + $0x20] sm:$0xff] %v1356
        %1373 = vst [vmem:[%s493 + $0x28] sm:$0xff] %v1357
        %1374 = vst [vmem:[%s493 + $0x30] sm:$0xff] %v1358
        %1375 = vst [vmem:[%s493 + $0x38] sm:$0xff] %v1359
        %1376 = vst [vmem:[%s493 + $0x40] sm:$0xff] %v1360
        %1377 = vst [vmem:[%s493 + $0x48] sm:$0xff] %v1361
        %1378 = vst [vmem:[%s493 + $0x50] sm:$0xff] %v1362
        %1379 = vst [vmem:[%s493 + $0x58] sm:$0xff] %v1363
        %1380 = vst [vmem:[%s493 + $0x60] sm:$0xff] %v1364
        %1381 = vst [vmem:[%s493 + $0x68] sm:$0xff] %v1365
        %1382 = vst [vmem:[%s493 + $0x70] sm:$0xff] %v1366
        %1383 = vst [vmem:[%s493 + $0x78] sm:$0xff] %v1367
      $region56: #{forward.3} parent=47 // pred_fallthru
        _
      %p1384 = scmp.lt.s32.totalorder %s34, 1
      %s1385 = scalar_select %p1384, %s34, 1
      %s1386 = smul.addr %s1385, 16
      %s1387 = smul.addr %s1386, 8
      %s1388 = scalar_lea.vmem %s9, %s1387
      // Predicated region
      $region57: #{forward.3} parent=47 // pred_check
        %p1389 = pneg %p256
      $region58: #{forward.3} parent=47 // pred_check_branch
        %1391 = sbr.rel (%p1389) target = $region60
      $region59: #{forward.3} parent=47 // pred_region
        _
      $region60: #{forward.3} parent=47 // pred_fallthru
        _
    $region48: #{forward.3} parent=5 // pred_fallthru
      _
    %p1392 = scmp.le.s32.totalorder 2, %s25
    // Predicated region
    $region61: #{forward.3} parent=5 // pred_check
      %p1393 = pneg %p1392
    $region62: #{forward.3} parent=5 // pred_check_branch
      %1395 = sbr.rel (%p1393) target = $region64
    $region63: #{forward.3} parent=5 // pred_region
      %s1396 = ssub.s32 %s25, 2
      // Predicated region
      $region65: #{forward.3} parent=63 // pred_check
        %p1397 = pneg %p262
      $region66: #{forward.3} parent=63 // pred_check_branch
        %1399 = sbr.rel (%p1397) target = $region68
      $region67: #{forward.3} parent=63 // pred_region
        %p1400 = scmp.lt.s32.totalorder %s36, 1
        %s1401 = scalar_select %p1400, %s36, 1
        %s1402 = smul.addr %s1401, 16
        %s1403 = smul.addr %s1402, 8
        %s1404 = scalar_lea.vmem %s9, %s1403
      $region68: #{forward.3} parent=63 // pred_fallthru
        _
    $region64: #{forward.3} parent=5 // pred_fallthru
      _
  $region6: #{forward.3} parent=0 // loop_footer
    %s29 = sadd.s32 1, %s25
  $region7: #{forward.3} parent=0 // loop_footer_branch
    %24 = sbr.rel target = $region3
  $region8: #{forward.3} parent=0 // loop_exit
    _

// kernel: forward.2
$region0: #{forward.2}
  #allocation0 [shape = 'u32[]', space=smem, size = 0x4, offset = 0x4, fixed_abs, tag = 'smem constant byte address 0x4 - core index']
  #allocation1 [shape = 'u32[144,128]{1,0:T(1,128)}', space=vmem, size = 0x12000, scoped, tag = 'internal scratch']
  #allocation2 [shape = 'f32[128,128]{1,0:T(8,128)}', space=vmem, size = 0x10000, scoped, tag = 'scratch operand']
  #allocation3 [shape = 's32[1]{0}', space=sflag, size = 0x4, scoped, tag = 'scoped memory for forward.2']
  #allocation4 [shape = 'u8[512]{0}', space=smem, size = 0x200, scoped, tag = 'prefetched SMEM operand 0']
  #allocation5 [shape = 'u8[512]{0}', space=smem, size = 0x200, scoped, tag = 'prefetched SMEM operand 1']
  %s0 = inlined_call_operand.vmem [shape: s32[2], index: 0, kind: input, shape index: {}]
  %s1 = inlined_call_operand.vmem [shape: s32[2], index: 1, kind: input, shape index: {}]
  %s2 = inlined_call_operand.vmem [shape: bf16[2,1,128,128], index: 2, kind: input, shape index: {}]
  %s3 = inlined_call_operand.vmem [shape: f32[2,1,128,1], index: 3, kind: input, shape index: {}]
  %s4 = inlined_call_operand.vmem [shape: bf16[2,128,128], index: 4, kind: input, shape index: {}, may-alias: {4,5}]
  %s5 = inlined_call_operand.vmem [shape: bf16[2,128,128], index: 5, kind: input, shape index: {}, may-alias: {4,5}]
  %s6 = inlined_call_operand.vmem [shape: bf16[2,1,128,128], index: 6, kind: input, shape index: {}]
  %s7 = inlined_call_operand.vmem [shape: bf16[2,1,128,128], index: 7, kind: input, shape index: {}]
  %s8 = inlined_call_operand.vmem [shape: f32[2,1,128], index: 8, kind: input, shape index: {}]
  %s9 = inlined_call_operand.vmem [shape: bf16[2,128,128], index: 9, kind: output, shape index: {}]
  %s10 = sld [smem:[#allocation0]]
  $region69: #{forward.2} parent=0
    _
  %s12 = ssub.s32 1, %s10
  %s13 = scalar_select 0, %s12, %s10
  %s14 = sshll.u32 %s0, 4
  %s15 = int_to_ptr.vmem [resolvable:$true] %s14
  %17 = dma.vmem_to_smem %s15, 16, [#allocation4], [#allocation3]
  %s18 = sshll.u32 %s1, 4
  %s19 = int_to_ptr.vmem [resolvable:$true] %s18
  %21 = dma.vmem_to_smem %s19, 16, [#allocation5], [#allocation3]
  %22 = dma.done [#allocation3], 32
  %23 = sfence
  loop: start=0, step=1, limit=4
  $region2: #{forward.2} parent=0 // loop_pre_header
    _
  $region3: #{forward.2} parent=0 // loop_header
    %s25 = sphi 0, %s29
    %p26 = scmp.ge.s32.totalorder %s25, 4
    %s32 = sphi 0, %s44
    %s33 = sphi 0, %s40
    %s34 = sphi 0, %s32
    %s35 = sphi 0, %s33
    %s36 = sphi 0, %s34
    %s37 = sphi 0, %s35
    %s49 = sphi 0, %s51
    %s52 = sphi 0, %s49
    %s53 = sphi 0, %s52
    %s69 = sphi 0, %s53
    %s77 = sphi 0, %s79
    %s80 = sphi 0, %s77
    %s81 = sphi 0, %s80
    %s97 = sphi 0, %s81
    %s107 = sphi 0, %s109
    %s110 = sphi 0, %s107
    %s111 = sphi 0, %s110
    %s127 = sphi 0, %s111
    %s135 = sphi 0, %s137
    %s138 = sphi 0, %s135
    %s139 = sphi 0, %s138
    %s155 = sphi 0, %s139
    %s163 = sphi 0, %s165
    %s166 = sphi 0, %s163
    %s167 = sphi 0, %s166
    %s183 = sphi 0, %s167
    %s191 = sphi 0, %s193
    %s194 = sphi 0, %s191
    %s195 = sphi 0, %s194
    %s211 = sphi 0, %s195
    %s217 = sphi 0, %s219
    %s220 = sphi 0, %s217
    %s221 = sphi 0, %s220
    %s237 = sphi 0, %s221
    %s243 = sphi 0, %s245
    %s246 = sphi 0, %s243
    %s247 = sphi 0, %s246
    %s263 = sphi 0, %s247
  $region4: #{forward.2} parent=0 // loop_header_branch
    %28 = sbr.rel (%p26) target = $region8
  $region5: #{forward.2} parent=0 // loop_body
    %s30 = ssub.s32 %s25, 1
    %s31 = ssub.s32 %s25, 2
    %s38 = sadd.s32 1, %s33
    %p39 = scmp.ge.s32.totalorder %s38, 1
    %s40 = scalar_select %p39, 0, %s38
    %s41 = sadd.s32 1, %s32
    %s42 = scalar_select %p39, %s41, %s32
    %p43 = scmp.ge.s32.totalorder %s42, 2
    %s44 = scalar_select %p43, 0, %s42
    %s45 = ssub.s32 %s32, %s44
    %s46 = ssub.s32 %s33, %s40
    %s47 = sor.u32 %s45, %s46
    %p48 = scmp.eq.s32.totalorder %s47, 0
    %s50 = sadd.s32 %s49, 1
    %s51 = scalar_select %p48, %s49, %s50
    %p54 = pneg %p48
    %p55 = scmp.eq.s32.totalorder %s25, 1
    %p56 = por %p54, %p55
    %p57 = scmp.ne.s32.totalorder %s49, %s52
    %p58 = scmp.eq.s32.totalorder %s25, 0
    %p59 = por %p57, %p58
    %p60 = scmp.ne.s32.totalorder %s49, %s52
    %p61 = scmp.eq.s32.totalorder %s30, 1
    %p62 = por %p60, %p61
    %p63 = scmp.ne.s32.totalorder %s52, %s53
    %p64 = scmp.eq.s32.totalorder %s30, 0
    %p65 = por %p63, %p64
    %p66 = scmp.ne.s32.totalorder %s52, %s53
    %p67 = scmp.eq.s32.totalorder %s31, 1
    %p68 = por %p66, %p67
    %p70 = scmp.ne.s32.totalorder %s53, %s69
    %p71 = scmp.eq.s32.totalorder %s31, 0
    %p72 = por %p70, %p71
    %s73 = ssub.s32 %s32, %s44
    %s74 = ssub.s32 %s33, %s40
    %s75 = sor.u32 %s73, %s74
    %p76 = scmp.eq.s32.totalorder %s75, 0
    %s78 = sadd.s32 %s77, 1
    %s79 = scalar_select %p76, %s77, %s78
    %p82 = pneg %p76
    %p83 = scmp.eq.s32.totalorder %s25, 1
    %p84 = por %p82, %p83
    %p85 = scmp.ne.s32.totalorder %s77, %s80
    %p86 = scmp.eq.s32.totalorder %s25, 0
    %p87 = por %p85, %p86
    %p88 = scmp.ne.s32.totalorder %s77, %s80
    %p89 = scmp.eq.s32.totalorder %s30, 1
    %p90 = por %p88, %p89
    %p91 = scmp.ne.s32.totalorder %s80, %s81
    %p92 = scmp.eq.s32.totalorder %s30, 0
    %p93 = por %p91, %p92
    %p94 = scmp.ne.s32.totalorder %s80, %s81
    %p95 = scmp.eq.s32.totalorder %s31, 1
    %p96 = por %p94, %p95
    %p98 = scmp.ne.s32.totalorder %s81, %s97
    %p99 = scmp.eq.s32.totalorder %s31, 0
    %p100 = por %p98, %p99
    %s101 = sadd.s32 %s32, %s33
    %s102 = sld [smem:[#allocation4 + %s101]]
    %s103 = sadd.s32 %s44, %s40
    %s104 = sld [smem:[#allocation4 + %s103]]
    %s105 = ssub.s32 %s102, %s104
    %p106 = scmp.eq.s32.totalorder %s105, 0
    %s108 = sadd.s32 %s107, 1
    %s109 = scalar_select %p106, %s107, %s108
    %p112 = pneg %p106
    %p113 = scmp.eq.s32.totalorder %s25, 1
    %p114 = por %p112, %p113
    %p115 = scmp.ne.s32.totalorder %s107, %s110
    %p116 = scmp.eq.s32.totalorder %s25, 0
    %p117 = por %p115, %p116
    %p118 = scmp.ne.s32.totalorder %s107, %s110
    %p119 = scmp.eq.s32.totalorder %s30, 1
    %p120 = por %p118, %p119
    %p121 = scmp.ne.s32.totalorder %s110, %s111
    %p122 = scmp.eq.s32.totalorder %s30, 0
    %p123 = por %p121, %p122
    %p124 = scmp.ne.s32.totalorder %s110, %s111
    %p125 = scmp.eq.s32.totalorder %s31, 1
    %p126 = por %p124, %p125
    %p128 = scmp.ne.s32.totalorder %s111, %s127
    %p129 = scmp.eq.s32.totalorder %s31, 0
    %p130 = por %p128, %p129
    %s131 = sld [smem:[#allocation5 + %s32]]
    %s132 = sld [smem:[#allocation5 + %s44]]
    %s133 = ssub.s32 %s131, %s132
    %p134 = scmp.eq.s32.totalorder %s133, 0
    %s136 = sadd.s32 %s135, 1
    %s137 = scalar_select %p134, %s135, %s136
    %p140 = pneg %p134
    %p141 = scmp.eq.s32.totalorder %s25, 1
    %p142 = por %p140, %p141
    %p143 = scmp.ne.s32.totalorder %s135, %s138
    %p144 = scmp.eq.s32.totalorder %s25, 0
    %p145 = por %p143, %p144
    %p146 = scmp.ne.s32.totalorder %s135, %s138
    %p147 = scmp.eq.s32.totalorder %s30, 1
    %p148 = por %p146, %p147
    %p149 = scmp.ne.s32.totalorder %s138, %s139
    %p150 = scmp.eq.s32.totalorder %s30, 0
    %p151 = por %p149, %p150
    %p152 = scmp.ne.s32.totalorder %s138, %s139
    %p153 = scmp.eq.s32.totalorder %s31, 1
    %p154 = por %p152, %p153
    %p156 = scmp.ne.s32.totalorder %s139, %s155
    %p157 = scmp.eq.s32.totalorder %s31, 0
    %p158 = por %p156, %p157
    %s159 = ssub.s32 %s32, %s44
    %s160 = ssub.s32 %s33, %s40
    %s161 = sor.u32 %s159, %s160
    %p162 = scmp.eq.s32.totalorder %s161, 0
    %s164 = sadd.s32 %s163, 1
    %s165 = scalar_select %p162, %s163, %s164
    %p168 = pneg %p162
    %p169 = scmp.eq.s32.totalorder %s25, 1
    %p170 = por %p168, %p169
    %p171 = scmp.ne.s32.totalorder %s163, %s166
    %p172 = scmp.eq.s32.totalorder %s25, 0
    %p173 = por %p171, %p172
    %p174 = scmp.ne.s32.totalorder %s163, %s166
    %p175 = scmp.eq.s32.totalorder %s30, 1
    %p176 = por %p174, %p175
    %p177 = scmp.ne.s32.totalorder %s166, %s167
    %p178 = scmp.eq.s32.totalorder %s30, 0
    %p179 = por %p177, %p178
    %p180 = scmp.ne.s32.totalorder %s166, %s167
    %p181 = scmp.eq.s32.totalorder %s31, 1
    %p182 = por %p180, %p181
    %p184 = scmp.ne.s32.totalorder %s167, %s183
    %p185 = scmp.eq.s32.totalorder %s31, 0
    %p186 = por %p184, %p185
    %s187 = ssub.s32 %s32, %s44
    %s188 = ssub.s32 %s33, %s40
    %s189 = sor.u32 %s187, %s188
    %p190 = scmp.eq.s32.totalorder %s189, 0
    %s192 = sadd.s32 %s191, 1
    %s193 = scalar_select %p190, %s191, %s192
    %p196 = pneg %p190
    %p197 = scmp.eq.s32.totalorder %s25, 1
    %p198 = por %p196, %p197
    %p199 = scmp.ne.s32.totalorder %s191, %s194
    %p200 = scmp.eq.s32.totalorder %s25, 0
    %p201 = por %p199, %p200
    %p202 = scmp.ne.s32.totalorder %s191, %s194
    %p203 = scmp.eq.s32.totalorder %s30, 1
    %p204 = por %p202, %p203
    %p205 = scmp.ne.s32.totalorder %s194, %s195
    %p206 = scmp.eq.s32.totalorder %s30, 0
    %p207 = por %p205, %p206
    %p208 = scmp.ne.s32.totalorder %s194, %s195
    %p209 = scmp.eq.s32.totalorder %s31, 1
    %p210 = por %p208, %p209
    %p212 = scmp.ne.s32.totalorder %s195, %s211
    %p213 = scmp.eq.s32.totalorder %s31, 0
    %p214 = por %p212, %p213
    %s215 = ssub.s32 %s32, %s44
    %p216 = scmp.eq.s32.totalorder %s215, 0
    %s218 = sadd.s32 %s217, 1
    %s219 = scalar_select %p216, %s217, %s218
    %p222 = pneg %p216
    %p223 = scmp.eq.s32.totalorder %s25, 1
    %p224 = por %p222, %p223
    %p225 = scmp.ne.s32.totalorder %s217, %s220
    %p226 = scmp.eq.s32.totalorder %s25, 0
    %p227 = por %p225, %p226
    %p228 = scmp.ne.s32.totalorder %s217, %s220
    %p229 = scmp.eq.s32.totalorder %s30, 1
    %p230 = por %p228, %p229
    %p231 = scmp.ne.s32.totalorder %s220, %s221
    %p232 = scmp.eq.s32.totalorder %s30, 0
    %p233 = por %p231, %p232
    %p234 = scmp.ne.s32.totalorder %s220, %s221
    %p235 = scmp.eq.s32.totalorder %s31, 1
    %p236 = por %p234, %p235
    %p238 = scmp.ne.s32.totalorder %s221, %s237
    %p239 = scmp.eq.s32.totalorder %s31, 0
    %p240 = por %p238, %p239
    %s241 = ssub.s32 %s32, %s44
    %p242 = scmp.eq.s32.totalorder %s241, 0
    %s244 = sadd.s32 %s243, 1
    %s245 = scalar_select %p242, %s243, %s244
    %p248 = pneg %p242
    %p249 = scmp.eq.s32.totalorder %s25, 1
    %p250 = por %p248, %p249
    %p251 = scmp.ne.s32.totalorder %s243, %s246
    %p252 = scmp.eq.s32.totalorder %s25, 0
    %p253 = por %p251, %p252
    %p254 = scmp.ne.s32.totalorder %s243, %s246
    %p255 = scmp.eq.s32.totalorder %s30, 1
    %p256 = por %p254, %p255
    %p257 = scmp.ne.s32.totalorder %s246, %s247
    %p258 = scmp.eq.s32.totalorder %s30, 0
    %p259 = por %p257, %p258
    %p260 = scmp.ne.s32.totalorder %s246, %s247
    %p261 = scmp.eq.s32.totalorder %s31, 1
    %p262 = por %p260, %p261
    %p264 = scmp.ne.s32.totalorder %s247, %s263
    %p265 = scmp.eq.s32.totalorder %s31, 0
    %p266 = por %p264, %p265
    %p267 = scmp.le.s32.totalorder 1, %s25
    %p268 = scmp.lt.s32.totalorder %s25, 3
    %p269 = pnand %p267, %p268
    %p270 = pneg %p269
    // Predicated region
    $region9: #{forward.2} parent=5 // pred_check
      _
    $region10: #{forward.2} parent=5 // pred_check_branch
      %272 = sbr.rel (%p269) target = $region12
    $region11: #{forward.2} parent=5 // pred_region
      %s273 = ssub.s32 %s25, 1
    $region12: #{forward.2} parent=5 // pred_fallthru
      _
    %p274 = scmp.lt.s32.totalorder %s25, 2
    // Predicated region
    $region13: #{forward.2} parent=5 // pred_check
      %p275 = pneg %p274
    $region14: #{forward.2} parent=5 // pred_check_branch
      %277 = sbr.rel (%p275) target = $region16
    $region15: #{forward.2} parent=5 // pred_region
      // Predicated region
      $region17: #{forward.2} parent=15 // pred_check
        %p278 = pneg %p59
      $region18: #{forward.2} parent=15 // pred_check_branch
        %280 = sbr.rel (%p278) target = $region20
      $region19: #{forward.2} parent=15 // pred_region
        %p281 = scmp.lt.s32.totalorder %s32, 1
        %s282 = scalar_select %p281, %s32, 1
        %p283 = scmp.lt.s32.totalorder %s33, 0
        %s284 = scalar_select %p283, %s33, 0
        %s285 = smul.addr %s284, 16
        %s286 = smul.addr %s282, 16
        %s287 = sadd.s32 %s285, %s286
        %s288 = smul.addr %s287, 4
        %s289 = scalar_lea.vmem %s2, %s288
      $region20: #{forward.2} parent=15 // pred_fallthru
        _
      // Predicated region
      $region21: #{forward.2} parent=15 // pred_check
        %p290 = pneg %p87
      $region22: #{forward.2} parent=15 // pred_check_branch
        %292 = sbr.rel (%p290) target = $region24
      $region23: #{forward.2} parent=15 // pred_region
        %p293 = scmp.lt.s32.totalorder %s32, 1
        %s294 = scalar_select %p293, %s32, 1
        %p295 = scmp.lt.s32.totalorder %s33, 0
        %s296 = scalar_select %p295, %s33, 0
        %s297 = smul.addr %s296, 16
        %s298 = smul.addr %s294, 16
        %s299 = sadd.s32 %s297, %s298
        %s300 = smul.addr %s299, 8
        %s301 = scalar_lea.vmem %s3, %s300
      $region24: #{forward.2} parent=15 // pred_fallthru
        _
      // Predicated region
      $region25: #{forward.2} parent=15 // pred_check
        %p302 = pneg %p117
      $region26: #{forward.2} parent=15 // pred_check_branch
        %304 = sbr.rel (%p302) target = $region28
      $region27: #{forward.2} parent=15 // pred_region
        %s305 = sadd.s32 %s32, %s33
        %s306 = sld [smem:[#allocation4 + %s305]]
        %p307 = scmp.lt.s32.totalorder %s306, 1
        %s308 = scalar_select %p307, %s306, 1
        %s309 = smul.addr %s308, 16
        %s310 = smul.addr %s309, 4
        %s311 = scalar_lea.vmem %s4, %s310
        %s312 = sadd.s32 %s32, %s33
        %s313 = sld [smem:[#allocation4 + %s312]]
      $region28: #{forward.2} parent=15 // pred_fallthru
        _
      // Predicated region
      $region29: #{forward.2} parent=15 // pred_check
        %p314 = pneg %p145
      $region30: #{forward.2} parent=15 // pred_check_branch
        %316 = sbr.rel (%p314) target = $region32
      $region31: #{forward.2} parent=15 // pred_region
        %s317 = sld [smem:[#allocation5 + %s32]]
        %p318 = scmp.lt.s32.totalorder %s317, 1
        %s319 = scalar_select %p318, %s317, 1
        %s320 = smul.addr %s319, 16
        %s321 = smul.addr %s320, 4
        %s322 = scalar_lea.vmem %s5, %s321
        %s323 = sld [smem:[#allocation5 + %s32]]
      $region32: #{forward.2} parent=15 // pred_fallthru
        _
      // Predicated region
      $region33: #{forward.2} parent=15 // pred_check
        %p324 = pneg %p173
      $region34: #{forward.2} parent=15 // pred_check_branch
        %326 = sbr.rel (%p324) target = $region36
      $region35: #{forward.2} parent=15 // pred_region
        %p327 = scmp.lt.s32.totalorder %s32, 1
        %s328 = scalar_select %p327, %s32, 1
        %p329 = scmp.lt.s32.totalorder %s33, 0
        %s330 = scalar_select %p329, %s33, 0
        %s331 = smul.addr %s330, 16
        %s332 = smul.addr %s328, 16
        %s333 = sadd.s32 %s331, %s332
        %s334 = smul.addr %s333, 4
        %s335 = scalar_lea.vmem %s6, %s334
      $region36: #{forward.2} parent=15 // pred_fallthru
        _
      // Predicated region
      $region37: #{forward.2} parent=15 // pred_check
        %p336 = pneg %p201
      $region38: #{forward.2} parent=15 // pred_check_branch
        %338 = sbr.rel (%p336) target = $region40
      $region39: #{forward.2} parent=15 // pred_region
        %p339 = scmp.lt.s32.totalorder %s32, 1
        %s340 = scalar_select %p339, %s32, 1
        %p341 = scmp.lt.s32.totalorder %s33, 0
        %s342 = scalar_select %p341, %s33, 0
        %s343 = smul.addr %s342, 16
        %s344 = smul.addr %s340, 16
        %s345 = sadd.s32 %s343, %s344
        %s346 = smul.addr %s345, 4
        %s347 = scalar_lea.vmem %s7, %s346
      $region40: #{forward.2} parent=15 // pred_fallthru
        _
      // Predicated region
      $region41: #{forward.2} parent=15 // pred_check
        %p348 = pneg %p227
      $region42: #{forward.2} parent=15 // pred_check_branch
        %350 = sbr.rel (%p348) target = $region44
      $region43: #{forward.2} parent=15 // pred_region
        %p351 = scmp.lt.s32.totalorder %s32, 1
        %s352 = scalar_select %p351, %s32, 1
        %s353 = scalar_lea.vmem %s8, %s352
      $region44: #{forward.2} parent=15 // pred_fallthru
        _
    $region16: #{forward.2} parent=5 // pred_fallthru
      _
    %p354 = scmp.le.s32.totalorder 1, %s25
    %p355 = scmp.lt.s32.totalorder %s25, 3
    %p356 = pnand %p354, %p355
    %p357 = pneg %p356
    // Predicated region
    $region45: #{forward.2} parent=5 // pred_check
      _
    $region46: #{forward.2} parent=5 // pred_check_branch
      %359 = sbr.rel (%p356) target = $region48
    $region47: #{forward.2} parent=5 // pred_region
      %s360 = ssub.s32 %s25, 1
      %p361 = scmp.lt.s32.totalorder %s34, 1
      %s362 = scalar_select %p361, %s34, 1
      %p363 = scmp.lt.s32.totalorder %s35, 0
      %s364 = scalar_select %p363, %s35, 0
      %s365 = smul.addr %s364, 16
      %s366 = smul.addr %s362, 16
      %s367 = sadd.s32 %s365, %s366
      %s368 = smul.addr %s367, 4
      %s369 = scalar_lea.vmem %s2, %s368
      %p370 = pneg %p65
      %p371 = pneg %p62
      %p372 = scmp.lt.s32.totalorder %s34, 1
      %s373 = scalar_select %p372, %s34, 1
      %p374 = scmp.lt.s32.totalorder %s35, 0
      %s375 = scalar_select %p374, %s35, 0
      %s376 = smul.addr %s375, 16
      %s377 = smul.addr %s373, 16
      %s378 = sadd.s32 %s376, %s377
      %s379 = smul.addr %s378, 8
      %s380 = scalar_lea.vmem %s3, %s379
      %p381 = pneg %p93
      %p382 = pneg %p90
      %s383 = sadd.s32 %s34, %s35
      %s384 = sld [smem:[#allocation4 + %s383]]
      %p385 = scmp.lt.s32.totalorder %s384, 1
      %s386 = scalar_select %p385, %s384, 1
      %s387 = smul.addr %s386, 16
      %s388 = smul.addr %s387, 4
      %s389 = scalar_lea.vmem %s4, %s388
      %p390 = pneg %p123
      %p391 = pneg %p120
      %s392 = sld [smem:[#allocation5 + %s34]]
      %p393 = scmp.lt.s32.totalorder %s392, 1
      %s394 = scalar_select %p393, %s392, 1
      %s395 = smul.addr %s394, 16
      %s396 = smul.addr %s395, 4
      %s397 = scalar_lea.vmem %s5, %s396
      %p398 = pneg %p151
      %p399 = pneg %p148
      %p400 = scmp.lt.s32.totalorder %s34, 1
      %s401 = scalar_select %p400, %s34, 1
      %p402 = scmp.lt.s32.totalorder %s35, 0
      %s403 = scalar_select %p402, %s35, 0
      %s404 = smul.addr %s403, 16
      %s405 = smul.addr %s401, 16
      %s406 = sadd.s32 %s404, %s405
      %s407 = smul.addr %s406, 4
      %s408 = scalar_lea.vmem %s6, %s407
      %p409 = pneg %p179
      %p410 = pneg %p176
      %p411 = scmp.lt.s32.totalorder %s34, 1
      %s412 = scalar_select %p411, %s34, 1
      %p413 = scmp.lt.s32.totalorder %s35, 0
      %s414 = scalar_select %p413, %s35, 0
      %s415 = smul.addr %s414, 16
      %s416 = smul.addr %s412, 16
      %s417 = sadd.s32 %s415, %s416
      %s418 = smul.addr %s417, 4
      %s419 = scalar_lea.vmem %s7, %s418
      %p420 = pneg %p207
      %p421 = pneg %p204
      %p422 = scmp.lt.s32.totalorder %s34, 1
      %s423 = scalar_select %p422, %s34, 1
      %s424 = scalar_lea.vmem %s8, %s423
      %p425 = pneg %p233
      %p426 = pneg %p230
      %p427 = pneg %p259
      %p428 = pneg %p256
      %p429 = scmp.lt.s32.totalorder %s34, 1
      %s430 = scalar_select %p429, %s34, 1
      %s431 = smul.addr %s430, 16
      %s432 = smul.addr %s431, 4
      %s433 = scalar_lea.vmem %s9, %s432
      %p434 = scmp.lt.s32.totalorder %s34, 1
      %s435 = scalar_select %p434, %s34, 1
      %p436 = scmp.lt.s32.totalorder %s35, 0
      %s437 = scalar_select %p436, %s35, 0
      %s438 = smul.addr %s437, 16
      %s439 = smul.addr %s435, 16
      %s440 = sadd.s32 %s438, %s439
      %s441 = smul.addr %s440, 4
      %s442 = scalar_lea.vmem %s2, %s441
      %p443 = scmp.lt.s32.totalorder %s34, 1
      %s444 = scalar_select %p443, %s34, 1
      %p445 = scmp.lt.s32.totalorder %s35, 0
      %s446 = scalar_select %p445, %s35, 0
      %s447 = smul.addr %s446, 16
      %s448 = smul.addr %s444, 16
      %s449 = sadd.s32 %s447, %s448
      %s450 = smul.addr %s449, 8
      %s451 = scalar_lea.vmem %s3, %s450
      %s452 = sadd.s32 %s34, %s35
      %s453 = sld [smem:[#allocation4 + %s452]]
      %p454 = scmp.lt.s32.totalorder %s453, 1
      %s455 = scalar_select %p454, %s453, 1
      %s456 = smul.addr %s455, 16
      %s457 = smul.addr %s456, 4
      %s458 = scalar_lea.vmem %s4, %s457
      %s459 = sadd.s32 %s34, %s35
      %s460 = sld [smem:[#allocation4 + %s459]]
      %s461 = sld [smem:[#allocation5 + %s34]]
      %p462 = scmp.lt.s32.totalorder %s461, 1
      %s463 = scalar_select %p462, %s461, 1
      %s464 = smul.addr %s463, 16
      %s465 = smul.addr %s464, 4
      %s466 = scalar_lea.vmem %s5, %s465
      %s467 = sld [smem:[#allocation5 + %s34]]
      %p468 = scmp.lt.s32.totalorder %s34, 1
      %s469 = scalar_select %p468, %s34, 1
      %p470 = scmp.lt.s32.totalorder %s35, 0
      %s471 = scalar_select %p470, %s35, 0
      %s472 = smul.addr %s471, 16
      %s473 = smul.addr %s469, 16
      %s474 = sadd.s32 %s472, %s473
      %s475 = smul.addr %s474, 4
      %s476 = scalar_lea.vmem %s6, %s475
      %p477 = scmp.lt.s32.totalorder %s34, 1
      %s478 = scalar_select %p477, %s34, 1
      %p479 = scmp.lt.s32.totalorder %s35, 0
      %s480 = scalar_select %p479, %s35, 0
      %s481 = smul.addr %s480, 16
      %s482 = smul.addr %s478, 16
      %s483 = sadd.s32 %s481, %s482
      %s484 = smul.addr %s483, 4
      %s485 = scalar_lea.vmem %s7, %s484
      %p486 = scmp.lt.s32.totalorder %s34, 1
      %s487 = scalar_select %p486, %s34, 1
      %s488 = scalar_lea.vmem %s8, %s487
      %p489 = scmp.lt.s32.totalorder %s34, 1
      %s490 = scalar_select %p489, %s34, 1
      %s491 = smul.addr %s490, 16
      %s492 = smul.addr %s491, 4
      %s493 = scalar_lea.vmem %s9, %s492
      %p495 = scmp.eq.s32.totalorder %s35, 0
      // Predicated region
      $region49: #{forward.2} parent=47 // pred_check
        %p496 = pneg %p495
      $region50: #{forward.2} parent=47 // pred_check_branch
        %498 = sbr.rel (%p496) target = $region52
      $region51: #{forward.2} parent=47 // pred_region
        %v499 = vld [vmem:[%s488] sm:$0x1]
        %v501 = vlaneseq
        %v502 = vshrl.u32 %v501, 7
        %v503 = vsub.s32 0, %v502
        %v504 = vrot.slane %v499, %v503
        %506 = vst [vmem:[#allocation2] sm:$0xff] %v504
        %507 = vst [vmem:[#allocation2 + $0x8] sm:$0xff] %v504
        %508 = vst [vmem:[#allocation2 + $0x10] sm:$0xff] %v504
        %509 = vst [vmem:[#allocation2 + $0x18] sm:$0xff] %v504
        %510 = vst [vmem:[#allocation2 + $0x20] sm:$0xff] %v504
        %511 = vst [vmem:[#allocation2 + $0x28] sm:$0xff] %v504
        %512 = vst [vmem:[#allocation2 + $0x30] sm:$0xff] %v504
        %513 = vst [vmem:[#allocation2 + $0x38] sm:$0xff] %v504
        %514 = vst [vmem:[#allocation2 + $0x40] sm:$0xff] %v504
        %515 = vst [vmem:[#allocation2 + $0x48] sm:$0xff] %v504
        %516 = vst [vmem:[#allocation2 + $0x50] sm:$0xff] %v504
        %517 = vst [vmem:[#allocation2 + $0x58] sm:$0xff] %v504
        %518 = vst [vmem:[#allocation2 + $0x60] sm:$0xff] %v504
        %519 = vst [vmem:[#allocation2 + $0x68] sm:$0xff] %v504
        %520 = vst [vmem:[#allocation2 + $0x70] sm:$0xff] %v504
        %521 = vst [vmem:[#allocation2 + $0x78] sm:$0xff] %v504
      $region52: #{forward.2} parent=47 // pred_fallthru
        _
      %v522 = vld [vmem:[%s442] sm:$0xf]
      %v523 = vld [vmem:[%s442 + $0x4] sm:$0xf]
      %v524 = vld [vmem:[%s442 + $0x8] sm:$0xf]
      %v525 = vld [vmem:[%s442 + $0xc] sm:$0xf]
      %v526 = vld [vmem:[%s442 + $0x10] sm:$0xf]
      %v527 = vld [vmem:[%s442 + $0x14] sm:$0xf]
      %v528 = vld [vmem:[%s442 + $0x18] sm:$0xf]
      %v529 = vld [vmem:[%s442 + $0x1c] sm:$0xf]
      %v530 = vld [vmem:[%s442 + $0x20] sm:$0xf]
      %v531 = vld [vmem:[%s442 + $0x24] sm:$0xf]
      %v532 = vld [vmem:[%s442 + $0x28] sm:$0xf]
      %v533 = vld [vmem:[%s442 + $0x2c] sm:$0xf]
      %v534 = vld [vmem:[%s442 + $0x30] sm:$0xf]
      %v535 = vld [vmem:[%s442 + $0x34] sm:$0xf]
      %v536 = vld [vmem:[%s442 + $0x38] sm:$0xf]
      %v537 = vld [vmem:[%s442 + $0x3c] sm:$0xf]
      %v538 = vld [vmem:[%s458] sm:$0xf]
      %v539 = vld [vmem:[%s458 + $0x4] sm:$0xf]
      %v540 = vld [vmem:[%s458 + $0x8] sm:$0xf]
      %v541 = vld [vmem:[%s458 + $0xc] sm:$0xf]
      %v542 = vld [vmem:[%s458 + $0x10] sm:$0xf]
      %v543 = vld [vmem:[%s458 + $0x14] sm:$0xf]
      %v544 = vld [vmem:[%s458 + $0x18] sm:$0xf]
      %v545 = vld [vmem:[%s458 + $0x1c] sm:$0xf]
      %v546 = vld [vmem:[%s458 + $0x20] sm:$0xf]
      %v547 = vld [vmem:[%s458 + $0x24] sm:$0xf]
      %v548 = vld [vmem:[%s458 + $0x28] sm:$0xf]
      %v549 = vld [vmem:[%s458 + $0x2c] sm:$0xf]
      %v550 = vld [vmem:[%s458 + $0x30] sm:$0xf]
      %v551 = vld [vmem:[%s458 + $0x34] sm:$0xf]
      %v552 = vld [vmem:[%s458 + $0x38] sm:$0xf]
      %v553 = vld [vmem:[%s458 + $0x3c] sm:$0xf]
      %v570 = vunpack.c.l.b16 %v522
      %v571 = vunpack.c.l.b16 %v523
      %v572 = vunpack.c.l.b16 %v524
      %v573 = vunpack.c.l.b16 %v525
      %v574 = vunpack.c.l.b16 %v526
      %v575 = vunpack.c.l.b16 %v527
      %v576 = vunpack.c.l.b16 %v528
      %v577 = vunpack.c.l.b16 %v529
      %v578 = vunpack.c.l.b16 %v530
      %v579 = vunpack.c.l.b16 %v531
      %v580 = vunpack.c.l.b16 %v532
      %v581 = vunpack.c.l.b16 %v533
      %v582 = vunpack.c.l.b16 %v534
      %v583 = vunpack.c.l.b16 %v535
      %v584 = vunpack.c.l.b16 %v536
      %v585 = vunpack.c.l.b16 %v537
      %v586 = vpack.c.b16 %v571, %v570
      %v587 = vpack.c.b16 %v573, %v572
      %v588 = vpack.c.b16 %v575, %v574
      %v589 = vpack.c.b16 %v577, %v576
      %v590 = vpack.c.b16 %v579, %v578
      %v591 = vpack.c.b16 %v581, %v580
      %v592 = vpack.c.b16 %v583, %v582
      %v593 = vpack.c.b16 %v585, %v584
      %v618 = vunpack.c.l.b16 %v538
      %v619 = vunpack.c.l.b16 %v539
      %v620 = vunpack.c.l.b16 %v540
      %v621 = vunpack.c.l.b16 %v541
      %v622 = vunpack.c.l.b16 %v542
      %v623 = vunpack.c.l.b16 %v543
      %v624 = vunpack.c.l.b16 %v544
      %v625 = vunpack.c.l.b16 %v545
      %v626 = vunpack.c.l.b16 %v546
      %v627 = vunpack.c.l.b16 %v547
      %v628 = vunpack.c.l.b16 %v548
      %v629 = vunpack.c.l.b16 %v549
      %v630 = vunpack.c.l.b16 %v550
      %v631 = vunpack.c.l.b16 %v551
      %v632 = vunpack.c.l.b16 %v552
      %v633 = vunpack.c.l.b16 %v553
      %v634 = vpack.c.b16 %v619, %v618
      %v635 = vpack.c.b16 %v621, %v620
      %v636 = vpack.c.b16 %v623, %v622
      %v637 = vpack.c.b16 %v625, %v624
      %v638 = vpack.c.b16 %v627, %v626
      %v639 = vpack.c.b16 %v629, %v628
      %v640 = vpack.c.b16 %v631, %v630
      %v641 = vpack.c.b16 %v633, %v632
      %650 = vmatprep.subr.bf16.mxu0 0
      %651 = vmatpush1.bf16.msra.mxu0 %v634
      %652 = vmatprep.subr.bf16.mxu0 0
      %653 = vmatpush1.bf16.msra.mxu0 %v635
      %654 = vmatprep.subr.bf16.mxu0 0
      %655 = vmatpush1.bf16.msra.mxu0 %v636
      %656 = vmatprep.subr.bf16.mxu0 0
      %657 = vmatpush1.bf16.msra.mxu0 %v637
      %658 = vmatprep.subr.bf16.mxu0 0
      %659 = vmatpush1.bf16.msra.mxu0 %v638
      %660 = vmatprep.subr.bf16.mxu0 0
      %661 = vmatpush1.bf16.msra.mxu0 %v639
      %662 = vmatprep.subr.bf16.mxu0 0
      %663 = vmatpush1.bf16.msra.mxu0 %v640
      %664 = vmatprep.subr.bf16.mxu0 0
      %665 = vmatpush1.bf16.msra.mxu0 %v641
      %666 = vmatprep.subr.bf16.mxu0 0
      %667 = vmatpush1.bf16.msra.mxu0 0
      %668 = vmatprep.subr.bf16.mxu0 0
      %669 = vmatpush1.bf16.msra.mxu0 0
      %670 = vmatprep.subr.bf16.mxu0 0
      %671 = vmatpush1.bf16.msra.mxu0 0
      %672 = vmatprep.subr.bf16.mxu0 0
      %673 = vmatpush1.bf16.msra.mxu0 0
      %674 = vmatprep.subr.bf16.mxu0 0
      %675 = vmatpush1.bf16.msra.mxu0 0
      %676 = vmatprep.subr.bf16.mxu0 0
      %677 = vmatpush1.bf16.msra.mxu0 0
      %678 = vmatprep.subr.bf16.mxu0 0
      %679 = vmatpush1.bf16.msra.mxu0 0
      %680 = vmatprep.subr.bf16.mxu0 0
      %681 = vmatpush1.bf16.msra.mxu0 0
      %682 = vmatprep.mubr.bf16.mxu0 0
      %683 = vmatmul.mubr.bf16.gmra.mrb[0].mxu0 %v586
      %v684 = vpop.f32.mrb[0].mxu0
      %v685 = vadd.f32 0.0, %v684
      %v686 = vpop.f32.mrb[0].mxu0
      %v687 = vpop.f32.mrb[0].mxu0
      %v688 = vadd.f32 0.0, %v687
      %v689 = vpop.f32.mrb[0].mxu0
      %690 = vmatprep.mubr.bf16.mxu0 0
      %691 = vmatmul.mubr.bf16.gmra.mrb[0].mxu0 %v587
      %v692 = vpop.f32.mrb[0].mxu0
      %v693 = vadd.f32 0.0, %v692
      %v694 = vpop.f32.mrb[0].mxu0
      %v695 = vpop.f32.mrb[0].mxu0
      %v696 = vadd.f32 0.0, %v695
      %v697 = vpop.f32.mrb[0].mxu0
      %698 = vmatprep.mubr.bf16.mxu0 0
      %699 = vmatmul.mubr.bf16.gmra.mrb[0].mxu0 %v588
      %v700 = vpop.f32.mrb[0].mxu0
      %v701 = vadd.f32 0.0, %v700
      %v702 = vpop.f32.mrb[0].mxu0
      %v703 = vpop.f32.mrb[0].mxu0
      %v704 = vadd.f32 0.0, %v703
      %v705 = vpop.f32.mrb[0].mxu0
      %706 = vmatprep.mubr.bf16.mxu0 0
      %707 = vmatmul.mubr.bf16.gmra.mrb[0].mxu0 %v589
      %v708 = vpop.f32.mrb[0].mxu0
      %v709 = vadd.f32 0.0, %v708
      %v710 = vpop.f32.mrb[0].mxu0
      %v711 = vpop.f32.mrb[0].mxu0
      %v712 = vadd.f32 0.0, %v711
      %v713 = vpop.f32.mrb[0].mxu0
      %714 = vmatprep.mubr.bf16.mxu0 0
      %715 = vmatmul.mubr.bf16.gmra.mrb[0].mxu0 %v590
      %v716 = vpop.f32.mrb[0].mxu0
      %v717 = vadd.f32 0.0, %v716
      %v718 = vpop.f32.mrb[0].mxu0
      %v719 = vpop.f32.mrb[0].mxu0
      %v720 = vadd.f32 0.0, %v719
      %v721 = vpop.f32.mrb[0].mxu0
      %722 = vmatprep.mubr.bf16.mxu0 0
      %723 = vmatmul.mubr.bf16.gmra.mrb[0].mxu0 %v591
      %v724 = vpop.f32.mrb[0].mxu0
      %v725 = vadd.f32 0.0, %v724
      %v726 = vpop.f32.mrb[0].mxu0
      %v727 = vpop.f32.mrb[0].mxu0
      %v728 = vadd.f32 0.0, %v727
      %v729 = vpop.f32.mrb[0].mxu0
      %730 = vmatprep.mubr.bf16.mxu0 0
      %731 = vmatmul.mubr.bf16.gmra.mrb[0].mxu0 %v592
      %v732 = vpop.f32.mrb[0].mxu0
      %v733 = vadd.f32 0.0, %v732
      %v734 = vpop.f32.mrb[0].mxu0
      %v735 = vpop.f32.mrb[0].mxu0
      %v736 = vadd.f32 0.0, %v735
      %v737 = vpop.f32.mrb[0].mxu0
      %738 = vmatprep.mubr.bf16.mxu0 0
      %739 = vmatmul.mubr.bf16.gmra.mrb[0].mxu0 %v593
      %v740 = vpop.f32.mrb[0].mxu0
      %v741 = vadd.f32 0.0, %v740
      %v742 = vpop.f32.mrb[0].mxu0
      %v743 = vpop.f32.mrb[0].mxu0
      %v744 = vadd.f32 0.0, %v743
      %v745 = vpop.f32.mrb[0].mxu0
      %746 = vdwg.mxu0
      %v747 = vld [vmem:[%s451] sm:$0xff]
      %v748 = vld [vmem:[%s451 + $0x8] sm:$0xff]
      %v749 = vld [vmem:[%s451 + $0x10] sm:$0xff]
      %v750 = vld [vmem:[%s451 + $0x18] sm:$0xff]
      %v751 = vld [vmem:[%s451 + $0x20] sm:$0xff]
      %v752 = vld [vmem:[%s451 + $0x28] sm:$0xff]
      %v753 = vld [vmem:[%s451 + $0x30] sm:$0xff]
      %v754 = vld [vmem:[%s451 + $0x38] sm:$0xff]
      %v755 = vld [vmem:[%s451 + $0x40] sm:$0xff]
      %v756 = vld [vmem:[%s451 + $0x48] sm:$0xff]
      %v757 = vld [vmem:[%s451 + $0x50] sm:$0xff]
      %v758 = vld [vmem:[%s451 + $0x58] sm:$0xff]
      %v759 = vld [vmem:[%s451 + $0x60] sm:$0xff]
      %v760 = vld [vmem:[%s451 + $0x68] sm:$0xff]
      %v761 = vld [vmem:[%s451 + $0x70] sm:$0xff]
      %v762 = vld [vmem:[%s451 + $0x78] sm:$0xff]
      %764 = vset.pattern.permute.xlu0 0
      %765 = vperm.xlu0 %764, %v747
      %v766 = vpop.permute.xlu0 %765
      %769 = vset.pattern.permute.xlu0 0
      %770 = vperm.xlu0 %769, %v748
      %v771 = vpop.permute.xlu0 %770
      %774 = vset.pattern.permute.xlu0 0
      %775 = vperm.xlu0 %774, %v749
      %v776 = vpop.permute.xlu0 %775
      %779 = vset.pattern.permute.xlu0 0
      %780 = vperm.xlu0 %779, %v750
      %v781 = vpop.permute.xlu0 %780
      %784 = vset.pattern.permute.xlu0 0
      %785 = vperm.xlu0 %784, %v751
      %v786 = vpop.permute.xlu0 %785
      %789 = vset.pattern.permute.xlu0 0
      %790 = vperm.xlu0 %789, %v752
      %v791 = vpop.permute.xlu0 %790
      %794 = vset.pattern.permute.xlu0 0
      %795 = vperm.xlu0 %794, %v753
      %v796 = vpop.permute.xlu0 %795
      %799 = vset.pattern.permute.xlu0 0
      %800 = vperm.xlu0 %799, %v754
      %v801 = vpop.permute.xlu0 %800
      %804 = vset.pattern.permute.xlu0 0
      %805 = vperm.xlu0 %804, %v755
      %v806 = vpop.permute.xlu0 %805
      %809 = vset.pattern.permute.xlu0 0
      %810 = vperm.xlu0 %809, %v756
      %v811 = vpop.permute.xlu0 %810
      %814 = vset.pattern.permute.xlu0 0
      %815 = vperm.xlu0 %814, %v757
      %v816 = vpop.permute.xlu0 %815
      %819 = vset.pattern.permute.xlu0 0
      %820 = vperm.xlu0 %819, %v758
      %v821 = vpop.permute.xlu0 %820
      %824 = vset.pattern.permute.xlu0 0
      %825 = vperm.xlu0 %824, %v759
      %v826 = vpop.permute.xlu0 %825
      %829 = vset.pattern.permute.xlu0 0
      %830 = vperm.xlu0 %829, %v760
      %v831 = vpop.permute.xlu0 %830
      %834 = vset.pattern.permute.xlu0 0
      %835 = vperm.xlu0 %834, %v761
      %v836 = vpop.permute.xlu0 %835
      %839 = vset.pattern.permute.xlu0 0
      %840 = vperm.xlu0 %839, %v762
      %v841 = vpop.permute.xlu0 %840
      %v843 = vmul.f32 %v685, %v766
      %v844 = vmul.f32 %v688, %v771
      %v845 = vmul.f32 %v693, %v776
      %v846 = vmul.f32 %v696, %v781
      %v847 = vmul.f32 %v701, %v786
      %v848 = vmul.f32 %v704, %v791
      %v849 = vmul.f32 %v709, %v796
      %v850 = vmul.f32 %v712, %v801
      %v851 = vmul.f32 %v717, %v806
      %v852 = vmul.f32 %v720, %v811
      %v853 = vmul.f32 %v725, %v816
      %v854 = vmul.f32 %v728, %v821
      %v855 = vmul.f32 %v733, %v826
      %v856 = vmul.f32 %v736, %v831
      %v857 = vmul.f32 %v741, %v836
      %v858 = vmul.f32 %v744, %v841
      %v859 = vld [vmem:[#allocation2] sm:$0xff]
      %v860 = vld [vmem:[#allocation2 + $0x8] sm:$0xff]
      %v861 = vld [vmem:[#allocation2 + $0x10] sm:$0xff]
      %v862 = vld [vmem:[#allocation2 + $0x18] sm:$0xff]
      %v863 = vld [vmem:[#allocation2 + $0x20] sm:$0xff]
      %v864 = vld [vmem:[#allocation2 + $0x28] sm:$0xff]
      %v865 = vld [vmem:[#allocation2 + $0x30] sm:$0xff]
      %v866 = vld [vmem:[#allocation2 + $0x38] sm:$0xff]
      %v867 = vld [vmem:[#allocation2 + $0x40] sm:$0xff]
      %v868 = vld [vmem:[#allocation2 + $0x48] sm:$0xff]
      %v869 = vld [vmem:[#allocation2 + $0x50] sm:$0xff]
      %v870 = vld [vmem:[#allocation2 + $0x58] sm:$0xff]
      %v871 = vld [vmem:[#allocation2 + $0x60] sm:$0xff]
      %v872 = vld [vmem:[#allocation2 + $0x68] sm:$0xff]
      %v873 = vld [vmem:[#allocation2 + $0x70] sm:$0xff]
      %v874 = vld [vmem:[#allocation2 + $0x78] sm:$0xff]
      %v875 = vpack.c.bf16 %v844, %v843
      %v876 = vpack.c.bf16 %v846, %v845
      %v877 = vpack.c.bf16 %v848, %v847
      %v878 = vpack.c.bf16 %v850, %v849
      %v879 = vpack.c.bf16 %v852, %v851
      %v880 = vpack.c.bf16 %v854, %v853
      %v881 = vpack.c.bf16 %v856, %v855
      %v882 = vpack.c.bf16 %v858, %v857
      %v883 = vld [vmem:[%s476] sm:$0xf]
      %v884 = vld [vmem:[%s476 + $0x4] sm:$0xf]
      %v885 = vld [vmem:[%s476 + $0x8] sm:$0xf]
      %v886 = vld [vmem:[%s476 + $0xc] sm:$0xf]
      %v887 = vld [vmem:[%s476 + $0x10] sm:$0xf]
      %v888 = vld [vmem:[%s476 + $0x14] sm:$0xf]
      %v889 = vld [vmem:[%s476 + $0x18] sm:$0xf]
      %v890 = vld [vmem:[%s476 + $0x1c] sm:$0xf]
      %v891 = vld [vmem:[%s476 + $0x20] sm:$0xf]
      %v892 = vld [vmem:[%s476 + $0x24] sm:$0xf]
      %v893 = vld [vmem:[%s476 + $0x28] sm:$0xf]
      %v894 = vld [vmem:[%s476 + $0x2c] sm:$0xf]
      %v895 = vld [vmem:[%s476 + $0x30] sm:$0xf]
      %v896 = vld [vmem:[%s476 + $0x34] sm:$0xf]
      %v897 = vld [vmem:[%s476 + $0x38] sm:$0xf]
      %v898 = vld [vmem:[%s476 + $0x3c] sm:$0xf]
      %v915 = vunpack.c.l.b16 %v883
      %v916 = vunpack.c.l.b16 %v884
      %v917 = vunpack.c.l.b16 %v885
      %v918 = vunpack.c.l.b16 %v886
      %v919 = vunpack.c.l.b16 %v887
      %v920 = vunpack.c.l.b16 %v888
      %v921 = vunpack.c.l.b16 %v889
      %v922 = vunpack.c.l.b16 %v890
      %v923 = vunpack.c.l.b16 %v891
      %v924 = vunpack.c.l.b16 %v892
      %v925 = vunpack.c.l.b16 %v893
      %v926 = vunpack.c.l.b16 %v894
      %v927 = vunpack.c.l.b16 %v895
      %v928 = vunpack.c.l.b16 %v896
      %v929 = vunpack.c.l.b16 %v897
      %v930 = vunpack.c.l.b16 %v898
      %v931 = vpack.c.b16 %v916, %v915
      %v932 = vpack.c.b16 %v918, %v917
      %v933 = vpack.c.b16 %v920, %v919
      %v934 = vpack.c.b16 %v922, %v921
      %v935 = vpack.c.b16 %v924, %v923
      %v936 = vpack.c.b16 %v926, %v925
      %v937 = vpack.c.b16 %v928, %v927
      %v938 = vpack.c.b16 %v930, %v929
      %947 = vmatprep.subr.bf16.mxu0 0
      %948 = vmatpush1.bf16.msra.mxu0 %v931
      %949 = vmatprep.subr.bf16.mxu0 0
      %950 = vmatpush1.bf16.msra.mxu0 %v932
      %951 = vmatprep.subr.bf16.mxu0 0
      %952 = vmatpush1.bf16.msra.mxu0 %v933
      %953 = vmatprep.subr.bf16.mxu0 0
      %954 = vmatpush1.bf16.msra.mxu0 %v934
      %955 = vmatprep.subr.bf16.mxu0 0
      %956 = vmatpush1.bf16.msra.mxu0 %v935
      %957 = vmatprep.subr.bf16.mxu0 0
      %958 = vmatpush1.bf16.msra.mxu0 %v936
      %959 = vmatprep.subr.bf16.mxu0 0
      %960 = vmatpush1.bf16.msra.mxu0 %v937
      %961 = vmatprep.subr.bf16.mxu0 0
      %962 = vmatpush1.bf16.msra.mxu0 %v938
      %963 = vmatprep.subr.bf16.mxu0 0
      %964 = vmatpush1.bf16.msra.mxu0 0
      %965 = vmatprep.subr.bf16.mxu0 0
      %966 = vmatpush1.bf16.msra.mxu0 0
      %967 = vmatprep.subr.bf16.mxu0 0
      %968 = vmatpush1.bf16.msra.mxu0 0
      %969 = vmatprep.subr.bf16.mxu0 0
      %970 = vmatpush1.bf16.msra.mxu0 0
      %971 = vmatprep.subr.bf16.mxu0 0
      %972 = vmatpush1.bf16.msra.mxu0 0
      %973 = vmatprep.subr.bf16.mxu0 0
      %974 = vmatpush1.bf16.msra.mxu0 0
      %975 = vmatprep.subr.bf16.mxu0 0
      %976 = vmatpush1.bf16.msra.mxu0 0
      %977 = vmatprep.subr.bf16.mxu0 0
      %978 = vmatpush1.bf16.msra.mxu0 0
      %979 = vmatprep.mubr.bf16.mxu0 0
      %980 = vmatmul.mubr.bf16.gmra.mrb[0].mxu0 %v875
      %v981 = vpop.f32.mrb[0].mxu0
      %v982 = vadd.f32 0.0, %v981
      %v983 = vpop.f32.mrb[0].mxu0
      %v984 = vpop.f32.mrb[0].mxu0
      %v985 = vadd.f32 0.0, %v984
      %v986 = vpop.f32.mrb[0].mxu0
      %987 = vmatprep.mubr.bf16.mxu0 0
      %988 = vmatmul.mubr.bf16.gmra.mrb[0].mxu0 %v876
      %v989 = vpop.f32.mrb[0].mxu0
      %v990 = vadd.f32 0.0, %v989
      %v991 = vpop.f32.mrb[0].mxu0
      %v992 = vpop.f32.mrb[0].mxu0
      %v993 = vadd.f32 0.0, %v992
      %v994 = vpop.f32.mrb[0].mxu0
      %995 = vmatprep.mubr.bf16.mxu0 0
      %996 = vmatmul.mubr.bf16.gmra.mrb[0].mxu0 %v877
      %v997 = vpop.f32.mrb[0].mxu0
      %v998 = vadd.f32 0.0, %v997
      %v999 = vpop.f32.mrb[0].mxu0
      %v1000 = vpop.f32.mrb[0].mxu0
      %v1001 = vadd.f32 0.0, %v1000
      %v1002 = vpop.f32.mrb[0].mxu0
      %1003 = vmatprep.mubr.bf16.mxu0 0
      %1004 = vmatmul.mubr.bf16.gmra.mrb[0].mxu0 %v878
      %v1005 = vpop.f32.mrb[0].mxu0
      %v1006 = vadd.f32 0.0, %v1005
      %v1007 = vpop.f32.mrb[0].mxu0
      %v1008 = vpop.f32.mrb[0].mxu0
      %v1009 = vadd.f32 0.0, %v1008
      %v1010 = vpop.f32.mrb[0].mxu0
      %1011 = vmatprep.mubr.bf16.mxu0 0
      %1012 = vmatmul.mubr.bf16.gmra.mrb[0].mxu0 %v879
      %v1013 = vpop.f32.mrb[0].mxu0
      %v1014 = vadd.f32 0.0, %v1013
      %v1015 = vpop.f32.mrb[0].mxu0
      %v1016 = vpop.f32.mrb[0].mxu0
      %v1017 = vadd.f32 0.0, %v1016
      %v1018 = vpop.f32.mrb[0].mxu0
      %1019 = vmatprep.mubr.bf16.mxu0 0
      %1020 = vmatmul.mubr.bf16.gmra.mrb[0].mxu0 %v880
      %v1021 = vpop.f32.mrb[0].mxu0
      %v1022 = vadd.f32 0.0, %v1021
      %v1023 = vpop.f32.mrb[0].mxu0
      %v1024 = vpop.f32.mrb[0].mxu0
      %v1025 = vadd.f32 0.0, %v1024
      %v1026 = vpop.f32.mrb[0].mxu0
      %1027 = vmatprep.mubr.bf16.mxu0 0
      %1028 = vmatmul.mubr.bf16.gmra.mrb[0].mxu0 %v881
      %v1029 = vpop.f32.mrb[0].mxu0
      %v1030 = vadd.f32 0.0, %v1029
      %v1031 = vpop.f32.mrb[0].mxu0
      %v1032 = vpop.f32.mrb[0].mxu0
      %v1033 = vadd.f32 0.0, %v1032
      %v1034 = vpop.f32.mrb[0].mxu0
      %1035 = vmatprep.mubr.bf16.mxu0 0
      %1036 = vmatmul.mubr.bf16.gmra.mrb[0].mxu0 %v882
      %v1037 = vpop.f32.mrb[0].mxu0
      %v1038 = vadd.f32 0.0, %v1037
      %v1039 = vpop.f32.mrb[0].mxu0
      %v1040 = vpop.f32.mrb[0].mxu0
      %v1041 = vadd.f32 0.0, %v1040
      %v1042 = vpop.f32.mrb[0].mxu0
      %1043 = vdwg.mxu0
      %v1044 = vadd.f32 %v859, %v982
      %v1045 = vadd.f32 %v860, %v985
      %v1046 = vadd.f32 %v861, %v990
      %v1047 = vadd.f32 %v862, %v993
      %v1048 = vadd.f32 %v863, %v998
      %v1049 = vadd.f32 %v864, %v1001
      %v1050 = vadd.f32 %v865, %v1006
      %v1051 = vadd.f32 %v866, %v1009
      %v1052 = vadd.f32 %v867, %v1014
      %v1053 = vadd.f32 %v868, %v1017
      %v1054 = vadd.f32 %v869, %v1022
      %v1055 = vadd.f32 %v870, %v1025
      %v1056 = vadd.f32 %v871, %v1030
      %v1057 = vadd.f32 %v872, %v1033
      %v1058 = vadd.f32 %v873, %v1038
      %v1059 = vadd.f32 %v874, %v1041
      %1060 = vst [vmem:[#allocation2] sm:$0xff] %v1044
      %1061 = vst [vmem:[#allocation2 + $0x8] sm:$0xff] %v1045
      %1062 = vst [vmem:[#allocation2 + $0x10] sm:$0xff] %v1046
      %1063 = vst [vmem:[#allocation2 + $0x18] sm:$0xff] %v1047
      %1064 = vst [vmem:[#allocation2 + $0x20] sm:$0xff] %v1048
      %1065 = vst [vmem:[#allocation2 + $0x28] sm:$0xff] %v1049
      %1066 = vst [vmem:[#allocation2 + $0x30] sm:$0xff] %v1050
      %1067 = vst [vmem:[#allocation2 + $0x38] sm:$0xff] %v1051
      %1068 = vst [vmem:[#allocation2 + $0x40] sm:$0xff] %v1052
      %1069 = vst [vmem:[#allocation2 + $0x48] sm:$0xff] %v1053
      %1070 = vst [vmem:[#allocation2 + $0x50] sm:$0xff] %v1054
      %1071 = vst [vmem:[#allocation2 + $0x58] sm:$0xff] %v1055
      %1072 = vst [vmem:[#allocation2 + $0x60] sm:$0xff] %v1056
      %1073 = vst [vmem:[#allocation2 + $0x68] sm:$0xff] %v1057
      %1074 = vst [vmem:[#allocation2 + $0x70] sm:$0xff] %v1058
      %1075 = vst [vmem:[#allocation2 + $0x78] sm:$0xff] %v1059
      %v1076 = vld [vmem:[#allocation2] sm:$0xff]
      %v1077 = vld [vmem:[#allocation2 + $0x8] sm:$0xff]
      %v1078 = vld [vmem:[#allocation2 + $0x10] sm:$0xff]
      %v1079 = vld [vmem:[#allocation2 + $0x18] sm:$0xff]
      %v1080 = vld [vmem:[#allocation2 + $0x20] sm:$0xff]
      %v1081 = vld [vmem:[#allocation2 + $0x28] sm:$0xff]
      %v1082 = vld [vmem:[#allocation2 + $0x30] sm:$0xff]
      %v1083 = vld [vmem:[#allocation2 + $0x38] sm:$0xff]
      %v1084 = vld [vmem:[#allocation2 + $0x40] sm:$0xff]
      %v1085 = vld [vmem:[#allocation2 + $0x48] sm:$0xff]
      %v1086 = vld [vmem:[#allocation2 + $0x50] sm:$0xff]
      %v1087 = vld [vmem:[#allocation2 + $0x58] sm:$0xff]
      %v1088 = vld [vmem:[#allocation2 + $0x60] sm:$0xff]
      %v1089 = vld [vmem:[#allocation2 + $0x68] sm:$0xff]
      %v1090 = vld [vmem:[#allocation2 + $0x70] sm:$0xff]
      %v1091 = vld [vmem:[#allocation2 + $0x78] sm:$0xff]
      %v1092 = vld [vmem:[%s466] sm:$0xf]
      %v1093 = vld [vmem:[%s466 + $0x4] sm:$0xf]
      %v1094 = vld [vmem:[%s466 + $0x8] sm:$0xf]
      %v1095 = vld [vmem:[%s466 + $0xc] sm:$0xf]
      %v1096 = vld [vmem:[%s466 + $0x10] sm:$0xf]
      %v1097 = vld [vmem:[%s466 + $0x14] sm:$0xf]
      %v1098 = vld [vmem:[%s466 + $0x18] sm:$0xf]
      %v1099 = vld [vmem:[%s466 + $0x1c] sm:$0xf]
      %v1100 = vld [vmem:[%s466 + $0x20] sm:$0xf]
      %v1101 = vld [vmem:[%s466 + $0x24] sm:$0xf]
      %v1102 = vld [vmem:[%s466 + $0x28] sm:$0xf]
      %v1103 = vld [vmem:[%s466 + $0x2c] sm:$0xf]
      %v1104 = vld [vmem:[%s466 + $0x30] sm:$0xf]
      %v1105 = vld [vmem:[%s466 + $0x34] sm:$0xf]
      %v1106 = vld [vmem:[%s466 + $0x38] sm:$0xf]
      %v1107 = vld [vmem:[%s466 + $0x3c] sm:$0xf]
      %v1108 = vld [vmem:[%s485] sm:$0xf]
      %v1109 = vld [vmem:[%s485 + $0x4] sm:$0xf]
      %v1110 = vld [vmem:[%s485 + $0x8] sm:$0xf]
      %v1111 = vld [vmem:[%s485 + $0xc] sm:$0xf]
      %v1112 = vld [vmem:[%s485 + $0x10] sm:$0xf]
      %v1113 = vld [vmem:[%s485 + $0x14] sm:$0xf]
      %v1114 = vld [vmem:[%s485 + $0x18] sm:$0xf]
      %v1115 = vld [vmem:[%s485 + $0x1c] sm:$0xf]
      %v1116 = vld [vmem:[%s485 + $0x20] sm:$0xf]
      %v1117 = vld [vmem:[%s485 + $0x24] sm:$0xf]
      %v1118 = vld [vmem:[%s485 + $0x28] sm:$0xf]
      %v1119 = vld [vmem:[%s485 + $0x2c] sm:$0xf]
      %v1120 = vld [vmem:[%s485 + $0x30] sm:$0xf]
      %v1121 = vld [vmem:[%s485 + $0x34] sm:$0xf]
      %v1122 = vld [vmem:[%s485 + $0x38] sm:$0xf]
      %v1123 = vld [vmem:[%s485 + $0x3c] sm:$0xf]
      %v1140 = vunpack.c.l.b16 %v1092
      %v1141 = vunpack.c.l.b16 %v1093
      %v1142 = vunpack.c.l.b16 %v1094
      %v1143 = vunpack.c.l.b16 %v1095
      %v1144 = vunpack.c.l.b16 %v1096
      %v1145 = vunpack.c.l.b16 %v1097
      %v1146 = vunpack.c.l.b16 %v1098
      %v1147 = vunpack.c.l.b16 %v1099
      %v1148 = vunpack.c.l.b16 %v1100
      %v1149 = vunpack.c.l.b16 %v1101
      %v1150 = vunpack.c.l.b16 %v1102
      %v1151 = vunpack.c.l.b16 %v1103
      %v1152 = vunpack.c.l.b16 %v1104
      %v1153 = vunpack.c.l.b16 %v1105
      %v1154 = vunpack.c.l.b16 %v1106
      %v1155 = vunpack.c.l.b16 %v1107
      %v1156 = vpack.c.b16 %v1141, %v1140
      %v1157 = vpack.c.b16 %v1143, %v1142
      %v1158 = vpack.c.b16 %v1145, %v1144
      %v1159 = vpack.c.b16 %v1147, %v1146
      %v1160 = vpack.c.b16 %v1149, %v1148
      %v1161 = vpack.c.b16 %v1151, %v1150
      %v1162 = vpack.c.b16 %v1153, %v1152
      %v1163 = vpack.c.b16 %v1155, %v1154
      %v1188 = vunpack.c.l.b16 %v1108
      %v1189 = vunpack.c.l.b16 %v1109
      %v1190 = vunpack.c.l.b16 %v1110
      %v1191 = vunpack.c.l.b16 %v1111
      %v1192 = vunpack.c.l.b16 %v1112
      %v1193 = vunpack.c.l.b16 %v1113
      %v1194 = vunpack.c.l.b16 %v1114
      %v1195 = vunpack.c.l.b16 %v1115
      %v1196 = vunpack.c.l.b16 %v1116
      %v1197 = vunpack.c.l.b16 %v1117
      %v1198 = vunpack.c.l.b16 %v1118
      %v1199 = vunpack.c.l.b16 %v1119
      %v1200 = vunpack.c.l.b16 %v1120
      %v1201 = vunpack.c.l.b16 %v1121
      %v1202 = vunpack.c.l.b16 %v1122
      %v1203 = vunpack.c.l.b16 %v1123
      %v1204 = vpack.c.b16 %v1189, %v1188
      %v1205 = vpack.c.b16 %v1191, %v1190
      %v1206 = vpack.c.b16 %v1193, %v1192
      %v1207 = vpack.c.b16 %v1195, %v1194
      %v1208 = vpack.c.b16 %v1197, %v1196
      %v1209 = vpack.c.b16 %v1199, %v1198
      %v1210 = vpack.c.b16 %v1201, %v1200
      %v1211 = vpack.c.b16 %v1203, %v1202
      %1220 = vmatprep.subr.bf16.mxu0 0
      %1221 = vmatpush1.bf16.msra.mxu0 %v1204
      %1222 = vmatprep.subr.bf16.mxu0 0
      %1223 = vmatpush1.bf16.msra.mxu0 %v1205
      %1224 = vmatprep.subr.bf16.mxu0 0
      %1225 = vmatpush1.bf16.msra.mxu0 %v1206
      %1226 = vmatprep.subr.bf16.mxu0 0
      %1227 = vmatpush1.bf16.msra.mxu0 %v1207
      %1228 = vmatprep.subr.bf16.mxu0 0
      %1229 = vmatpush1.bf16.msra.mxu0 %v1208
      %1230 = vmatprep.subr.bf16.mxu0 0
      %1231 = vmatpush1.bf16.msra.mxu0 %v1209
      %1232 = vmatprep.subr.bf16.mxu0 0
      %1233 = vmatpush1.bf16.msra.mxu0 %v1210
      %1234 = vmatprep.subr.bf16.mxu0 0
      %1235 = vmatpush1.bf16.msra.mxu0 %v1211
      %1236 = vmatprep.subr.bf16.mxu0 0
      %1237 = vmatpush1.bf16.msra.mxu0 0
      %1238 = vmatprep.subr.bf16.mxu0 0
      %1239 = vmatpush1.bf16.msra.mxu0 0
      %1240 = vmatprep.subr.bf16.mxu0 0
      %1241 = vmatpush1.bf16.msra.mxu0 0
      %1242 = vmatprep.subr.bf16.mxu0 0
      %1243 = vmatpush1.bf16.msra.mxu0 0
      %1244 = vmatprep.subr.bf16.mxu0 0
      %1245 = vmatpush1.bf16.msra.mxu0 0
      %1246 = vmatprep.subr.bf16.mxu0 0
      %1247 = vmatpush1.bf16.msra.mxu0 0
      %1248 = vmatprep.subr.bf16.mxu0 0
      %1249 = vmatpush1.bf16.msra.mxu0 0
      %1250 = vmatprep.subr.bf16.mxu0 0
      %1251 = vmatpush1.bf16.msra.mxu0 0
      %1252 = vmatprep.mubr.bf16.mxu0 0
      %1253 = vmatmul.mubr.bf16.gmra.mrb[0].mxu0 %v1156
      %v1254 = vpop.f32.mrb[0].mxu0
      %v1255 = vadd.f32 0.0, %v1254
      %v1256 = vpop.f32.mrb[0].mxu0
      %v1257 = vpop.f32.mrb[0].mxu0
      %v1258 = vadd.f32 0.0, %v1257
      %v1259 = vpop.f32.mrb[0].mxu0
      %1260 = vmatprep.mubr.bf16.mxu0 0
      %1261 = vmatmul.mubr.bf16.gmra.mrb[0].mxu0 %v1157
      %v1262 = vpop.f32.mrb[0].mxu0
      %v1263 = vadd.f32 0.0, %v1262
      %v1264 = vpop.f32.mrb[0].mxu0
      %v1265 = vpop.f32.mrb[0].mxu0
      %v1266 = vadd.f32 0.0, %v1265
      %v1267 = vpop.f32.mrb[0].mxu0
      %1268 = vmatprep.mubr.bf16.mxu0 0
      %1269 = vmatmul.mubr.bf16.gmra.mrb[0].mxu0 %v1158
      %v1270 = vpop.f32.mrb[0].mxu0
      %v1271 = vadd.f32 0.0, %v1270
      %v1272 = vpop.f32.mrb[0].mxu0
      %v1273 = vpop.f32.mrb[0].mxu0
      %v1274 = vadd.f32 0.0, %v1273
      %v1275 = vpop.f32.mrb[0].mxu0
      %1276 = vmatprep.mubr.bf16.mxu0 0
      %1277 = vmatmul.mubr.bf16.gmra.mrb[0].mxu0 %v1159
      %v1278 = vpop.f32.mrb[0].mxu0
      %v1279 = vadd.f32 0.0, %v1278
      %v1280 = vpop.f32.mrb[0].mxu0
      %v1281 = vpop.f32.mrb[0].mxu0
      %v1282 = vadd.f32 0.0, %v1281
      %v1283 = vpop.f32.mrb[0].mxu0
      %1284 = vmatprep.mubr.bf16.mxu0 0
      %1285 = vmatmul.mubr.bf16.gmra.mrb[0].mxu0 %v1160
      %v1286 = vpop.f32.mrb[0].mxu0
      %v1287 = vadd.f32 0.0, %v1286
      %v1288 = vpop.f32.mrb[0].mxu0
      %v1289 = vpop.f32.mrb[0].mxu0
      %v1290 = vadd.f32 0.0, %v1289
      %v1291 = vpop.f32.mrb[0].mxu0
      %1292 = vmatprep.mubr.bf16.mxu0 0
      %1293 = vmatmul.mubr.bf16.gmra.mrb[0].mxu0 %v1161
      %v1294 = vpop.f32.mrb[0].mxu0
      %v1295 = vadd.f32 0.0, %v1294
      %v1296 = vpop.f32.mrb[0].mxu0
      %v1297 = vpop.f32.mrb[0].mxu0
      %v1298 = vadd.f32 0.0, %v1297
      %v1299 = vpop.f32.mrb[0].mxu0
      %1300 = vmatprep.mubr.bf16.mxu0 0
      %1301 = vmatmul.mubr.bf16.gmra.mrb[0].mxu0 %v1162
      %v1302 = vpop.f32.mrb[0].mxu0
      %v1303 = vadd.f32 0.0, %v1302
      %v1304 = vpop.f32.mrb[0].mxu0
      %v1305 = vpop.f32.mrb[0].mxu0
      %v1306 = vadd.f32 0.0, %v1305
      %v1307 = vpop.f32.mrb[0].mxu0
      %1308 = vmatprep.mubr.bf16.mxu0 0
      %1309 = vmatmul.mubr.bf16.gmra.mrb[0].mxu0 %v1163
      %v1310 = vpop.f32.mrb[0].mxu0
      %v1311 = vadd.f32 0.0, %v1310
      %v1312 = vpop.f32.mrb[0].mxu0
      %v1313 = vpop.f32.mrb[0].mxu0
      %v1314 = vadd.f32 0.0, %v1313
      %v1315 = vpop.f32.mrb[0].mxu0
      %1316 = vdwg.mxu0
      %v1317 = vadd.f32 %v1076, %v1255
      %v1318 = vadd.f32 %v1077, %v1258
      %v1319 = vadd.f32 %v1078, %v1263
      %v1320 = vadd.f32 %v1079, %v1266
      %v1321 = vadd.f32 %v1080, %v1271
      %v1322 = vadd.f32 %v1081, %v1274
      %v1323 = vadd.f32 %v1082, %v1279
      %v1324 = vadd.f32 %v1083, %v1282
      %v1325 = vadd.f32 %v1084, %v1287
      %v1326 = vadd.f32 %v1085, %v1290
      %v1327 = vadd.f32 %v1086, %v1295
      %v1328 = vadd.f32 %v1087, %v1298
      %v1329 = vadd.f32 %v1088, %v1303
      %v1330 = vadd.f32 %v1089, %v1306
      %v1331 = vadd.f32 %v1090, %v1311
      %v1332 = vadd.f32 %v1091, %v1314
      %1333 = vst [vmem:[#allocation2] sm:$0xff] %v1317
      %1334 = vst [vmem:[#allocation2 + $0x8] sm:$0xff] %v1318
      %1335 = vst [vmem:[#allocation2 + $0x10] sm:$0xff] %v1319
      %1336 = vst [vmem:[#allocation2 + $0x18] sm:$0xff] %v1320
      %1337 = vst [vmem:[#allocation2 + $0x20] sm:$0xff] %v1321
      %1338 = vst [vmem:[#allocation2 + $0x28] sm:$0xff] %v1322
      %1339 = vst [vmem:[#allocation2 + $0x30] sm:$0xff] %v1323
      %1340 = vst [vmem:[#allocation2 + $0x38] sm:$0xff] %v1324
      %1341 = vst [vmem:[#allocation2 + $0x40] sm:$0xff] %v1325
      %1342 = vst [vmem:[#allocation2 + $0x48] sm:$0xff] %v1326
      %1343 = vst [vmem:[#allocation2 + $0x50] sm:$0xff] %v1327
      %1344 = vst [vmem:[#allocation2 + $0x58] sm:$0xff] %v1328
      %1345 = vst [vmem:[#allocation2 + $0x60] sm:$0xff] %v1329
      %1346 = vst [vmem:[#allocation2 + $0x68] sm:$0xff] %v1330
      %1347 = vst [vmem:[#allocation2 + $0x70] sm:$0xff] %v1331
      %1348 = vst [vmem:[#allocation2 + $0x78] sm:$0xff] %v1332
      // Predicated region
      $region53: #{forward.2} parent=47 // pred_check
        %p1349 = pneg %p495
      $region54: #{forward.2} parent=47 // pred_check_branch
        %1351 = sbr.rel (%p1349) target = $region56
      $region55: #{forward.2} parent=47 // pred_region
        %v1352 = vld [vmem:[#allocation2] sm:$0xff]
        %v1353 = vld [vmem:[#allocation2 + $0x8] sm:$0xff]
        %v1354 = vld [vmem:[#allocation2 + $0x10] sm:$0xff]
        %v1355 = vld [vmem:[#allocation2 + $0x18] sm:$0xff]
        %v1356 = vld [vmem:[#allocation2 + $0x20] sm:$0xff]
        %v1357 = vld [vmem:[#allocation2 + $0x28] sm:$0xff]
        %v1358 = vld [vmem:[#allocation2 + $0x30] sm:$0xff]
        %v1359 = vld [vmem:[#allocation2 + $0x38] sm:$0xff]
        %v1360 = vld [vmem:[#allocation2 + $0x40] sm:$0xff]
        %v1361 = vld [vmem:[#allocation2 + $0x48] sm:$0xff]
        %v1362 = vld [vmem:[#allocation2 + $0x50] sm:$0xff]
        %v1363 = vld [vmem:[#allocation2 + $0x58] sm:$0xff]
        %v1364 = vld [vmem:[#allocation2 + $0x60] sm:$0xff]
        %v1365 = vld [vmem:[#allocation2 + $0x68] sm:$0xff]
        %v1366 = vld [vmem:[#allocation2 + $0x70] sm:$0xff]
        %v1367 = vld [vmem:[#allocation2 + $0x78] sm:$0xff]
        %v1368 = vmax.f32 %v1352, 0.0
        %v1369 = vmax.f32 %v1353, 0.0
        %v1370 = vmax.f32 %v1354, 0.0
        %v1371 = vmax.f32 %v1355, 0.0
        %v1372 = vmax.f32 %v1356, 0.0
        %v1373 = vmax.f32 %v1357, 0.0
        %v1374 = vmax.f32 %v1358, 0.0
        %v1375 = vmax.f32 %v1359, 0.0
        %v1376 = vmax.f32 %v1360, 0.0
        %v1377 = vmax.f32 %v1361, 0.0
        %v1378 = vmax.f32 %v1362, 0.0
        %v1379 = vmax.f32 %v1363, 0.0
        %v1380 = vmax.f32 %v1364, 0.0
        %v1381 = vmax.f32 %v1365, 0.0
        %v1382 = vmax.f32 %v1366, 0.0
        %v1383 = vmax.f32 %v1367, 0.0
        %v1384 = vpack.c.bf16 %v1369, %v1368
        %v1385 = vpack.c.bf16 %v1371, %v1370
        %v1386 = vpack.c.bf16 %v1373, %v1372
        %v1387 = vpack.c.bf16 %v1375, %v1374
        %v1388 = vpack.c.bf16 %v1377, %v1376
        %v1389 = vpack.c.bf16 %v1379, %v1378
        %v1390 = vpack.c.bf16 %v1381, %v1380
        %v1391 = vpack.c.bf16 %v1383, %v1382
        %v1400 = vunpack.c.l.b16 %v1384
        %v1401 = vunpack.c.h.b16 %v1384
        %v1402 = vunpack.c.l.b16 %v1385
        %v1403 = vunpack.c.h.b16 %v1385
        %v1404 = vunpack.c.l.b16 %v1386
        %v1405 = vunpack.c.h.b16 %v1386
        %v1406 = vunpack.c.l.b16 %v1387
        %v1407 = vunpack.c.h.b16 %v1387
        %v1408 = vunpack.c.l.b16 %v1388
        %v1409 = vunpack.c.h.b16 %v1388
        %v1410 = vunpack.c.l.b16 %v1389
        %v1411 = vunpack.c.h.b16 %v1389
        %v1412 = vunpack.c.l.b16 %v1390
        %v1413 = vunpack.c.h.b16 %v1390
        %v1414 = vunpack.c.l.b16 %v1391
        %v1415 = vunpack.c.h.b16 %v1391
        %v1416 = vpack.c.b16 %v1400, %v1400
        %v1417 = vpack.c.b16 %v1401, %v1401
        %v1418 = vpack.c.b16 %v1402, %v1402
        %v1419 = vpack.c.b16 %v1403, %v1403
        %v1420 = vpack.c.b16 %v1404, %v1404
        %v1421 = vpack.c.b16 %v1405, %v1405
        %v1422 = vpack.c.b16 %v1406, %v1406
        %v1423 = vpack.c.b16 %v1407, %v1407
        %v1424 = vpack.c.b16 %v1408, %v1408
        %v1425 = vpack.c.b16 %v1409, %v1409
        %v1426 = vpack.c.b16 %v1410, %v1410
        %v1427 = vpack.c.b16 %v1411, %v1411
        %v1428 = vpack.c.b16 %v1412, %v1412
        %v1429 = vpack.c.b16 %v1413, %v1413
        %v1430 = vpack.c.b16 %v1414, %v1414
        %v1431 = vpack.c.b16 %v1415, %v1415
        %1448 = vst [vmem:[%s493] sm:$0xf] %v1416
        %1449 = vst [vmem:[%s493 + $0x4] sm:$0xf] %v1417
        %1450 = vst [vmem:[%s493 + $0x8] sm:$0xf] %v1418
        %1451 = vst [vmem:[%s493 + $0xc] sm:$0xf] %v1419
        %1452 = vst [vmem:[%s493 + $0x10] sm:$0xf] %v1420
        %1453 = vst [vmem:[%s493 + $0x14] sm:$0xf] %v1421
        %1454 = vst [vmem:[%s493 + $0x18] sm:$0xf] %v1422
        %1455 = vst [vmem:[%s493 + $0x1c] sm:$0xf] %v1423
        %1456 = vst [vmem:[%s493 + $0x20] sm:$0xf] %v1424
        %1457 = vst [vmem:[%s493 + $0x24] sm:$0xf] %v1425
        %1458 = vst [vmem:[%s493 + $0x28] sm:$0xf] %v1426
        %1459 = vst [vmem:[%s493 + $0x2c] sm:$0xf] %v1427
        %1460 = vst [vmem:[%s493 + $0x30] sm:$0xf] %v1428
        %1461 = vst [vmem:[%s493 + $0x34] sm:$0xf] %v1429
        %1462 = vst [vmem:[%s493 + $0x38] sm:$0xf] %v1430
        %1463 = vst [vmem:[%s493 + $0x3c] sm:$0xf] %v1431
      $region56: #{forward.2} parent=47 // pred_fallthru
        _
      %p1464 = scmp.lt.s32.totalorder %s34, 1
      %s1465 = scalar_select %p1464, %s34, 1
      %s1466 = smul.addr %s1465, 16
      %s1467 = smul.addr %s1466, 4
      %s1468 = scalar_lea.vmem %s9, %s1467
      // Predicated region
      $region57: #{forward.2} parent=47 // pred_check
        %p1469 = pneg %p256
      $region58: #{forward.2} parent=47 // pred_check_branch
        %1471 = sbr.rel (%p1469) target = $region60
      $region59: #{forward.2} parent=47 // pred_region
        _
      $region60: #{forward.2} parent=47 // pred_fallthru
        _
    $region48: #{forward.2} parent=5 // pred_fallthru
      _
    %p1472 = scmp.le.s32.totalorder 2, %s25
    // Predicated region
    $region61: #{forward.2} parent=5 // pred_check
      %p1473 = pneg %p1472
    $region62: #{forward.2} parent=5 // pred_check_branch
      %1475 = sbr.rel (%p1473) target = $region64
    $region63: #{forward.2} parent=5 // pred_region
      %s1476 = ssub.s32 %s25, 2
      // Predicated region
      $region65: #{forward.2} parent=63 // pred_check
        %p1477 = pneg %p262
      $region66: #{forward.2} parent=63 // pred_check_branch
        %1479 = sbr.rel (%p1477) target = $region68
      $region67: #{forward.2} parent=63 // pred_region
        %p1480 = scmp.lt.s32.totalorder %s36, 1
        %s1481 = scalar_select %p1480, %s36, 1
        %s1482 = smul.addr %s1481, 16
        %s1483 = smul.addr %s1482, 4
        %s1484 = scalar_lea.vmem %s9, %s1483
      $region68: #{forward.2} parent=63 // pred_fallthru
        _
    $region64: #{forward.2} parent=5 // pred_fallthru
      _
  $region6: #{forward.2} parent=0 // loop_footer
    %s29 = sadd.s32 1, %s25
  $region7: #{forward.2} parent=0 // loop_footer_branch
    %24 = sbr.rel target = $region3
  $region8: #{forward.2} parent=0 // loop_exit
    _

</llo_original>
